<compile_context>
chip_gen: v5e
topology: v5e:2x2
jax: 0.10.0
libtpu: 0.0.40
codegen_flags: <defaults>
</compile_context>

<pallas_src>
import functools

import jax
import jax.numpy as jnp
from jax.experimental import pallas as pl
from jax.experimental.pallas import tpu as pltpu


# --------------------------------------------------------------------------
# Kernels
# --------------------------------------------------------------------------
def ffn_kernel_fused(x_ref, w1_ref, b1_ref, w2_ref, b2_ref, o_ref):
    """Whole hidden dim resident: one pass per row tile, no accumulator."""
    x = x_ref[...].astype(w1_ref.dtype)                      # cast in-kernel
    h = jnp.dot(x, w1_ref[...], preferred_element_type=jnp.float32)
    h = jnp.maximum(h + b1_ref[...], 0.0)                     # bias + ReLU
    y = jnp.dot(h.astype(w2_ref.dtype), w2_ref[...],
                preferred_element_type=jnp.float32)
    # Dropout(p=0.2) in eval mode == identity.
    o_ref[...] = (y + b2_ref[...]).astype(o_ref.dtype)


def ffn_kernel_tiled(x_ref, w1_ref, b1_ref, w2_ref, b2_ref, o_ref):
    """Hidden dim streamed on grid axis 1; accumulate into the f32 output tile."""
    j = pl.program_id(1)

    x = x_ref[...].astype(w1_ref.dtype)                      # cast in-kernel
    h = jnp.dot(x, w1_ref[...], preferred_element_type=jnp.float32)
    h = jnp.maximum(h + b1_ref[...], 0.0)
    part = jnp.dot(h.astype(w2_ref.dtype), w2_ref[...],
                   preferred_element_type=jnp.float32)

    @pl.when(j == 0)
    def _():
        o_ref[...] = part.astype(o_ref.dtype)

    @pl.when(j > 0)
    def _():
        o_ref[...] += part.astype(o_ref.dtype)

    @pl.when(j == pl.num_programs(1) - 1)
    def _():
        # Dropout(p=0.2) in eval mode == identity.
        o_ref[...] += b2_ref[...].astype(o_ref.dtype)


# --------------------------------------------------------------------------
# Wrapper
# --------------------------------------------------------------------------
def _round_up(a, b):
    return (a + b - 1) // b * b


def _tpu_hints():
    """(two_tensorcores, per-core VMEM bytes) — conservative fallbacks."""
    vmem_cap = None
    try:
        vmem_cap = int(pltpu.get_tpu_info().vmem_capacity_bytes)
    except Exception:
        vmem_cap = None
    kind = ""
    try:
        kind = jax.devices()[0].device_kind.lower()
    except Exception:
        pass
    two_cores = ("v7" in kind) or ("7x" in kind)
    if vmem_cap is None:
        vmem_cap = (64 if two_cores else 128) * 1024 * 1024
    return two_cores, vmem_cap


@functools.partial(jax.jit, static_argnames=("tm",))
def feed_forward(x, w1, b1, w2, b2, *, tm=512):
    """x: (B, T, D) f32. w1:(D,H), w2:(H,D) (ideally bf16, cast once by caller).

    Returns (B, T, D) in x.dtype (eval-mode FFN: Linear->ReLU->Linear)."""
    B, T, D = x.shape
    H = w1.shape[1]
    M = B * T
    wbytes = jnp.dtype(w1.dtype).itemsize

    two_cores, vmem_cap = _tpu_hints()

    # v5e/v6e (single TC): larger row tile pushes arithmetic intensity past
    # the weight-DMA roofline when there is enough work.
    if (not two_cores) and M >= 2048 and tm == 512:
        tm = 1024

    # Row tile: multiple of 16 (bf16 sublane packing), no larger than needed.
    tm_eff = min(tm, _round_up(M, 16))
    if two_cores and M > 32:
        # v7x: make sure the "parallel" row axis has >= 2 tiles so both
        # TensorCores get work.
        tm_eff = min(tm_eff, _round_up(pl.cdiv(M, 2), 16))
    tm_eff = max(tm_eff, 16)

    # Reshape views only — no padding / casting passes over HBM.
    x2d = x.reshape(M, D)
    b1_2d = b1.reshape(1, H).astype(jnp.float32)
    b2_2d = b2.reshape(1, D).astype(jnp.float32)

    weight_bytes = 2 * D * H * wbytes
    fused = (weight_bytes <= vmem_cap // 4) or all(H % c for c in (512, 256, 128))
    # TODO(synk): for very large H not divisible by 128, pad W1/W2 offline to a
    # multiple of 256 instead of falling back to fully-resident weights.

    def footprint(tm_, th_):
        # double-buffered x/out tiles (f32) + weight slices + live f32 h tile
        return (2 * (tm_ * D * 4 + tm_ * D * 4
                     + D * th_ * wbytes + th_ * 4 + th_ * D * wbytes + D * 4)
                + tm_ * th_ * 4)

    if fused:
        th = H
        grid = (pl.cdiv(M, tm_eff),)
        in_specs = [
            pl.BlockSpec((tm_eff, D), lambda i: (i, 0)),   # x rows
            pl.BlockSpec((D, H),      lambda i: (0, 0)),   # W1 (resident)
            pl.BlockSpec((1, H),      lambda i: (0, 0)),   # b1
            pl.BlockSpec((H, D),      lambda i: (0, 0)),   # W2 (resident)
            pl.BlockSpec((1, D),      lambda i: (0, 0)),   # b2
        ]
        out_specs = pl.BlockSpec((tm_eff, D), lambda i: (i, 0))
        kernel = ffn_kernel_fused
        dim_sem = ("parallel",)
    else:
        th = next(c for c in (512, 256, 128) if H % c == 0)
        budget = int(0.55 * vmem_cap)
        while footprint(tm_eff, th) > budget and th > 128 and H % (th // 2) == 0:
            th //= 2
        while footprint(tm_eff, th) > budget and tm_eff > 128:
            tm_eff = max(128, tm_eff // 2)
        grid = (pl.cdiv(M, tm_eff), H // th)
        in_specs = [
            pl.BlockSpec((tm_eff, D), lambda i, j: (i, 0)),  # x rows
            pl.BlockSpec((D, th),     lambda i, j: (0, j)),  # W1 hidden slice
            pl.BlockSpec((1, th),     lambda i, j: (0, j)),  # b1 slice
            pl.BlockSpec((th, D),     lambda i, j: (j, 0)),  # W2 hidden slice
            pl.BlockSpec((1, D),      lambda i, j: (0, 0)),  # b2
        ]
        out_specs = pl.BlockSpec((tm_eff, D), lambda i, j: (i, 0))
        kernel = ffn_kernel_tiled
        dim_sem = ("parallel", "arbitrary")

    fp = footprint(tm_eff, th)
    vmem_limit = int(max(16 * 1024 * 1024,
                         min(vmem_cap - 8 * 1024 * 1024,
                             max(32 * 1024 * 1024, 2 * fp))))

    out2d = pl.pallas_call(
        kernel,
        out_shape=jax.ShapeDtypeStruct((M, D), x.dtype),
        grid_spec=pltpu.PrefetchScalarGridSpec(
            num_scalar_prefetch=0,
            grid=grid,
            in_specs=in_specs,
            out_specs=out_specs,
        ),
        compiler_params=pltpu.CompilerParams(
            dimension_semantics=dim_sem,
            vmem_limit_bytes=vmem_limit),
    )(x2d, w1, b1_2d, w2, b2_2d)

    return out2d.reshape(B, T, D)


# --------------------------------------------------------------------------
# Params / test
# --------------------------------------------------------------------------
def init_params(key, n_embd):
    """Deterministic init mimicking nn.Linear default U(-1/sqrt(fan_in), ...)."""
    hidden = 4 * n_embd
    k1, k2, k3, k4 = jax.random.split(key, 4)
    lim1 = 1.0 / jnp.sqrt(n_embd)
    lim2 = 1.0 / jnp.sqrt(hidden)
    w1 = jax.random.uniform(k1, (n_embd, hidden), jnp.float32, -lim1, lim1)
    b1 = jax.random.uniform(k2, (hidden,), jnp.float32, -lim1, lim1)
    w2 = jax.random.uniform(k3, (hidden, n_embd), jnp.float32, -lim2, lim2)
    b2 = jax.random.uniform(k4, (n_embd,), jnp.float32, -lim2, lim2)
    return w1, b1, w2, b2


if __name__ == "__main__":
    # Small shapes consistent with the module's forward: (batch, seq, n_embd).
    B, T, n_embd = 2, 8, 384
    key = jax.random.PRNGKey(0)
    kx, kp = jax.random.split(key)

    x = jax.random.normal(kx, (B, T, n_embd), jnp.float32)
    w1, b1, w2, b2 = init_params(kp, n_embd)

    # Weights cast to bf16 ONCE, outside the per-call jit (no per-call HBM
    # cast passes); biases stay f32.
    w1_bf = jax.block_until_ready(w1.astype(jnp.bfloat16))
    w2_bf = jax.block_until_ready(w2.astype(jnp.bfloat16))

    out = feed_forward(x, w1_bf, b1, w2_bf, b2)
    out = jax.block_until_ready(out)
    assert out.shape == (B, T, n_embd)

    # Plain-JAX reference with the same bf16-input / f32-accumulate recipe
    # (eval-mode dropout == identity).
    xb = x.reshape(-1, n_embd).astype(jnp.bfloat16)
    h = jnp.dot(xb, w1_bf, preferred_element_type=jnp.float32) + b1
    h = jnp.maximum(h, 0.0)
    ref = jnp.dot(h.astype(jnp.bfloat16), w2_bf,
                  preferred_element_type=jnp.float32) + b2
    ref = ref.reshape(B, T, n_embd)

    assert jnp.allclose(out, ref, atol=2e-2, rtol=2e-2), (
        float(jnp.max(jnp.abs(out - ref))))

    print("KERNEL_OK")
</pallas_src>

<mosaic_0001>
module attributes {stable_mosaic.version = 11 : i64} {
  func.func @ffn_kernel_fused(%arg0: i32, %arg1: memref<16x384xf32, #tpu.memory_space<vmem>>, %arg2: memref<384x1536xbf16, #tpu.memory_space<vmem>>, %arg3: memref<1x1536xf32, #tpu.memory_space<vmem>>, %arg4: memref<1536x384xbf16, #tpu.memory_space<vmem>>, %arg5: memref<1x384xf32, #tpu.memory_space<vmem>>, %arg6: memref<16x384xf32, #tpu.memory_space<vmem>>) attributes {dimension_semantics = [#tpu.dimension_semantics<parallel>], iteration_bounds = array<i64: 1>, scalar_prefetch = 0 : i64, scratch_operands = 0 : i64, tpu.core_type = #tpu.core_type<tc>, window_params = [{transform_indices = @transform_0, window_bounds = array<i64: 16, 384>}, {pipeline_mode = #tpu.pipeline_mode<synchronous>, transform_indices = @transform_1, window_bounds = array<i64: 384, 1536>}, {pipeline_mode = #tpu.pipeline_mode<synchronous>, transform_indices = @transform_2, window_bounds = array<i64: 1, 1536>}, {pipeline_mode = #tpu.pipeline_mode<synchronous>, transform_indices = @transform_3, window_bounds = array<i64: 1536, 384>}, {pipeline_mode = #tpu.pipeline_mode<synchronous>, transform_indices = @transform_4, window_bounds = array<i64: 1, 384>}, {transform_indices = @transform_5, window_bounds = array<i64: 16, 384>}]} {
    %c0 = arith.constant 0 : index
    %c0_0 = arith.constant 0 : index
    %0 = vector.load %arg1[%c0, %c0_0] : memref<16x384xf32, #tpu.memory_space<vmem>>, vector<16x384xf32>
    %1 = arith.truncf %0 : vector<16x384xf32> to vector<16x384xbf16>
    %c0_1 = arith.constant 0 : index
    %c0_2 = arith.constant 0 : index
    %2 = vector.load %arg2[%c0_1, %c0_2] : memref<384x1536xbf16, #tpu.memory_space<vmem>>, vector<384x1536xbf16>
    %cst = arith.constant dense<0.000000e+00> : vector<16x1536xf32>
    %3 = tpu.matmul %1, %2, %cst {dimension_numbers = #tpu.dot_dimension_numbers<[1], [0], [0], [1], [0, 0, 1, 1], [], []>} : vector<16x384xbf16>, vector<384x1536xbf16>, vector<16x1536xf32> -> vector<16x1536xf32>
    %c0_3 = arith.constant 0 : index
    %c0_4 = arith.constant 0 : index
    %4 = vector.load %arg3[%c0_3, %c0_4] : memref<1x1536xf32, #tpu.memory_space<vmem>>, vector<1x1536xf32>
    %5 = vector.broadcast %4 : vector<1x1536xf32> to vector<16x1536xf32>
    %6 = arith.addf %3, %5 : vector<16x1536xf32>
    %cst_5 = arith.constant 0.000000e+00 : f32
    %7 = vector.broadcast %cst_5 : f32 to vector<16x1536xf32>
    %8 = arith.maximumf %6, %7 : vector<16x1536xf32>
    %9 = arith.truncf %8 : vector<16x1536xf32> to vector<16x1536xbf16>
    %c0_6 = arith.constant 0 : index
    %c0_7 = arith.constant 0 : index
    %10 = vector.load %arg4[%c0_6, %c0_7] : memref<1536x384xbf16, #tpu.memory_space<vmem>>, vector<1536x384xbf16>
    %cst_8 = arith.constant dense<0.000000e+00> : vector<16x384xf32>
    %11 = tpu.matmul %9, %10, %cst_8 {dimension_numbers = #tpu.dot_dimension_numbers<[1], [0], [0], [1], [0, 0, 1, 1], [], []>} : vector<16x1536xbf16>, vector<1536x384xbf16>, vector<16x384xf32> -> vector<16x384xf32>
    %c0_9 = arith.constant 0 : index
    %c0_10 = arith.constant 0 : index
    %12 = vector.load %arg5[%c0_9, %c0_10] : memref<1x384xf32, #tpu.memory_space<vmem>>, vector<1x384xf32>
    %13 = vector.broadcast %12 : vector<1x384xf32> to vector<16x384xf32>
    %14 = arith.addf %11, %13 : vector<16x384xf32>
    %c0_11 = arith.constant 0 : index
    %c0_12 = arith.constant 0 : index
    %15 = vector.load %arg6[%c0_11, %c0_12] : memref<16x384xf32, #tpu.memory_space<vmem>>, vector<16x384xf32>
    tpu.vector_store %arg6[%c0_11, %c0_12], %14 {strides = array<i32>} : memref<16x384xf32, #tpu.memory_space<vmem>>, vector<16x384xf32>,
    return
  }
  func.func @transform_0(%arg0: i32) -> (i32, i32) {
    %c0_i32 = arith.constant 0 : i32
    %c0_i32_0 = arith.constant 0 : i32
    return %arg0, %c0_i32 : i32, i32
  }
  func.func @transform_1(%arg0: i32) -> (i32, i32) {
    %c0_i32 = arith.constant 0 : i32
    %c0_i32_0 = arith.constant 0 : i32
    %c0_i32_1 = arith.constant 0 : i32
    return %c0_i32, %c0_i32_0 : i32, i32
  }
  func.func @transform_2(%arg0: i32) -> (i32, i32) {
    %c0_i32 = arith.constant 0 : i32
    %c0_i32_0 = arith.constant 0 : i32
    %c0_i32_1 = arith.constant 0 : i32
    return %c0_i32, %c0_i32_0 : i32, i32
  }
  func.func @transform_3(%arg0: i32) -> (i32, i32) {
    %c0_i32 = arith.constant 0 : i32
    %c0_i32_0 = arith.constant 0 : i32
    %c0_i32_1 = arith.constant 0 : i32
    return %c0_i32, %c0_i32_0 : i32, i32
  }
  func.func @transform_4(%arg0: i32) -> (i32, i32) {
    %c0_i32 = arith.constant 0 : i32
    %c0_i32_0 = arith.constant 0 : i32
    %c0_i32_1 = arith.constant 0 : i32
    return %c0_i32, %c0_i32_0 : i32, i32
  }
  func.func @transform_5(%arg0: i32) -> (i32, i32) {
    %c0_i32 = arith.constant 0 : i32
    %c0_i32_0 = arith.constant 0 : i32
    return %arg0, %c0_i32 : i32, i32
  }
}

</mosaic_0001>

<llo_original>
// kernel: feed_forward.1
$region0: #{feed_forward.1}
  #allocation0 [shape = 'u32[]', space=smem, size = 0x4, offset = 0x4, fixed_abs, tag = 'smem constant byte address 0x4 - core index']
  #allocation1 [shape = 'u32[72,128]{1,0:T(1,128)}', space=vmem, size = 0x9000, scoped, tag = 'internal scratch']
  %s0 = inlined_call_operand.hbm [shape: f32[16,384], index: 0, kind: input, shape index: {}]
  %s1 = inlined_call_operand.hbm [shape: bf16[384,1536], index: 1, kind: input, shape index: {}]
  %s2 = inlined_call_operand.vmem [shape: f32[1,1536], index: 2, kind: input, shape index: {}]
  %s3 = inlined_call_operand.hbm [shape: bf16[1536,384], index: 3, kind: input, shape index: {}]
  %s4 = inlined_call_operand.vmem [shape: f32[1,384], index: 4, kind: input, shape index: {}]
  %s5 = inlined_call_operand.hbm [shape: f32[16,384], index: 5, kind: output, shape index: {}]
  %s6 = sld [smem:[#allocation0]]
  $region42: #{feed_forward.1} parent=0
    _
  %s8 = ssub.s32 1, %s6
  %s9 = scalar_select 0, %s8, %s6
  $region1: #{feed_forward.1} parent=0
    #allocation2 [shape = 'u8[24576]{0}', space=vmem, size = 0x6000, scoped, tag = 'input window, operand 0, single buffered']
    #allocation3 [shape = 's32[1]{0}', space=sflag, size = 0x4, scoped, tag = 'scoped memory for feed_forward.1']
    #allocation4 [shape = 's32[1]{0}', space=sflag, size = 0x4, scoped, tag = 'scoped memory for feed_forward.1']
    #allocation5 [shape = 'u8[1179648]{0}', space=vmem, size = 0x120000, scoped, tag = 'input window, operand 1, single buffered']
    #allocation6 [shape = 's32[1]{0}', space=sflag, size = 0x4, scoped, tag = 'scoped memory for feed_forward.1']
    #allocation7 [shape = 'u8[1179648]{0}', space=vmem, size = 0x120000, scoped, tag = 'input window, operand 3, single buffered']
    #allocation8 [shape = 'u8[24576]{0}', space=vmem, size = 0x6000, scoped, tag = 'output window, operand 0, single buffered']
    %10 = vsyncpa [#allocation3], 0
    %11 = vsyncpa [#allocation6], 0
    %12 = vsyncpa [#allocation4], 0
    // Predicated region
    $region2: #{feed_forward.1} parent=1 // pred_check
      _
    $region3: #{feed_forward.1} parent=1 // pred_check_branch
      %14 = sbr.rel (0) target = $region5
    $region4: #{feed_forward.1} parent=1 // pred_region
      %16 = vsyncadd [#allocation3], 0
      %s17 = sshll.u32 %s0, 4
      %s18 = int_to_ptr.hbm [resolvable:$true] %s17
      %s19 = sshll.u32 [#allocation2], 4
      %s20 = int_to_ptr.vmem [resolvable:$true] %s19
      %25 = dma.hbm_to_vmem [thread:$0]  %s18, 768, %s20, [#allocation3], 384, 384, 24
    $region5: #{feed_forward.1} parent=1 // pred_fallthru
      _
    // Predicated region
    $region6: #{feed_forward.1} parent=1 // pred_check
      _
    $region7: #{feed_forward.1} parent=1 // pred_check_branch
      %27 = sbr.rel (0) target = $region9
    $region8: #{feed_forward.1} parent=1 // pred_region
      %29 = vsyncadd [#allocation6], 0
      %s30 = sshll.u32 %s1, 4
      %s31 = int_to_ptr.hbm [resolvable:$true] %s30
      %s32 = sshll.u32 [#allocation5], 4
      %s33 = int_to_ptr.vmem [resolvable:$true] %s32
      %38 = dma.hbm_to_vmem [thread:$0]  %s31, 36864, %s33, [#allocation6], 768, 768, 48
    $region9: #{feed_forward.1} parent=1 // pred_fallthru
      _
    // Predicated region
    $region10: #{feed_forward.1} parent=1 // pred_check
      _
    $region11: #{feed_forward.1} parent=1 // pred_check_branch
      %40 = sbr.rel (0) target = $region13
    $region12: #{feed_forward.1} parent=1 // pred_region
      _
    $region13: #{feed_forward.1} parent=1 // pred_fallthru
      _
    // Predicated region
    $region14: #{feed_forward.1} parent=1 // pred_check
      _
    $region15: #{feed_forward.1} parent=1 // pred_check_branch
      %42 = sbr.rel (0) target = $region17
    $region16: #{feed_forward.1} parent=1 // pred_region
      %44 = vsyncadd [#allocation6], 0
      %s45 = sshll.u32 %s3, 4
      %s46 = int_to_ptr.hbm [resolvable:$true] %s45
      %s47 = sshll.u32 [#allocation7], 4
      %s48 = int_to_ptr.vmem [resolvable:$true] %s47
      %53 = dma.hbm_to_vmem [thread:$0]  %s46, 36864, %s48, [#allocation6], 192, 192, 12
    $region17: #{feed_forward.1} parent=1 // pred_fallthru
      _
    // Predicated region
    $region18: #{feed_forward.1} parent=1 // pred_check
      _
    $region19: #{feed_forward.1} parent=1 // pred_check_branch
      %55 = sbr.rel (0) target = $region21
    $region20: #{feed_forward.1} parent=1 // pred_region
      _
    $region21: #{feed_forward.1} parent=1 // pred_fallthru
      _
    // Predicated region
    $region22: #{feed_forward.1} parent=1 // pred_check
      _
    $region23: #{feed_forward.1} parent=1 // pred_check_branch
      %57 = sbr.rel (0) target = $region25
    $region24: #{feed_forward.1} parent=1 // pred_region
      %59 = dma.done [#allocation3], 768
    $region25: #{feed_forward.1} parent=1 // pred_fallthru
      _
    // Predicated region
    $region26: #{feed_forward.1} parent=1 // pred_check
      _
    $region27: #{feed_forward.1} parent=1 // pred_check_branch
      %61 = sbr.rel (0) target = $region29
    $region28: #{feed_forward.1} parent=1 // pred_region
      %63 = dma.done [#allocation6], 36864
    $region29: #{feed_forward.1} parent=1 // pred_fallthru
      _
    // Predicated region
    $region30: #{feed_forward.1} parent=1 // pred_check
      _
    $region31: #{feed_forward.1} parent=1 // pred_check_branch
      %65 = sbr.rel (0) target = $region33
    $region32: #{feed_forward.1} parent=1 // pred_region
      %67 = dma.done [#allocation6], 36864
    $region33: #{feed_forward.1} parent=1 // pred_fallthru
      _
    %v68 = vld [vmem:[#allocation2] sm:$0xff]
    %v69 = vld [vmem:[#allocation2 + $0x8] sm:$0xff]
    %v70 = vld [vmem:[#allocation2 + $0x10] sm:$0xff]
    %v71 = vld [vmem:[#allocation2 + $0x18] sm:$0xff]
    %v72 = vld [vmem:[#allocation2 + $0x20] sm:$0xff]
    %v73 = vld [vmem:[#allocation2 + $0x28] sm:$0xff]
    %v74 = vpack.c.bf16 %v71, %v68
    %v75 = vpack.c.bf16 %v72, %v69
    %v76 = vpack.c.bf16 %v73, %v70
    %v77 = vld [vmem:[#allocation5] sm:$0xff]
    %v78 = vld [vmem:[#allocation5 + $0x8] sm:$0xff]
    %v79 = vld [vmem:[#allocation5 + $0x10] sm:$0xff]
    %v80 = vld [vmem:[#allocation5 + $0x18] sm:$0xff]
    %v81 = vld [vmem:[#allocation5 + $0x20] sm:$0xff]
    %v82 = vld [vmem:[#allocation5 + $0x28] sm:$0xff]
    %v83 = vld [vmem:[#allocation5 + $0x30] sm:$0xff]
    %v84 = vld [vmem:[#allocation5 + $0x38] sm:$0xff]
    %v85 = vld [vmem:[#allocation5 + $0x40] sm:$0xff]
    %v86 = vld [vmem:[#allocation5 + $0x48] sm:$0xff]
    %v87 = vld [vmem:[#allocation5 + $0x50] sm:$0xff]
    %v88 = vld [vmem:[#allocation5 + $0x58] sm:$0xff]
    %v89 = vld [vmem:[#allocation5 + $0x60] sm:$0xff]
    %v90 = vld [vmem:[#allocation5 + $0x68] sm:$0xff]
    %v91 = vld [vmem:[#allocation5 + $0x70] sm:$0xff]
    %v92 = vld [vmem:[#allocation5 + $0x78] sm:$0xff]
    %v93 = vld [vmem:[#allocation5 + $0x80] sm:$0xff]
    %v94 = vld [vmem:[#allocation5 + $0x88] sm:$0xff]
    %v95 = vld [vmem:[#allocation5 + $0x90] sm:$0xff]
    %v96 = vld [vmem:[#allocation5 + $0x98] sm:$0xff]
    %v97 = vld [vmem:[#allocation5 + $0xa0] sm:$0xff]
    %v98 = vld [vmem:[#allocation5 + $0xa8] sm:$0xff]
    %v99 = vld [vmem:[#allocation5 + $0xb0] sm:$0xff]
    %v100 = vld [vmem:[#allocation5 + $0xb8] sm:$0xff]
    %v101 = vld [vmem:[#allocation5 + $0xc0] sm:$0xff]
    %v102 = vld [vmem:[#allocation5 + $0xc8] sm:$0xff]
    %v103 = vld [vmem:[#allocation5 + $0xd0] sm:$0xff]
    %v104 = vld [vmem:[#allocation5 + $0xd8] sm:$0xff]
    %v105 = vld [vmem:[#allocation5 + $0xe0] sm:$0xff]
    %v106 = vld [vmem:[#allocation5 + $0xe8] sm:$0xff]
    %v107 = vld [vmem:[#allocation5 + $0xf0] sm:$0xff]
    %v108 = vld [vmem:[#allocation5 + $0xf8] sm:$0xff]
    %v109 = vld [vmem:[#allocation5 + $0x100] sm:$0xff]
    %v110 = vld [vmem:[#allocation5 + $0x108] sm:$0xff]
    %v111 = vld [vmem:[#allocation5 + $0x110] sm:$0xff]
    %v112 = vld [vmem:[#allocation5 + $0x118] sm:$0xff]
    %v113 = vld [vmem:[#allocation5 + $0x120] sm:$0xff]
    %v114 = vld [vmem:[#allocation5 + $0x128] sm:$0xff]
    %v115 = vld [vmem:[#allocation5 + $0x130] sm:$0xff]
    %v116 = vld [vmem:[#allocation5 + $0x138] sm:$0xff]
    %v117 = vld [vmem:[#allocation5 + $0x140] sm:$0xff]
    %v118 = vld [vmem:[#allocation5 + $0x148] sm:$0xff]
    %v119 = vld [vmem:[#allocation5 + $0x150] sm:$0xff]
    %v120 = vld [vmem:[#allocation5 + $0x158] sm:$0xff]
    %v121 = vld [vmem:[#allocation5 + $0x160] sm:$0xff]
    %v122 = vld [vmem:[#allocation5 + $0x168] sm:$0xff]
    %v123 = vld [vmem:[#allocation5 + $0x170] sm:$0xff]
    %v124 = vld [vmem:[#allocation5 + $0x178] sm:$0xff]
    %v125 = vld [vmem:[#allocation5 + $0x180] sm:$0xff]
    %v126 = vld [vmem:[#allocation5 + $0x188] sm:$0xff]
    %v127 = vld [vmem:[#allocation5 + $0x190] sm:$0xff]
    %v128 = vld [vmem:[#allocation5 + $0x198] sm:$0xff]
    %v129 = vld [vmem:[#allocation5 + $0x1a0] sm:$0xff]
    %v130 = vld [vmem:[#allocation5 + $0x1a8] sm:$0xff]
    %v131 = vld [vmem:[#allocation5 + $0x1b0] sm:$0xff]
    %v132 = vld [vmem:[#allocation5 + $0x1b8] sm:$0xff]
    %v133 = vld [vmem:[#allocation5 + $0x1c0] sm:$0xff]
    %v134 = vld [vmem:[#allocation5 + $0x1c8] sm:$0xff]
    %v135 = vld [vmem:[#allocation5 + $0x1d0] sm:$0xff]
    %v136 = vld [vmem:[#allocation5 + $0x1d8] sm:$0xff]
    %v137 = vld [vmem:[#allocation5 + $0x1e0] sm:$0xff]
    %v138 = vld [vmem:[#allocation5 + $0x1e8] sm:$0xff]
    %v139 = vld [vmem:[#allocation5 + $0x1f0] sm:$0xff]
    %v140 = vld [vmem:[#allocation5 + $0x1f8] sm:$0xff]
    %v141 = vld [vmem:[#allocation5 + $0x200] sm:$0xff]
    %v142 = vld [vmem:[#allocation5 + $0x208] sm:$0xff]
    %v143 = vld [vmem:[#allocation5 + $0x210] sm:$0xff]
    %v144 = vld [vmem:[#allocation5 + $0x218] sm:$0xff]
    %v145 = vld [vmem:[#allocation5 + $0x220] sm:$0xff]
    %v146 = vld [vmem:[#allocation5 + $0x228] sm:$0xff]
    %v147 = vld [vmem:[#allocation5 + $0x230] sm:$0xff]
    %v148 = vld [vmem:[#allocation5 + $0x238] sm:$0xff]
    %v149 = vld [vmem:[#allocation5 + $0x240] sm:$0xff]
    %v150 = vld [vmem:[#allocation5 + $0x248] sm:$0xff]
    %v151 = vld [vmem:[#allocation5 + $0x250] sm:$0xff]
    %v152 = vld [vmem:[#allocation5 + $0x258] sm:$0xff]
    %v153 = vld [vmem:[#allocation5 + $0x260] sm:$0xff]
    %v154 = vld [vmem:[#allocation5 + $0x268] sm:$0xff]
    %v155 = vld [vmem:[#allocation5 + $0x270] sm:$0xff]
    %v156 = vld [vmem:[#allocation5 + $0x278] sm:$0xff]
    %v157 = vld [vmem:[#allocation5 + $0x280] sm:$0xff]
    %v158 = vld [vmem:[#allocation5 + $0x288] sm:$0xff]
    %v159 = vld [vmem:[#allocation5 + $0x290] sm:$0xff]
    %v160 = vld [vmem:[#allocation5 + $0x298] sm:$0xff]
    %v161 = vld [vmem:[#allocation5 + $0x2a0] sm:$0xff]
    %v162 = vld [vmem:[#allocation5 + $0x2a8] sm:$0xff]
    %v163 = vld [vmem:[#allocation5 + $0x2b0] sm:$0xff]
    %v164 = vld [vmem:[#allocation5 + $0x2b8] sm:$0xff]
    %v165 = vld [vmem:[#allocation5 + $0x2c0] sm:$0xff]
    %v166 = vld [vmem:[#allocation5 + $0x2c8] sm:$0xff]
    %v167 = vld [vmem:[#allocation5 + $0x2d0] sm:$0xff]
    %v168 = vld [vmem:[#allocation5 + $0x2d8] sm:$0xff]
    %v169 = vld [vmem:[#allocation5 + $0x2e0] sm:$0xff]
    %v170 = vld [vmem:[#allocation5 + $0x2e8] sm:$0xff]
    %v171 = vld [vmem:[#allocation5 + $0x2f0] sm:$0xff]
    %v172 = vld [vmem:[#allocation5 + $0x2f8] sm:$0xff]
    %v173 = vld [vmem:[#allocation5 + $0x300] sm:$0xff]
    %v174 = vld [vmem:[#allocation5 + $0x308] sm:$0xff]
    %v175 = vld [vmem:[#allocation5 + $0x310] sm:$0xff]
    %v176 = vld [vmem:[#allocation5 + $0x318] sm:$0xff]
    %v177 = vld [vmem:[#allocation5 + $0x320] sm:$0xff]
    %v178 = vld [vmem:[#allocation5 + $0x328] sm:$0xff]
    %v179 = vld [vmem:[#allocation5 + $0x330] sm:$0xff]
    %v180 = vld [vmem:[#allocation5 + $0x338] sm:$0xff]
    %v181 = vld [vmem:[#allocation5 + $0x340] sm:$0xff]
    %v182 = vld [vmem:[#allocation5 + $0x348] sm:$0xff]
    %v183 = vld [vmem:[#allocation5 + $0x350] sm:$0xff]
    %v184 = vld [vmem:[#allocation5 + $0x358] sm:$0xff]
    %v185 = vld [vmem:[#allocation5 + $0x360] sm:$0xff]
    %v186 = vld [vmem:[#allocation5 + $0x368] sm:$0xff]
    %v187 = vld [vmem:[#allocation5 + $0x370] sm:$0xff]
    %v188 = vld [vmem:[#allocation5 + $0x378] sm:$0xff]
    %v189 = vld [vmem:[#allocation5 + $0x380] sm:$0xff]
    %v190 = vld [vmem:[#allocation5 + $0x388] sm:$0xff]
    %v191 = vld [vmem:[#allocation5 + $0x390] sm:$0xff]
    %v192 = vld [vmem:[#allocation5 + $0x398] sm:$0xff]
    %v193 = vld [vmem:[#allocation5 + $0x3a0] sm:$0xff]
    %v194 = vld [vmem:[#allocation5 + $0x3a8] sm:$0xff]
    %v195 = vld [vmem:[#allocation5 + $0x3b0] sm:$0xff]
    %v196 = vld [vmem:[#allocation5 + $0x3b8] sm:$0xff]
    %v197 = vld [vmem:[#allocation5 + $0x3c0] sm:$0xff]
    %v198 = vld [vmem:[#allocation5 + $0x3c8] sm:$0xff]
    %v199 = vld [vmem:[#allocation5 + $0x3d0] sm:$0xff]
    %v200 = vld [vmem:[#allocation5 + $0x3d8] sm:$0xff]
    %v201 = vld [vmem:[#allocation5 + $0x3e0] sm:$0xff]
    %v202 = vld [vmem:[#allocation5 + $0x3e8] sm:$0xff]
    %v203 = vld [vmem:[#allocation5 + $0x3f0] sm:$0xff]
    %v204 = vld [vmem:[#allocation5 + $0x3f8] sm:$0xff]
    %v205 = vld [vmem:[#allocation5 + $0x400] sm:$0xff]
    %v206 = vld [vmem:[#allocation5 + $0x408] sm:$0xff]
    %v207 = vld [vmem:[#allocation5 + $0x410] sm:$0xff]
    %v208 = vld [vmem:[#allocation5 + $0x418] sm:$0xff]
    %v209 = vld [vmem:[#allocation5 + $0x420] sm:$0xff]
    %v210 = vld [vmem:[#allocation5 + $0x428] sm:$0xff]
    %v211 = vld [vmem:[#allocation5 + $0x430] sm:$0xff]
    %v212 = vld [vmem:[#allocation5 + $0x438] sm:$0xff]
    %v213 = vld [vmem:[#allocation5 + $0x440] sm:$0xff]
    %v214 = vld [vmem:[#allocation5 + $0x448] sm:$0xff]
    %v215 = vld [vmem:[#allocation5 + $0x450] sm:$0xff]
    %v216 = vld [vmem:[#allocation5 + $0x458] sm:$0xff]
    %v217 = vld [vmem:[#allocation5 + $0x460] sm:$0xff]
    %v218 = vld [vmem:[#allocation5 + $0x468] sm:$0xff]
    %v219 = vld [vmem:[#allocation5 + $0x470] sm:$0xff]
    %v220 = vld [vmem:[#allocation5 + $0x478] sm:$0xff]
    %v221 = vld [vmem:[#allocation5 + $0x480] sm:$0xff]
    %v222 = vld [vmem:[#allocation5 + $0x488] sm:$0xff]
    %v223 = vld [vmem:[#allocation5 + $0x490] sm:$0xff]
    %v224 = vld [vmem:[#allocation5 + $0x498] sm:$0xff]
    %v225 = vld [vmem:[#allocation5 + $0x4a0] sm:$0xff]
    %v226 = vld [vmem:[#allocation5 + $0x4a8] sm:$0xff]
    %v227 = vld [vmem:[#allocation5 + $0x4b0] sm:$0xff]
    %v228 = vld [vmem:[#allocation5 + $0x4b8] sm:$0xff]
    %v229 = vld [vmem:[#allocation5 + $0x4c0] sm:$0xff]
    %v230 = vld [vmem:[#allocation5 + $0x4c8] sm:$0xff]
    %v231 = vld [vmem:[#allocation5 + $0x4d0] sm:$0xff]
    %v232 = vld [vmem:[#allocation5 + $0x4d8] sm:$0xff]
    %v233 = vld [vmem:[#allocation5 + $0x4e0] sm:$0xff]
    %v234 = vld [vmem:[#allocation5 + $0x4e8] sm:$0xff]
    %v235 = vld [vmem:[#allocation5 + $0x4f0] sm:$0xff]
    %v236 = vld [vmem:[#allocation5 + $0x4f8] sm:$0xff]
    %v237 = vld [vmem:[#allocation5 + $0x500] sm:$0xff]
    %v238 = vld [vmem:[#allocation5 + $0x508] sm:$0xff]
    %v239 = vld [vmem:[#allocation5 + $0x510] sm:$0xff]
    %v240 = vld [vmem:[#allocation5 + $0x518] sm:$0xff]
    %v241 = vld [vmem:[#allocation5 + $0x520] sm:$0xff]
    %v242 = vld [vmem:[#allocation5 + $0x528] sm:$0xff]
    %v243 = vld [vmem:[#allocation5 + $0x530] sm:$0xff]
    %v244 = vld [vmem:[#allocation5 + $0x538] sm:$0xff]
    %v245 = vld [vmem:[#allocation5 + $0x540] sm:$0xff]
    %v246 = vld [vmem:[#allocation5 + $0x548] sm:$0xff]
    %v247 = vld [vmem:[#allocation5 + $0x550] sm:$0xff]
    %v248 = vld [vmem:[#allocation5 + $0x558] sm:$0xff]
    %v249 = vld [vmem:[#allocation5 + $0x560] sm:$0xff]
    %v250 = vld [vmem:[#allocation5 + $0x568] sm:$0xff]
    %v251 = vld [vmem:[#allocation5 + $0x570] sm:$0xff]
    %v252 = vld [vmem:[#allocation5 + $0x578] sm:$0xff]
    %v253 = vld [vmem:[#allocation5 + $0x580] sm:$0xff]
    %v254 = vld [vmem:[#allocation5 + $0x588] sm:$0xff]
    %v255 = vld [vmem:[#allocation5 + $0x590] sm:$0xff]
    %v256 = vld [vmem:[#allocation5 + $0x598] sm:$0xff]
    %v257 = vld [vmem:[#allocation5 + $0x5a0] sm:$0xff]
    %v258 = vld [vmem:[#allocation5 + $0x5a8] sm:$0xff]
    %v259 = vld [vmem:[#allocation5 + $0x5b0] sm:$0xff]
    %v260 = vld [vmem:[#allocation5 + $0x5b8] sm:$0xff]
    %v261 = vld [vmem:[#allocation5 + $0x5c0] sm:$0xff]
    %v262 = vld [vmem:[#allocation5 + $0x5c8] sm:$0xff]
    %v263 = vld [vmem:[#allocation5 + $0x5d0] sm:$0xff]
    %v264 = vld [vmem:[#allocation5 + $0x5d8] sm:$0xff]
    %v265 = vld [vmem:[#allocation5 + $0x5e0] sm:$0xff]
    %v266 = vld [vmem:[#allocation5 + $0x5e8] sm:$0xff]
    %v267 = vld [vmem:[#allocation5 + $0x5f0] sm:$0xff]
    %v268 = vld [vmem:[#allocation5 + $0x5f8] sm:$0xff]
    %v269 = vld [vmem:[#allocation5 + $0x600] sm:$0xff]
    %v270 = vld [vmem:[#allocation5 + $0x608] sm:$0xff]
    %v271 = vld [vmem:[#allocation5 + $0x610] sm:$0xff]
    %v272 = vld [vmem:[#allocation5 + $0x618] sm:$0xff]
    %v273 = vld [vmem:[#allocation5 + $0x620] sm:$0xff]
    %v274 = vld [vmem:[#allocation5 + $0x628] sm:$0xff]
    %v275 = vld [vmem:[#allocation5 + $0x630] sm:$0xff]
    %v276 = vld [vmem:[#allocation5 + $0x638] sm:$0xff]
    %v277 = vld [vmem:[#allocation5 + $0x640] sm:$0xff]
    %v278 = vld [vmem:[#allocation5 + $0x648] sm:$0xff]
    %v279 = vld [vmem:[#allocation5 + $0x650] sm:$0xff]
    %v280 = vld [vmem:[#allocation5 + $0x658] sm:$0xff]
    %v281 = vld [vmem:[#allocation5 + $0x660] sm:$0xff]
    %v282 = vld [vmem:[#allocation5 + $0x668] sm:$0xff]
    %v283 = vld [vmem:[#allocation5 + $0x670] sm:$0xff]
    %v284 = vld [vmem:[#allocation5 + $0x678] sm:$0xff]
    %v285 = vld [vmem:[#allocation5 + $0x680] sm:$0xff]
    %v286 = vld [vmem:[#allocation5 + $0x688] sm:$0xff]
    %v287 = vld [vmem:[#allocation5 + $0x690] sm:$0xff]
    %v288 = vld [vmem:[#allocation5 + $0x698] sm:$0xff]
    %v289 = vld [vmem:[#allocation5 + $0x6a0] sm:$0xff]
    %v290 = vld [vmem:[#allocation5 + $0x6a8] sm:$0xff]
    %v291 = vld [vmem:[#allocation5 + $0x6b0] sm:$0xff]
    %v292 = vld [vmem:[#allocation5 + $0x6b8] sm:$0xff]
    %v293 = vld [vmem:[#allocation5 + $0x6c0] sm:$0xff]
    %v294 = vld [vmem:[#allocation5 + $0x6c8] sm:$0xff]
    %v295 = vld [vmem:[#allocation5 + $0x6d0] sm:$0xff]
    %v296 = vld [vmem:[#allocation5 + $0x6d8] sm:$0xff]
    %v297 = vld [vmem:[#allocation5 + $0x6e0] sm:$0xff]
    %v298 = vld [vmem:[#allocation5 + $0x6e8] sm:$0xff]
    %v299 = vld [vmem:[#allocation5 + $0x6f0] sm:$0xff]
    %v300 = vld [vmem:[#allocation5 + $0x6f8] sm:$0xff]
    %v301 = vld [vmem:[#allocation5 + $0x700] sm:$0xff]
    %v302 = vld [vmem:[#allocation5 + $0x708] sm:$0xff]
    %v303 = vld [vmem:[#allocation5 + $0x710] sm:$0xff]
    %v304 = vld [vmem:[#allocation5 + $0x718] sm:$0xff]
    %v305 = vld [vmem:[#allocation5 + $0x720] sm:$0xff]
    %v306 = vld [vmem:[#allocation5 + $0x728] sm:$0xff]
    %v307 = vld [vmem:[#allocation5 + $0x730] sm:$0xff]
    %v308 = vld [vmem:[#allocation5 + $0x738] sm:$0xff]
    %v309 = vld [vmem:[#allocation5 + $0x740] sm:$0xff]
    %v310 = vld [vmem:[#allocation5 + $0x748] sm:$0xff]
    %v311 = vld [vmem:[#allocation5 + $0x750] sm:$0xff]
    %v312 = vld [vmem:[#allocation5 + $0x758] sm:$0xff]
    %v313 = vld [vmem:[#allocation5 + $0x760] sm:$0xff]
    %v314 = vld [vmem:[#allocation5 + $0x768] sm:$0xff]
    %v315 = vld [vmem:[#allocation5 + $0x770] sm:$0xff]
    %v316 = vld [vmem:[#allocation5 + $0x778] sm:$0xff]
    %v317 = vld [vmem:[#allocation5 + $0x780] sm:$0xff]
    %v318 = vld [vmem:[#allocation5 + $0x788] sm:$0xff]
    %v319 = vld [vmem:[#allocation5 + $0x790] sm:$0xff]
    %v320 = vld [vmem:[#allocation5 + $0x798] sm:$0xff]
    %v321 = vld [vmem:[#allocation5 + $0x7a0] sm:$0xff]
    %v322 = vld [vmem:[#allocation5 + $0x7a8] sm:$0xff]
    %v323 = vld [vmem:[#allocation5 + $0x7b0] sm:$0xff]
    %v324 = vld [vmem:[#allocation5 + $0x7b8] sm:$0xff]
    %v325 = vld [vmem:[#allocation5 + $0x7c0] sm:$0xff]
    %v326 = vld [vmem:[#allocation5 + $0x7c8] sm:$0xff]
    %v327 = vld [vmem:[#allocation5 + $0x7d0] sm:$0xff]
    %v328 = vld [vmem:[#allocation5 + $0x7d8] sm:$0xff]
    %v329 = vld [vmem:[#allocation5 + $0x7e0] sm:$0xff]
    %v330 = vld [vmem:[#allocation5 + $0x7e8] sm:$0xff]
    %v331 = vld [vmem:[#allocation5 + $0x7f0] sm:$0xff]
    %v332 = vld [vmem:[#allocation5 + $0x7f8] sm:$0xff]
    %v333 = vld [vmem:[#allocation5 + $0x800] sm:$0xff]
    %v334 = vld [vmem:[#allocation5 + $0x808] sm:$0xff]
    %v335 = vld [vmem:[#allocation5 + $0x810] sm:$0xff]
    %v336 = vld [vmem:[#allocation5 + $0x818] sm:$0xff]
    %v337 = vld [vmem:[#allocation5 + $0x820] sm:$0xff]
    %v338 = vld [vmem:[#allocation5 + $0x828] sm:$0xff]
    %v339 = vld [vmem:[#allocation5 + $0x830] sm:$0xff]
    %v340 = vld [vmem:[#allocation5 + $0x838] sm:$0xff]
    %v341 = vld [vmem:[#allocation5 + $0x840] sm:$0xff]
    %v342 = vld [vmem:[#allocation5 + $0x848] sm:$0xff]
    %v343 = vld [vmem:[#allocation5 + $0x850] sm:$0xff]
    %v344 = vld [vmem:[#allocation5 + $0x858] sm:$0xff]
    %v345 = vld [vmem:[#allocation5 + $0x860] sm:$0xff]
    %v346 = vld [vmem:[#allocation5 + $0x868] sm:$0xff]
    %v347 = vld [vmem:[#allocation5 + $0x870] sm:$0xff]
    %v348 = vld [vmem:[#allocation5 + $0x878] sm:$0xff]
    %v349 = vld [vmem:[#allocation5 + $0x880] sm:$0xff]
    %v350 = vld [vmem:[#allocation5 + $0x888] sm:$0xff]
    %v351 = vld [vmem:[#allocation5 + $0x890] sm:$0xff]
    %v352 = vld [vmem:[#allocation5 + $0x898] sm:$0xff]
    %v353 = vld [vmem:[#allocation5 + $0x8a0] sm:$0xff]
    %v354 = vld [vmem:[#allocation5 + $0x8a8] sm:$0xff]
    %v355 = vld [vmem:[#allocation5 + $0x8b0] sm:$0xff]
    %v356 = vld [vmem:[#allocation5 + $0x8b8] sm:$0xff]
    %v357 = vld [vmem:[#allocation5 + $0x8c0] sm:$0xff]
    %v358 = vld [vmem:[#allocation5 + $0x8c8] sm:$0xff]
    %v359 = vld [vmem:[#allocation5 + $0x8d0] sm:$0xff]
    %v360 = vld [vmem:[#allocation5 + $0x8d8] sm:$0xff]
    %v361 = vld [vmem:[#allocation5 + $0x8e0] sm:$0xff]
    %v362 = vld [vmem:[#allocation5 + $0x8e8] sm:$0xff]
    %v363 = vld [vmem:[#allocation5 + $0x8f0] sm:$0xff]
    %v364 = vld [vmem:[#allocation5 + $0x8f8] sm:$0xff]
    %v365 = vld [vmem:[%s2] sm:$0xff]
    %v366 = vld [vmem:[%s2 + $0x8] sm:$0xf]
    %v369 = vperm.slane %v365, 0
    %v370 = vperm.slane %v365, 1
    %v371 = vperm.slane %v365, 2
    %v372 = vperm.slane %v365, 3
    %v373 = vperm.slane %v365, 4
    %v374 = vperm.slane %v365, 5
    %v375 = vperm.slane %v365, 6
    %v376 = vperm.slane %v365, 7
    %v377 = vperm.slane %v366, 0
    %v378 = vperm.slane %v366, 1
    %v379 = vperm.slane %v366, 2
    %v380 = vperm.slane %v366, 3
    %v681 = vunpack.c.l.b16 %v77
    %v682 = vunpack.c.h.b16 %v77
    %v683 = vunpack.c.l.b16 %v78
    %v684 = vunpack.c.h.b16 %v78
    %v685 = vunpack.c.l.b16 %v79
    %v686 = vunpack.c.h.b16 %v79
    %v687 = vunpack.c.l.b16 %v80
    %v688 = vunpack.c.h.b16 %v80
    %v689 = vunpack.c.l.b16 %v81
    %v690 = vunpack.c.h.b16 %v81
    %v691 = vunpack.c.l.b16 %v82
    %v692 = vunpack.c.h.b16 %v82
    %v693 = vunpack.c.l.b16 %v83
    %v694 = vunpack.c.h.b16 %v83
    %v695 = vunpack.c.l.b16 %v84
    %v696 = vunpack.c.h.b16 %v84
    %v697 = vunpack.c.l.b16 %v85
    %v698 = vunpack.c.h.b16 %v85
    %v699 = vunpack.c.l.b16 %v86
    %v700 = vunpack.c.h.b16 %v86
    %v701 = vunpack.c.l.b16 %v87
    %v702 = vunpack.c.h.b16 %v87
    %v703 = vunpack.c.l.b16 %v88
    %v704 = vunpack.c.h.b16 %v88
    %v705 = vunpack.c.l.b16 %v89
    %v706 = vunpack.c.h.b16 %v89
    %v707 = vunpack.c.l.b16 %v90
    %v708 = vunpack.c.h.b16 %v90
    %v709 = vunpack.c.l.b16 %v91
    %v710 = vunpack.c.h.b16 %v91
    %v711 = vunpack.c.l.b16 %v92
    %v712 = vunpack.c.h.b16 %v92
    %v713 = vunpack.c.l.b16 %v93
    %v714 = vunpack.c.h.b16 %v93
    %v715 = vunpack.c.l.b16 %v94
    %v716 = vunpack.c.h.b16 %v94
    %v717 = vunpack.c.l.b16 %v95
    %v718 = vunpack.c.h.b16 %v95
    %v719 = vunpack.c.l.b16 %v96
    %v720 = vunpack.c.h.b16 %v96
    %v721 = vunpack.c.l.b16 %v97
    %v722 = vunpack.c.h.b16 %v97
    %v723 = vunpack.c.l.b16 %v98
    %v724 = vunpack.c.h.b16 %v98
    %v725 = vunpack.c.l.b16 %v99
    %v726 = vunpack.c.h.b16 %v99
    %v727 = vunpack.c.l.b16 %v100
    %v728 = vunpack.c.h.b16 %v100
    %v729 = vunpack.c.l.b16 %v101
    %v730 = vunpack.c.h.b16 %v101
    %v731 = vunpack.c.l.b16 %v102
    %v732 = vunpack.c.h.b16 %v102
    %v733 = vunpack.c.l.b16 %v103
    %v734 = vunpack.c.h.b16 %v103
    %v735 = vunpack.c.l.b16 %v104
    %v736 = vunpack.c.h.b16 %v104
    %v737 = vunpack.c.l.b16 %v105
    %v738 = vunpack.c.h.b16 %v105
    %v739 = vunpack.c.l.b16 %v106
    %v740 = vunpack.c.h.b16 %v106
    %v741 = vunpack.c.l.b16 %v107
    %v742 = vunpack.c.h.b16 %v107
    %v743 = vunpack.c.l.b16 %v108
    %v744 = vunpack.c.h.b16 %v108
    %v745 = vunpack.c.l.b16 %v109
    %v746 = vunpack.c.h.b16 %v109
    %v747 = vunpack.c.l.b16 %v110
    %v748 = vunpack.c.h.b16 %v110
    %v749 = vunpack.c.l.b16 %v111
    %v750 = vunpack.c.h.b16 %v111
    %v751 = vunpack.c.l.b16 %v112
    %v752 = vunpack.c.h.b16 %v112
    %v753 = vunpack.c.l.b16 %v113
    %v754 = vunpack.c.h.b16 %v113
    %v755 = vunpack.c.l.b16 %v114
    %v756 = vunpack.c.h.b16 %v114
    %v757 = vunpack.c.l.b16 %v115
    %v758 = vunpack.c.h.b16 %v115
    %v759 = vunpack.c.l.b16 %v116
    %v760 = vunpack.c.h.b16 %v116
    %v761 = vunpack.c.l.b16 %v117
    %v762 = vunpack.c.h.b16 %v117
    %v763 = vunpack.c.l.b16 %v118
    %v764 = vunpack.c.h.b16 %v118
    %v765 = vunpack.c.l.b16 %v119
    %v766 = vunpack.c.h.b16 %v119
    %v767 = vunpack.c.l.b16 %v120
    %v768 = vunpack.c.h.b16 %v120
    %v769 = vunpack.c.l.b16 %v121
    %v770 = vunpack.c.h.b16 %v121
    %v771 = vunpack.c.l.b16 %v122
    %v772 = vunpack.c.h.b16 %v122
    %v773 = vunpack.c.l.b16 %v123
    %v774 = vunpack.c.h.b16 %v123
    %v775 = vunpack.c.l.b16 %v124
    %v776 = vunpack.c.h.b16 %v124
    %v777 = vunpack.c.l.b16 %v125
    %v778 = vunpack.c.h.b16 %v125
    %v779 = vunpack.c.l.b16 %v126
    %v780 = vunpack.c.h.b16 %v126
    %v781 = vunpack.c.l.b16 %v127
    %v782 = vunpack.c.h.b16 %v127
    %v783 = vunpack.c.l.b16 %v128
    %v784 = vunpack.c.h.b16 %v128
    %v785 = vunpack.c.l.b16 %v129
    %v786 = vunpack.c.h.b16 %v129
    %v787 = vunpack.c.l.b16 %v130
    %v788 = vunpack.c.h.b16 %v130
    %v789 = vunpack.c.l.b16 %v131
    %v790 = vunpack.c.h.b16 %v131
    %v791 = vunpack.c.l.b16 %v132
    %v792 = vunpack.c.h.b16 %v132
    %v793 = vunpack.c.l.b16 %v133
    %v794 = vunpack.c.h.b16 %v133
    %v795 = vunpack.c.l.b16 %v134
    %v796 = vunpack.c.h.b16 %v134
    %v797 = vunpack.c.l.b16 %v135
    %v798 = vunpack.c.h.b16 %v135
    %v799 = vunpack.c.l.b16 %v136
    %v800 = vunpack.c.h.b16 %v136
    %v801 = vunpack.c.l.b16 %v137
    %v802 = vunpack.c.h.b16 %v137
    %v803 = vunpack.c.l.b16 %v138
    %v804 = vunpack.c.h.b16 %v138
    %v805 = vunpack.c.l.b16 %v139
    %v806 = vunpack.c.h.b16 %v139
    %v807 = vunpack.c.l.b16 %v140
    %v808 = vunpack.c.h.b16 %v140
    %v809 = vunpack.c.l.b16 %v141
    %v810 = vunpack.c.h.b16 %v141
    %v811 = vunpack.c.l.b16 %v142
    %v812 = vunpack.c.h.b16 %v142
    %v813 = vunpack.c.l.b16 %v143
    %v814 = vunpack.c.h.b16 %v143
    %v815 = vunpack.c.l.b16 %v144
    %v816 = vunpack.c.h.b16 %v144
    %v817 = vunpack.c.l.b16 %v145
    %v818 = vunpack.c.h.b16 %v145
    %v819 = vunpack.c.l.b16 %v146
    %v820 = vunpack.c.h.b16 %v146
    %v821 = vunpack.c.l.b16 %v147
    %v822 = vunpack.c.h.b16 %v147
    %v823 = vunpack.c.l.b16 %v148
    %v824 = vunpack.c.h.b16 %v148
    %v825 = vunpack.c.l.b16 %v149
    %v826 = vunpack.c.h.b16 %v149
    %v827 = vunpack.c.l.b16 %v150
    %v828 = vunpack.c.h.b16 %v150
    %v829 = vunpack.c.l.b16 %v151
    %v830 = vunpack.c.h.b16 %v151
    %v831 = vunpack.c.l.b16 %v152
    %v832 = vunpack.c.h.b16 %v152
    %v833 = vunpack.c.l.b16 %v153
    %v834 = vunpack.c.h.b16 %v153
    %v835 = vunpack.c.l.b16 %v154
    %v836 = vunpack.c.h.b16 %v154
    %v837 = vunpack.c.l.b16 %v155
    %v838 = vunpack.c.h.b16 %v155
    %v839 = vunpack.c.l.b16 %v156
    %v840 = vunpack.c.h.b16 %v156
    %v841 = vunpack.c.l.b16 %v157
    %v842 = vunpack.c.h.b16 %v157
    %v843 = vunpack.c.l.b16 %v158
    %v844 = vunpack.c.h.b16 %v158
    %v845 = vunpack.c.l.b16 %v159
    %v846 = vunpack.c.h.b16 %v159
    %v847 = vunpack.c.l.b16 %v160
    %v848 = vunpack.c.h.b16 %v160
    %v849 = vunpack.c.l.b16 %v161
    %v850 = vunpack.c.h.b16 %v161
    %v851 = vunpack.c.l.b16 %v162
    %v852 = vunpack.c.h.b16 %v162
    %v853 = vunpack.c.l.b16 %v163
    %v854 = vunpack.c.h.b16 %v163
    %v855 = vunpack.c.l.b16 %v164
    %v856 = vunpack.c.h.b16 %v164
    %v857 = vunpack.c.l.b16 %v165
    %v858 = vunpack.c.h.b16 %v165
    %v859 = vunpack.c.l.b16 %v166
    %v860 = vunpack.c.h.b16 %v166
    %v861 = vunpack.c.l.b16 %v167
    %v862 = vunpack.c.h.b16 %v167
    %v863 = vunpack.c.l.b16 %v168
    %v864 = vunpack.c.h.b16 %v168
    %v865 = vunpack.c.l.b16 %v169
    %v866 = vunpack.c.h.b16 %v169
    %v867 = vunpack.c.l.b16 %v170
    %v868 = vunpack.c.h.b16 %v170
    %v869 = vunpack.c.l.b16 %v171
    %v870 = vunpack.c.h.b16 %v171
    %v871 = vunpack.c.l.b16 %v172
    %v872 = vunpack.c.h.b16 %v172
    %v873 = vunpack.c.l.b16 %v173
    %v874 = vunpack.c.h.b16 %v173
    %v875 = vunpack.c.l.b16 %v174
    %v876 = vunpack.c.h.b16 %v174
    %v877 = vunpack.c.l.b16 %v175
    %v878 = vunpack.c.h.b16 %v175
    %v879 = vunpack.c.l.b16 %v176
    %v880 = vunpack.c.h.b16 %v176
    %v881 = vunpack.c.l.b16 %v177
    %v882 = vunpack.c.h.b16 %v177
    %v883 = vunpack.c.l.b16 %v178
    %v884 = vunpack.c.h.b16 %v178
    %v885 = vunpack.c.l.b16 %v179
    %v886 = vunpack.c.h.b16 %v179
    %v887 = vunpack.c.l.b16 %v180
    %v888 = vunpack.c.h.b16 %v180
    %v889 = vunpack.c.l.b16 %v181
    %v890 = vunpack.c.h.b16 %v181
    %v891 = vunpack.c.l.b16 %v182
    %v892 = vunpack.c.h.b16 %v182
    %v893 = vunpack.c.l.b16 %v183
    %v894 = vunpack.c.h.b16 %v183
    %v895 = vunpack.c.l.b16 %v184
    %v896 = vunpack.c.h.b16 %v184
    %v897 = vunpack.c.l.b16 %v185
    %v898 = vunpack.c.h.b16 %v185
    %v899 = vunpack.c.l.b16 %v186
    %v900 = vunpack.c.h.b16 %v186
    %v901 = vunpack.c.l.b16 %v187
    %v902 = vunpack.c.h.b16 %v187
    %v903 = vunpack.c.l.b16 %v188
    %v904 = vunpack.c.h.b16 %v188
    %v905 = vunpack.c.l.b16 %v189
    %v906 = vunpack.c.h.b16 %v189
    %v907 = vunpack.c.l.b16 %v190
    %v908 = vunpack.c.h.b16 %v190
    %v909 = vunpack.c.l.b16 %v191
    %v910 = vunpack.c.h.b16 %v191
    %v911 = vunpack.c.l.b16 %v192
    %v912 = vunpack.c.h.b16 %v192
    %v913 = vunpack.c.l.b16 %v193
    %v914 = vunpack.c.h.b16 %v193
    %v915 = vunpack.c.l.b16 %v194
    %v916 = vunpack.c.h.b16 %v194
    %v917 = vunpack.c.l.b16 %v195
    %v918 = vunpack.c.h.b16 %v195
    %v919 = vunpack.c.l.b16 %v196
    %v920 = vunpack.c.h.b16 %v196
    %v921 = vunpack.c.l.b16 %v197
    %v922 = vunpack.c.h.b16 %v197
    %v923 = vunpack.c.l.b16 %v198
    %v924 = vunpack.c.h.b16 %v198
    %v925 = vunpack.c.l.b16 %v199
    %v926 = vunpack.c.h.b16 %v199
    %v927 = vunpack.c.l.b16 %v200
    %v928 = vunpack.c.h.b16 %v200
    %v929 = vunpack.c.l.b16 %v201
    %v930 = vunpack.c.h.b16 %v201
    %v931 = vunpack.c.l.b16 %v202
    %v932 = vunpack.c.h.b16 %v202
    %v933 = vunpack.c.l.b16 %v203
    %v934 = vunpack.c.h.b16 %v203
    %v935 = vunpack.c.l.b16 %v204
    %v936 = vunpack.c.h.b16 %v204
    %v937 = vunpack.c.l.b16 %v205
    %v938 = vunpack.c.h.b16 %v205
    %v939 = vunpack.c.l.b16 %v206
    %v940 = vunpack.c.h.b16 %v206
    %v941 = vunpack.c.l.b16 %v207
    %v942 = vunpack.c.h.b16 %v207
    %v943 = vunpack.c.l.b16 %v208
    %v944 = vunpack.c.h.b16 %v208
    %v945 = vunpack.c.l.b16 %v209
    %v946 = vunpack.c.h.b16 %v209
    %v947 = vunpack.c.l.b16 %v210
    %v948 = vunpack.c.h.b16 %v210
    %v949 = vunpack.c.l.b16 %v211
    %v950 = vunpack.c.h.b16 %v211
    %v951 = vunpack.c.l.b16 %v212
    %v952 = vunpack.c.h.b16 %v212
    %v953 = vunpack.c.l.b16 %v213
    %v954 = vunpack.c.h.b16 %v213
    %v955 = vunpack.c.l.b16 %v214
    %v956 = vunpack.c.h.b16 %v214
    %v957 = vunpack.c.l.b16 %v215
    %v958 = vunpack.c.h.b16 %v215
    %v959 = vunpack.c.l.b16 %v216
    %v960 = vunpack.c.h.b16 %v216
    %v961 = vunpack.c.l.b16 %v217
    %v962 = vunpack.c.h.b16 %v217
    %v963 = vunpack.c.l.b16 %v218
    %v964 = vunpack.c.h.b16 %v218
    %v965 = vunpack.c.l.b16 %v219
    %v966 = vunpack.c.h.b16 %v219
    %v967 = vunpack.c.l.b16 %v220
    %v968 = vunpack.c.h.b16 %v220
    %v969 = vunpack.c.l.b16 %v221
    %v970 = vunpack.c.h.b16 %v221
    %v971 = vunpack.c.l.b16 %v222
    %v972 = vunpack.c.h.b16 %v222
    %v973 = vunpack.c.l.b16 %v223
    %v974 = vunpack.c.h.b16 %v223
    %v975 = vunpack.c.l.b16 %v224
    %v976 = vunpack.c.h.b16 %v224
    %v977 = vunpack.c.l.b16 %v225
    %v978 = vunpack.c.h.b16 %v225
    %v979 = vunpack.c.l.b16 %v226
    %v980 = vunpack.c.h.b16 %v226
    %v981 = vunpack.c.l.b16 %v227
    %v982 = vunpack.c.h.b16 %v227
    %v983 = vunpack.c.l.b16 %v228
    %v984 = vunpack.c.h.b16 %v228
    %v985 = vunpack.c.l.b16 %v229
    %v986 = vunpack.c.h.b16 %v229
    %v987 = vunpack.c.l.b16 %v230
    %v988 = vunpack.c.h.b16 %v230
    %v989 = vunpack.c.l.b16 %v231
    %v990 = vunpack.c.h.b16 %v231
    %v991 = vunpack.c.l.b16 %v232
    %v992 = vunpack.c.h.b16 %v232
    %v993 = vunpack.c.l.b16 %v233
    %v994 = vunpack.c.h.b16 %v233
    %v995 = vunpack.c.l.b16 %v234
    %v996 = vunpack.c.h.b16 %v234
    %v997 = vunpack.c.l.b16 %v235
    %v998 = vunpack.c.h.b16 %v235
    %v999 = vunpack.c.l.b16 %v236
    %v1000 = vunpack.c.h.b16 %v236
    %v1001 = vunpack.c.l.b16 %v237
    %v1002 = vunpack.c.h.b16 %v237
    %v1003 = vunpack.c.l.b16 %v238
    %v1004 = vunpack.c.h.b16 %v238
    %v1005 = vunpack.c.l.b16 %v239
    %v1006 = vunpack.c.h.b16 %v239
    %v1007 = vunpack.c.l.b16 %v240
    %v1008 = vunpack.c.h.b16 %v240
    %v1009 = vunpack.c.l.b16 %v241
    %v1010 = vunpack.c.h.b16 %v241
    %v1011 = vunpack.c.l.b16 %v242
    %v1012 = vunpack.c.h.b16 %v242
    %v1013 = vunpack.c.l.b16 %v243
    %v1014 = vunpack.c.h.b16 %v243
    %v1015 = vunpack.c.l.b16 %v244
    %v1016 = vunpack.c.h.b16 %v244
    %v1017 = vunpack.c.l.b16 %v245
    %v1018 = vunpack.c.h.b16 %v245
    %v1019 = vunpack.c.l.b16 %v246
    %v1020 = vunpack.c.h.b16 %v246
    %v1021 = vunpack.c.l.b16 %v247
    %v1022 = vunpack.c.h.b16 %v247
    %v1023 = vunpack.c.l.b16 %v248
    %v1024 = vunpack.c.h.b16 %v248
    %v1025 = vunpack.c.l.b16 %v249
    %v1026 = vunpack.c.h.b16 %v249
    %v1027 = vunpack.c.l.b16 %v250
    %v1028 = vunpack.c.h.b16 %v250
    %v1029 = vunpack.c.l.b16 %v251
    %v1030 = vunpack.c.h.b16 %v251
    %v1031 = vunpack.c.l.b16 %v252
    %v1032 = vunpack.c.h.b16 %v252
    %v1033 = vunpack.c.l.b16 %v253
    %v1034 = vunpack.c.h.b16 %v253
    %v1035 = vunpack.c.l.b16 %v254
    %v1036 = vunpack.c.h.b16 %v254
    %v1037 = vunpack.c.l.b16 %v255
    %v1038 = vunpack.c.h.b16 %v255
    %v1039 = vunpack.c.l.b16 %v256
    %v1040 = vunpack.c.h.b16 %v256
    %v1041 = vunpack.c.l.b16 %v257
    %v1042 = vunpack.c.h.b16 %v257
    %v1043 = vunpack.c.l.b16 %v258
    %v1044 = vunpack.c.h.b16 %v258
    %v1045 = vunpack.c.l.b16 %v259
    %v1046 = vunpack.c.h.b16 %v259
    %v1047 = vunpack.c.l.b16 %v260
    %v1048 = vunpack.c.h.b16 %v260
    %v1049 = vunpack.c.l.b16 %v261
    %v1050 = vunpack.c.h.b16 %v261
    %v1051 = vunpack.c.l.b16 %v262
    %v1052 = vunpack.c.h.b16 %v262
    %v1053 = vunpack.c.l.b16 %v263
    %v1054 = vunpack.c.h.b16 %v263
    %v1055 = vunpack.c.l.b16 %v264
    %v1056 = vunpack.c.h.b16 %v264
    %v1057 = vunpack.c.l.b16 %v265
    %v1058 = vunpack.c.h.b16 %v265
    %v1059 = vunpack.c.l.b16 %v266
    %v1060 = vunpack.c.h.b16 %v266
    %v1061 = vunpack.c.l.b16 %v267
    %v1062 = vunpack.c.h.b16 %v267
    %v1063 = vunpack.c.l.b16 %v268
    %v1064 = vunpack.c.h.b16 %v268
    %v1065 = vunpack.c.l.b16 %v269
    %v1066 = vunpack.c.h.b16 %v269
    %v1067 = vunpack.c.l.b16 %v270
    %v1068 = vunpack.c.h.b16 %v270
    %v1069 = vunpack.c.l.b16 %v271
    %v1070 = vunpack.c.h.b16 %v271
    %v1071 = vunpack.c.l.b16 %v272
    %v1072 = vunpack.c.h.b16 %v272
    %v1073 = vunpack.c.l.b16 %v273
    %v1074 = vunpack.c.h.b16 %v273
    %v1075 = vunpack.c.l.b16 %v274
    %v1076 = vunpack.c.h.b16 %v274
    %v1077 = vunpack.c.l.b16 %v275
    %v1078 = vunpack.c.h.b16 %v275
    %v1079 = vunpack.c.l.b16 %v276
    %v1080 = vunpack.c.h.b16 %v276
    %v1081 = vunpack.c.l.b16 %v277
    %v1082 = vunpack.c.h.b16 %v277
    %v1083 = vunpack.c.l.b16 %v278
    %v1084 = vunpack.c.h.b16 %v278
    %v1085 = vunpack.c.l.b16 %v279
    %v1086 = vunpack.c.h.b16 %v279
    %v1087 = vunpack.c.l.b16 %v280
    %v1088 = vunpack.c.h.b16 %v280
    %v1089 = vunpack.c.l.b16 %v281
    %v1090 = vunpack.c.h.b16 %v281
    %v1091 = vunpack.c.l.b16 %v282
    %v1092 = vunpack.c.h.b16 %v282
    %v1093 = vunpack.c.l.b16 %v283
    %v1094 = vunpack.c.h.b16 %v283
    %v1095 = vunpack.c.l.b16 %v284
    %v1096 = vunpack.c.h.b16 %v284
    %v1097 = vunpack.c.l.b16 %v285
    %v1098 = vunpack.c.h.b16 %v285
    %v1099 = vunpack.c.l.b16 %v286
    %v1100 = vunpack.c.h.b16 %v286
    %v1101 = vunpack.c.l.b16 %v287
    %v1102 = vunpack.c.h.b16 %v287
    %v1103 = vunpack.c.l.b16 %v288
    %v1104 = vunpack.c.h.b16 %v288
    %v1105 = vunpack.c.l.b16 %v289
    %v1106 = vunpack.c.h.b16 %v289
    %v1107 = vunpack.c.l.b16 %v290
    %v1108 = vunpack.c.h.b16 %v290
    %v1109 = vunpack.c.l.b16 %v291
    %v1110 = vunpack.c.h.b16 %v291
    %v1111 = vunpack.c.l.b16 %v292
    %v1112 = vunpack.c.h.b16 %v292
    %v1113 = vunpack.c.l.b16 %v293
    %v1114 = vunpack.c.h.b16 %v293
    %v1115 = vunpack.c.l.b16 %v294
    %v1116 = vunpack.c.h.b16 %v294
    %v1117 = vunpack.c.l.b16 %v295
    %v1118 = vunpack.c.h.b16 %v295
    %v1119 = vunpack.c.l.b16 %v296
    %v1120 = vunpack.c.h.b16 %v296
    %v1121 = vunpack.c.l.b16 %v297
    %v1122 = vunpack.c.h.b16 %v297
    %v1123 = vunpack.c.l.b16 %v298
    %v1124 = vunpack.c.h.b16 %v298
    %v1125 = vunpack.c.l.b16 %v299
    %v1126 = vunpack.c.h.b16 %v299
    %v1127 = vunpack.c.l.b16 %v300
    %v1128 = vunpack.c.h.b16 %v300
    %v1129 = vunpack.c.l.b16 %v301
    %v1130 = vunpack.c.h.b16 %v301
    %v1131 = vunpack.c.l.b16 %v302
    %v1132 = vunpack.c.h.b16 %v302
    %v1133 = vunpack.c.l.b16 %v303
    %v1134 = vunpack.c.h.b16 %v303
    %v1135 = vunpack.c.l.b16 %v304
    %v1136 = vunpack.c.h.b16 %v304
    %v1137 = vunpack.c.l.b16 %v305
    %v1138 = vunpack.c.h.b16 %v305
    %v1139 = vunpack.c.l.b16 %v306
    %v1140 = vunpack.c.h.b16 %v306
    %v1141 = vunpack.c.l.b16 %v307
    %v1142 = vunpack.c.h.b16 %v307
    %v1143 = vunpack.c.l.b16 %v308
    %v1144 = vunpack.c.h.b16 %v308
    %v1145 = vunpack.c.l.b16 %v309
    %v1146 = vunpack.c.h.b16 %v309
    %v1147 = vunpack.c.l.b16 %v310
    %v1148 = vunpack.c.h.b16 %v310
    %v1149 = vunpack.c.l.b16 %v311
    %v1150 = vunpack.c.h.b16 %v311
    %v1151 = vunpack.c.l.b16 %v312
    %v1152 = vunpack.c.h.b16 %v312
    %v1153 = vunpack.c.l.b16 %v313
    %v1154 = vunpack.c.h.b16 %v313
    %v1155 = vunpack.c.l.b16 %v314
    %v1156 = vunpack.c.h.b16 %v314
    %v1157 = vunpack.c.l.b16 %v315
    %v1158 = vunpack.c.h.b16 %v315
    %v1159 = vunpack.c.l.b16 %v316
    %v1160 = vunpack.c.h.b16 %v316
    %v1161 = vunpack.c.l.b16 %v317
    %v1162 = vunpack.c.h.b16 %v317
    %v1163 = vunpack.c.l.b16 %v318
    %v1164 = vunpack.c.h.b16 %v318
    %v1165 = vunpack.c.l.b16 %v319
    %v1166 = vunpack.c.h.b16 %v319
    %v1167 = vunpack.c.l.b16 %v320
    %v1168 = vunpack.c.h.b16 %v320
    %v1169 = vunpack.c.l.b16 %v321
    %v1170 = vunpack.c.h.b16 %v321
    %v1171 = vunpack.c.l.b16 %v322
    %v1172 = vunpack.c.h.b16 %v322
    %v1173 = vunpack.c.l.b16 %v323
    %v1174 = vunpack.c.h.b16 %v323
    %v1175 = vunpack.c.l.b16 %v324
    %v1176 = vunpack.c.h.b16 %v324
    %v1177 = vunpack.c.l.b16 %v325
    %v1178 = vunpack.c.h.b16 %v325
    %v1179 = vunpack.c.l.b16 %v326
    %v1180 = vunpack.c.h.b16 %v326
    %v1181 = vunpack.c.l.b16 %v327
    %v1182 = vunpack.c.h.b16 %v327
    %v1183 = vunpack.c.l.b16 %v328
    %v1184 = vunpack.c.h.b16 %v328
    %v1185 = vunpack.c.l.b16 %v329
    %v1186 = vunpack.c.h.b16 %v329
    %v1187 = vunpack.c.l.b16 %v330
    %v1188 = vunpack.c.h.b16 %v330
    %v1189 = vunpack.c.l.b16 %v331
    %v1190 = vunpack.c.h.b16 %v331
    %v1191 = vunpack.c.l.b16 %v332
    %v1192 = vunpack.c.h.b16 %v332
    %v1193 = vunpack.c.l.b16 %v333
    %v1194 = vunpack.c.h.b16 %v333
    %v1195 = vunpack.c.l.b16 %v334
    %v1196 = vunpack.c.h.b16 %v334
    %v1197 = vunpack.c.l.b16 %v335
    %v1198 = vunpack.c.h.b16 %v335
    %v1199 = vunpack.c.l.b16 %v336
    %v1200 = vunpack.c.h.b16 %v336
    %v1201 = vunpack.c.l.b16 %v337
    %v1202 = vunpack.c.h.b16 %v337
    %v1203 = vunpack.c.l.b16 %v338
    %v1204 = vunpack.c.h.b16 %v338
    %v1205 = vunpack.c.l.b16 %v339
    %v1206 = vunpack.c.h.b16 %v339
    %v1207 = vunpack.c.l.b16 %v340
    %v1208 = vunpack.c.h.b16 %v340
    %v1209 = vunpack.c.l.b16 %v341
    %v1210 = vunpack.c.h.b16 %v341
    %v1211 = vunpack.c.l.b16 %v342
    %v1212 = vunpack.c.h.b16 %v342
    %v1213 = vunpack.c.l.b16 %v343
    %v1214 = vunpack.c.h.b16 %v343
    %v1215 = vunpack.c.l.b16 %v344
    %v1216 = vunpack.c.h.b16 %v344
    %v1217 = vunpack.c.l.b16 %v345
    %v1218 = vunpack.c.h.b16 %v345
    %v1219 = vunpack.c.l.b16 %v346
    %v1220 = vunpack.c.h.b16 %v346
    %v1221 = vunpack.c.l.b16 %v347
    %v1222 = vunpack.c.h.b16 %v347
    %v1223 = vunpack.c.l.b16 %v348
    %v1224 = vunpack.c.h.b16 %v348
    %v1225 = vunpack.c.l.b16 %v349
    %v1226 = vunpack.c.h.b16 %v349
    %v1227 = vunpack.c.l.b16 %v350
    %v1228 = vunpack.c.h.b16 %v350
    %v1229 = vunpack.c.l.b16 %v351
    %v1230 = vunpack.c.h.b16 %v351
    %v1231 = vunpack.c.l.b16 %v352
    %v1232 = vunpack.c.h.b16 %v352
    %v1233 = vunpack.c.l.b16 %v353
    %v1234 = vunpack.c.h.b16 %v353
    %v1235 = vunpack.c.l.b16 %v354
    %v1236 = vunpack.c.h.b16 %v354
    %v1237 = vunpack.c.l.b16 %v355
    %v1238 = vunpack.c.h.b16 %v355
    %v1239 = vunpack.c.l.b16 %v356
    %v1240 = vunpack.c.h.b16 %v356
    %v1241 = vunpack.c.l.b16 %v357
    %v1242 = vunpack.c.h.b16 %v357
    %v1243 = vunpack.c.l.b16 %v358
    %v1244 = vunpack.c.h.b16 %v358
    %v1245 = vunpack.c.l.b16 %v359
    %v1246 = vunpack.c.h.b16 %v359
    %v1247 = vunpack.c.l.b16 %v360
    %v1248 = vunpack.c.h.b16 %v360
    %v1249 = vunpack.c.l.b16 %v361
    %v1250 = vunpack.c.h.b16 %v361
    %v1251 = vunpack.c.l.b16 %v362
    %v1252 = vunpack.c.h.b16 %v362
    %v1253 = vunpack.c.l.b16 %v363
    %v1254 = vunpack.c.h.b16 %v363
    %v1255 = vunpack.c.l.b16 %v364
    %v1256 = vunpack.c.h.b16 %v364
    %v1257 = vpack.c.b16 %v693, %v681
    %v1258 = vpack.c.b16 %v694, %v682
    %v1259 = vpack.c.b16 %v695, %v683
    %v1260 = vpack.c.b16 %v696, %v684
    %v1261 = vpack.c.b16 %v697, %v685
    %v1262 = vpack.c.b16 %v698, %v686
    %v1263 = vpack.c.b16 %v699, %v687
    %v1264 = vpack.c.b16 %v700, %v688
    %v1265 = vpack.c.b16 %v701, %v689
    %v1266 = vpack.c.b16 %v702, %v690
    %v1267 = vpack.c.b16 %v703, %v691
    %v1268 = vpack.c.b16 %v704, %v692
    %v1269 = vpack.c.b16 %v717, %v705
    %v1270 = vpack.c.b16 %v718, %v706
    %v1271 = vpack.c.b16 %v719, %v707
    %v1272 = vpack.c.b16 %v720, %v708
    %v1273 = vpack.c.b16 %v721, %v709
    %v1274 = vpack.c.b16 %v722, %v710
    %v1275 = vpack.c.b16 %v723, %v711
    %v1276 = vpack.c.b16 %v724, %v712
    %v1277 = vpack.c.b16 %v725, %v713
    %v1278 = vpack.c.b16 %v726, %v714
    %v1279 = vpack.c.b16 %v727, %v715
    %v1280 = vpack.c.b16 %v728, %v716
    %v1281 = vpack.c.b16 %v741, %v729
    %v1282 = vpack.c.b16 %v742, %v730
    %v1283 = vpack.c.b16 %v743, %v731
    %v1284 = vpack.c.b16 %v744, %v732
    %v1285 = vpack.c.b16 %v745, %v733
    %v1286 = vpack.c.b16 %v746, %v734
    %v1287 = vpack.c.b16 %v747, %v735
    %v1288 = vpack.c.b16 %v748, %v736
    %v1289 = vpack.c.b16 %v749, %v737
    %v1290 = vpack.c.b16 %v750, %v738
    %v1291 = vpack.c.b16 %v751, %v739
    %v1292 = vpack.c.b16 %v752, %v740
    %v1293 = vpack.c.b16 %v765, %v753
    %v1294 = vpack.c.b16 %v766, %v754
    %v1295 = vpack.c.b16 %v767, %v755
    %v1296 = vpack.c.b16 %v768, %v756
    %v1297 = vpack.c.b16 %v769, %v757
    %v1298 = vpack.c.b16 %v770, %v758
    %v1299 = vpack.c.b16 %v771, %v759
    %v1300 = vpack.c.b16 %v772, %v760
    %v1301 = vpack.c.b16 %v773, %v761
    %v1302 = vpack.c.b16 %v774, %v762
    %v1303 = vpack.c.b16 %v775, %v763
    %v1304 = vpack.c.b16 %v776, %v764
    %v1305 = vpack.c.b16 %v789, %v777
    %v1306 = vpack.c.b16 %v790, %v778
    %v1307 = vpack.c.b16 %v791, %v779
    %v1308 = vpack.c.b16 %v792, %v780
    %v1309 = vpack.c.b16 %v793, %v781
    %v1310 = vpack.c.b16 %v794, %v782
    %v1311 = vpack.c.b16 %v795, %v783
    %v1312 = vpack.c.b16 %v796, %v784
    %v1313 = vpack.c.b16 %v797, %v785
    %v1314 = vpack.c.b16 %v798, %v786
    %v1315 = vpack.c.b16 %v799, %v787
    %v1316 = vpack.c.b16 %v800, %v788
    %v1317 = vpack.c.b16 %v813, %v801
    %v1318 = vpack.c.b16 %v814, %v802
    %v1319 = vpack.c.b16 %v815, %v803
    %v1320 = vpack.c.b16 %v816, %v804
    %v1321 = vpack.c.b16 %v817, %v805
    %v1322 = vpack.c.b16 %v818, %v806
    %v1323 = vpack.c.b16 %v819, %v807
    %v1324 = vpack.c.b16 %v820, %v808
    %v1325 = vpack.c.b16 %v821, %v809
    %v1326 = vpack.c.b16 %v822, %v810
    %v1327 = vpack.c.b16 %v823, %v811
    %v1328 = vpack.c.b16 %v824, %v812
    %v1329 = vpack.c.b16 %v837, %v825
    %v1330 = vpack.c.b16 %v838, %v826
    %v1331 = vpack.c.b16 %v839, %v827
    %v1332 = vpack.c.b16 %v840, %v828
    %v1333 = vpack.c.b16 %v841, %v829
    %v1334 = vpack.c.b16 %v842, %v830
    %v1335 = vpack.c.b16 %v843, %v831
    %v1336 = vpack.c.b16 %v844, %v832
    %v1337 = vpack.c.b16 %v845, %v833
    %v1338 = vpack.c.b16 %v846, %v834
    %v1339 = vpack.c.b16 %v847, %v835
    %v1340 = vpack.c.b16 %v848, %v836
    %v1341 = vpack.c.b16 %v861, %v849
    %v1342 = vpack.c.b16 %v862, %v850
    %v1343 = vpack.c.b16 %v863, %v851
    %v1344 = vpack.c.b16 %v864, %v852
    %v1345 = vpack.c.b16 %v865, %v853
    %v1346 = vpack.c.b16 %v866, %v854
    %v1347 = vpack.c.b16 %v867, %v855
    %v1348 = vpack.c.b16 %v868, %v856
    %v1349 = vpack.c.b16 %v869, %v857
    %v1350 = vpack.c.b16 %v870, %v858
    %v1351 = vpack.c.b16 %v871, %v859
    %v1352 = vpack.c.b16 %v872, %v860
    %v1353 = vpack.c.b16 %v885, %v873
    %v1354 = vpack.c.b16 %v886, %v874
    %v1355 = vpack.c.b16 %v887, %v875
    %v1356 = vpack.c.b16 %v888, %v876
    %v1357 = vpack.c.b16 %v889, %v877
    %v1358 = vpack.c.b16 %v890, %v878
    %v1359 = vpack.c.b16 %v891, %v879
    %v1360 = vpack.c.b16 %v892, %v880
    %v1361 = vpack.c.b16 %v893, %v881
    %v1362 = vpack.c.b16 %v894, %v882
    %v1363 = vpack.c.b16 %v895, %v883
    %v1364 = vpack.c.b16 %v896, %v884
    %v1365 = vpack.c.b16 %v909, %v897
    %v1366 = vpack.c.b16 %v910, %v898
    %v1367 = vpack.c.b16 %v911, %v899
    %v1368 = vpack.c.b16 %v912, %v900
    %v1369 = vpack.c.b16 %v913, %v901
    %v1370 = vpack.c.b16 %v914, %v902
    %v1371 = vpack.c.b16 %v915, %v903
    %v1372 = vpack.c.b16 %v916, %v904
    %v1373 = vpack.c.b16 %v917, %v905
    %v1374 = vpack.c.b16 %v918, %v906
    %v1375 = vpack.c.b16 %v919, %v907
    %v1376 = vpack.c.b16 %v920, %v908
    %v1377 = vpack.c.b16 %v933, %v921
    %v1378 = vpack.c.b16 %v934, %v922
    %v1379 = vpack.c.b16 %v935, %v923
    %v1380 = vpack.c.b16 %v936, %v924
    %v1381 = vpack.c.b16 %v937, %v925
    %v1382 = vpack.c.b16 %v938, %v926
    %v1383 = vpack.c.b16 %v939, %v927
    %v1384 = vpack.c.b16 %v940, %v928
    %v1385 = vpack.c.b16 %v941, %v929
    %v1386 = vpack.c.b16 %v942, %v930
    %v1387 = vpack.c.b16 %v943, %v931
    %v1388 = vpack.c.b16 %v944, %v932
    %v1389 = vpack.c.b16 %v957, %v945
    %v1390 = vpack.c.b16 %v958, %v946
    %v1391 = vpack.c.b16 %v959, %v947
    %v1392 = vpack.c.b16 %v960, %v948
    %v1393 = vpack.c.b16 %v961, %v949
    %v1394 = vpack.c.b16 %v962, %v950
    %v1395 = vpack.c.b16 %v963, %v951
    %v1396 = vpack.c.b16 %v964, %v952
    %v1397 = vpack.c.b16 %v965, %v953
    %v1398 = vpack.c.b16 %v966, %v954
    %v1399 = vpack.c.b16 %v967, %v955
    %v1400 = vpack.c.b16 %v968, %v956
    %v1401 = vpack.c.b16 %v981, %v969
    %v1402 = vpack.c.b16 %v982, %v970
    %v1403 = vpack.c.b16 %v983, %v971
    %v1404 = vpack.c.b16 %v984, %v972
    %v1405 = vpack.c.b16 %v985, %v973
    %v1406 = vpack.c.b16 %v986, %v974
    %v1407 = vpack.c.b16 %v987, %v975
    %v1408 = vpack.c.b16 %v988, %v976
    %v1409 = vpack.c.b16 %v989, %v977
    %v1410 = vpack.c.b16 %v990, %v978
    %v1411 = vpack.c.b16 %v991, %v979
    %v1412 = vpack.c.b16 %v992, %v980
    %v1413 = vpack.c.b16 %v1005, %v993
    %v1414 = vpack.c.b16 %v1006, %v994
    %v1415 = vpack.c.b16 %v1007, %v995
    %v1416 = vpack.c.b16 %v1008, %v996
    %v1417 = vpack.c.b16 %v1009, %v997
    %v1418 = vpack.c.b16 %v1010, %v998
    %v1419 = vpack.c.b16 %v1011, %v999
    %v1420 = vpack.c.b16 %v1012, %v1000
    %v1421 = vpack.c.b16 %v1013, %v1001
    %v1422 = vpack.c.b16 %v1014, %v1002
    %v1423 = vpack.c.b16 %v1015, %v1003
    %v1424 = vpack.c.b16 %v1016, %v1004
    %v1425 = vpack.c.b16 %v1029, %v1017
    %v1426 = vpack.c.b16 %v1030, %v1018
    %v1427 = vpack.c.b16 %v1031, %v1019
    %v1428 = vpack.c.b16 %v1032, %v1020
    %v1429 = vpack.c.b16 %v1033, %v1021
    %v1430 = vpack.c.b16 %v1034, %v1022
    %v1431 = vpack.c.b16 %v1035, %v1023
    %v1432 = vpack.c.b16 %v1036, %v1024
    %v1433 = vpack.c.b16 %v1037, %v1025
    %v1434 = vpack.c.b16 %v1038, %v1026
    %v1435 = vpack.c.b16 %v1039, %v1027
    %v1436 = vpack.c.b16 %v1040, %v1028
    %v1437 = vpack.c.b16 %v1053, %v1041
    %v1438 = vpack.c.b16 %v1054, %v1042
    %v1439 = vpack.c.b16 %v1055, %v1043
    %v1440 = vpack.c.b16 %v1056, %v1044
    %v1441 = vpack.c.b16 %v1057, %v1045
    %v1442 = vpack.c.b16 %v1058, %v1046
    %v1443 = vpack.c.b16 %v1059, %v1047
    %v1444 = vpack.c.b16 %v1060, %v1048
    %v1445 = vpack.c.b16 %v1061, %v1049
    %v1446 = vpack.c.b16 %v1062, %v1050
    %v1447 = vpack.c.b16 %v1063, %v1051
    %v1448 = vpack.c.b16 %v1064, %v1052
    %v1449 = vpack.c.b16 %v1077, %v1065
    %v1450 = vpack.c.b16 %v1078, %v1066
    %v1451 = vpack.c.b16 %v1079, %v1067
    %v1452 = vpack.c.b16 %v1080, %v1068
    %v1453 = vpack.c.b16 %v1081, %v1069
    %v1454 = vpack.c.b16 %v1082, %v1070
    %v1455 = vpack.c.b16 %v1083, %v1071
    %v1456 = vpack.c.b16 %v1084, %v1072
    %v1457 = vpack.c.b16 %v1085, %v1073
    %v1458 = vpack.c.b16 %v1086, %v1074
    %v1459 = vpack.c.b16 %v1087, %v1075
    %v1460 = vpack.c.b16 %v1088, %v1076
    %v1461 = vpack.c.b16 %v1101, %v1089
    %v1462 = vpack.c.b16 %v1102, %v1090
    %v1463 = vpack.c.b16 %v1103, %v1091
    %v1464 = vpack.c.b16 %v1104, %v1092
    %v1465 = vpack.c.b16 %v1105, %v1093
    %v1466 = vpack.c.b16 %v1106, %v1094
    %v1467 = vpack.c.b16 %v1107, %v1095
    %v1468 = vpack.c.b16 %v1108, %v1096
    %v1469 = vpack.c.b16 %v1109, %v1097
    %v1470 = vpack.c.b16 %v1110, %v1098
    %v1471 = vpack.c.b16 %v1111, %v1099
    %v1472 = vpack.c.b16 %v1112, %v1100
    %v1473 = vpack.c.b16 %v1125, %v1113
    %v1474 = vpack.c.b16 %v1126, %v1114
    %v1475 = vpack.c.b16 %v1127, %v1115
    %v1476 = vpack.c.b16 %v1128, %v1116
    %v1477 = vpack.c.b16 %v1129, %v1117
    %v1478 = vpack.c.b16 %v1130, %v1118
    %v1479 = vpack.c.b16 %v1131, %v1119
    %v1480 = vpack.c.b16 %v1132, %v1120
    %v1481 = vpack.c.b16 %v1133, %v1121
    %v1482 = vpack.c.b16 %v1134, %v1122
    %v1483 = vpack.c.b16 %v1135, %v1123
    %v1484 = vpack.c.b16 %v1136, %v1124
    %v1485 = vpack.c.b16 %v1149, %v1137
    %v1486 = vpack.c.b16 %v1150, %v1138
    %v1487 = vpack.c.b16 %v1151, %v1139
    %v1488 = vpack.c.b16 %v1152, %v1140
    %v1489 = vpack.c.b16 %v1153, %v1141
    %v1490 = vpack.c.b16 %v1154, %v1142
    %v1491 = vpack.c.b16 %v1155, %v1143
    %v1492 = vpack.c.b16 %v1156, %v1144
    %v1493 = vpack.c.b16 %v1157, %v1145
    %v1494 = vpack.c.b16 %v1158, %v1146
    %v1495 = vpack.c.b16 %v1159, %v1147
    %v1496 = vpack.c.b16 %v1160, %v1148
    %v1497 = vpack.c.b16 %v1173, %v1161
    %v1498 = vpack.c.b16 %v1174, %v1162
    %v1499 = vpack.c.b16 %v1175, %v1163
    %v1500 = vpack.c.b16 %v1176, %v1164
    %v1501 = vpack.c.b16 %v1177, %v1165
    %v1502 = vpack.c.b16 %v1178, %v1166
    %v1503 = vpack.c.b16 %v1179, %v1167
    %v1504 = vpack.c.b16 %v1180, %v1168
    %v1505 = vpack.c.b16 %v1181, %v1169
    %v1506 = vpack.c.b16 %v1182, %v1170
    %v1507 = vpack.c.b16 %v1183, %v1171
    %v1508 = vpack.c.b16 %v1184, %v1172
    %v1509 = vpack.c.b16 %v1197, %v1185
    %v1510 = vpack.c.b16 %v1198, %v1186
    %v1511 = vpack.c.b16 %v1199, %v1187
    %v1512 = vpack.c.b16 %v1200, %v1188
    %v1513 = vpack.c.b16 %v1201, %v1189
    %v1514 = vpack.c.b16 %v1202, %v1190
    %v1515 = vpack.c.b16 %v1203, %v1191
    %v1516 = vpack.c.b16 %v1204, %v1192
    %v1517 = vpack.c.b16 %v1205, %v1193
    %v1518 = vpack.c.b16 %v1206, %v1194
    %v1519 = vpack.c.b16 %v1207, %v1195
    %v1520 = vpack.c.b16 %v1208, %v1196
    %v1521 = vpack.c.b16 %v1221, %v1209
    %v1522 = vpack.c.b16 %v1222, %v1210
    %v1523 = vpack.c.b16 %v1223, %v1211
    %v1524 = vpack.c.b16 %v1224, %v1212
    %v1525 = vpack.c.b16 %v1225, %v1213
    %v1526 = vpack.c.b16 %v1226, %v1214
    %v1527 = vpack.c.b16 %v1227, %v1215
    %v1528 = vpack.c.b16 %v1228, %v1216
    %v1529 = vpack.c.b16 %v1229, %v1217
    %v1530 = vpack.c.b16 %v1230, %v1218
    %v1531 = vpack.c.b16 %v1231, %v1219
    %v1532 = vpack.c.b16 %v1232, %v1220
    %v1533 = vpack.c.b16 %v1245, %v1233
    %v1534 = vpack.c.b16 %v1246, %v1234
    %v1535 = vpack.c.b16 %v1247, %v1235
    %v1536 = vpack.c.b16 %v1248, %v1236
    %v1537 = vpack.c.b16 %v1249, %v1237
    %v1538 = vpack.c.b16 %v1250, %v1238
    %v1539 = vpack.c.b16 %v1251, %v1239
    %v1540 = vpack.c.b16 %v1252, %v1240
    %v1541 = vpack.c.b16 %v1253, %v1241
    %v1542 = vpack.c.b16 %v1254, %v1242
    %v1543 = vpack.c.b16 %v1255, %v1243
    %v1544 = vpack.c.b16 %v1256, %v1244
    %1833 = vmatpush.bf16.msra.mxu0 %v1341
    %1834 = vmatpush.bf16.msra.mxu0 %v1329
    %1835 = vmatpush.bf16.msra.mxu0 %v1317
    %1836 = vmatpush.bf16.msra.mxu0 %v1305
    %1837 = vmatpush.bf16.msra.mxu0 %v1293
    %1838 = vmatpush.bf16.msra.mxu0 %v1281
    %1839 = vmatpush.bf16.msra.mxu0 %v1269
    %1840 = vmatpush.bf16.msra.mxu0 %v1257
    %1841 = vmatmul.bf16.gmra.mxu0 %v74
    %v1842 = vpop.f32.mrf.mxu0
    %v1843 = vadd.f32 %v369, %v1842
    %v1844 = vpop.f32.mrf.mxu0
    %v1845 = vadd.f32 %v369, %v1844
    %1846 = vdwg.mxu0
    %1847 = vmatpush.bf16.msra.mxu0 %v1437
    %1848 = vmatpush.bf16.msra.mxu0 %v1425
    %1849 = vmatpush.bf16.msra.mxu0 %v1413
    %1850 = vmatpush.bf16.msra.mxu0 %v1401
    %1851 = vmatpush.bf16.msra.mxu0 %v1389
    %1852 = vmatpush.bf16.msra.mxu0 %v1377
    %1853 = vmatpush.bf16.msra.mxu0 %v1365
    %1854 = vmatpush.bf16.msra.mxu0 %v1353
    %1855 = vmatmul.bf16.gmra.mxu0 %v75
    %v1856 = vpop.f32.mrf.mxu0
    %v1857 = vadd.f32 %v1843, %v1856
    %v1858 = vpop.f32.mrf.mxu0
    %v1859 = vadd.f32 %v1845, %v1858
    %1860 = vdwg.mxu0
    %1861 = vmatpush.bf16.msra.mxu0 %v1533
    %1862 = vmatpush.bf16.msra.mxu0 %v1521
    %1863 = vmatpush.bf16.msra.mxu0 %v1509
    %1864 = vmatpush.bf16.msra.mxu0 %v1497
    %1865 = vmatpush.bf16.msra.mxu0 %v1485
    %1866 = vmatpush.bf16.msra.mxu0 %v1473
    %1867 = vmatpush.bf16.msra.mxu0 %v1461
    %1868 = vmatpush.bf16.msra.mxu0 %v1449
    %1869 = vmatmul.bf16.gmra.mxu0 %v76
    %v1870 = vpop.f32.mrf.mxu0
    %v1871 = vadd.f32 %v1857, %v1870
    %v1872 = vpop.f32.mrf.mxu0
    %v1873 = vadd.f32 %v1859, %v1872
    %1874 = vdwg.mxu0
    %1875 = vmatpush.bf16.msra.mxu0 %v1342
    %1876 = vmatpush.bf16.msra.mxu0 %v1330
    %1877 = vmatpush.bf16.msra.mxu0 %v1318
    %1878 = vmatpush.bf16.msra.mxu0 %v1306
    %1879 = vmatpush.bf16.msra.mxu0 %v1294
    %1880 = vmatpush.bf16.msra.mxu0 %v1282
    %1881 = vmatpush.bf16.msra.mxu0 %v1270
    %1882 = vmatpush.bf16.msra.mxu0 %v1258
    %1883 = vmatmul.bf16.gmra.mxu0 %v74
    %v1884 = vpop.f32.mrf.mxu0
    %v1885 = vadd.f32 %v370, %v1884
    %v1886 = vpop.f32.mrf.mxu0
    %v1887 = vadd.f32 %v370, %v1886
    %1888 = vdwg.mxu0
    %1889 = vmatpush.bf16.msra.mxu0 %v1438
    %1890 = vmatpush.bf16.msra.mxu0 %v1426
    %1891 = vmatpush.bf16.msra.mxu0 %v1414
    %1892 = vmatpush.bf16.msra.mxu0 %v1402
    %1893 = vmatpush.bf16.msra.mxu0 %v1390
    %1894 = vmatpush.bf16.msra.mxu0 %v1378
    %1895 = vmatpush.bf16.msra.mxu0 %v1366
    %1896 = vmatpush.bf16.msra.mxu0 %v1354
    %1897 = vmatmul.bf16.gmra.mxu0 %v75
    %v1898 = vpop.f32.mrf.mxu0
    %v1899 = vadd.f32 %v1885, %v1898
    %v1900 = vpop.f32.mrf.mxu0
    %v1901 = vadd.f32 %v1887, %v1900
    %1902 = vdwg.mxu0
    %1903 = vmatpush.bf16.msra.mxu0 %v1534
    %1904 = vmatpush.bf16.msra.mxu0 %v1522
    %1905 = vmatpush.bf16.msra.mxu0 %v1510
    %1906 = vmatpush.bf16.msra.mxu0 %v1498
    %1907 = vmatpush.bf16.msra.mxu0 %v1486
    %1908 = vmatpush.bf16.msra.mxu0 %v1474
    %1909 = vmatpush.bf16.msra.mxu0 %v1462
    %1910 = vmatpush.bf16.msra.mxu0 %v1450
    %1911 = vmatmul.bf16.gmra.mxu0 %v76
    %v1912 = vpop.f32.mrf.mxu0
    %v1913 = vadd.f32 %v1899, %v1912
    %v1914 = vpop.f32.mrf.mxu0
    %v1915 = vadd.f32 %v1901, %v1914
    %1916 = vdwg.mxu0
    %1917 = vmatpush.bf16.msra.mxu0 %v1343
    %1918 = vmatpush.bf16.msra.mxu0 %v1331
    %1919 = vmatpush.bf16.msra.mxu0 %v1319
    %1920 = vmatpush.bf16.msra.mxu0 %v1307
    %1921 = vmatpush.bf16.msra.mxu0 %v1295
    %1922 = vmatpush.bf16.msra.mxu0 %v1283
    %1923 = vmatpush.bf16.msra.mxu0 %v1271
    %1924 = vmatpush.bf16.msra.mxu0 %v1259
    %1925 = vmatmul.bf16.gmra.mxu0 %v74
    %v1926 = vpop.f32.mrf.mxu0
    %v1927 = vadd.f32 %v371, %v1926
    %v1928 = vpop.f32.mrf.mxu0
    %v1929 = vadd.f32 %v371, %v1928
    %1930 = vdwg.mxu0
    %1931 = vmatpush.bf16.msra.mxu0 %v1439
    %1932 = vmatpush.bf16.msra.mxu0 %v1427
    %1933 = vmatpush.bf16.msra.mxu0 %v1415
    %1934 = vmatpush.bf16.msra.mxu0 %v1403
    %1935 = vmatpush.bf16.msra.mxu0 %v1391
    %1936 = vmatpush.bf16.msra.mxu0 %v1379
    %1937 = vmatpush.bf16.msra.mxu0 %v1367
    %1938 = vmatpush.bf16.msra.mxu0 %v1355
    %1939 = vmatmul.bf16.gmra.mxu0 %v75
    %v1940 = vpop.f32.mrf.mxu0
    %v1941 = vadd.f32 %v1927, %v1940
    %v1942 = vpop.f32.mrf.mxu0
    %v1943 = vadd.f32 %v1929, %v1942
    %1944 = vdwg.mxu0
    %1945 = vmatpush.bf16.msra.mxu0 %v1535
    %1946 = vmatpush.bf16.msra.mxu0 %v1523
    %1947 = vmatpush.bf16.msra.mxu0 %v1511
    %1948 = vmatpush.bf16.msra.mxu0 %v1499
    %1949 = vmatpush.bf16.msra.mxu0 %v1487
    %1950 = vmatpush.bf16.msra.mxu0 %v1475
    %1951 = vmatpush.bf16.msra.mxu0 %v1463
    %1952 = vmatpush.bf16.msra.mxu0 %v1451
    %1953 = vmatmul.bf16.gmra.mxu0 %v76
    %v1954 = vpop.f32.mrf.mxu0
    %v1955 = vadd.f32 %v1941, %v1954
    %v1956 = vpop.f32.mrf.mxu0
    %v1957 = vadd.f32 %v1943, %v1956
    %1958 = vdwg.mxu0
    %1959 = vmatpush.bf16.msra.mxu0 %v1344
    %1960 = vmatpush.bf16.msra.mxu0 %v1332
    %1961 = vmatpush.bf16.msra.mxu0 %v1320
    %1962 = vmatpush.bf16.msra.mxu0 %v1308
    %1963 = vmatpush.bf16.msra.mxu0 %v1296
    %1964 = vmatpush.bf16.msra.mxu0 %v1284
    %1965 = vmatpush.bf16.msra.mxu0 %v1272
    %1966 = vmatpush.bf16.msra.mxu0 %v1260
    %1967 = vmatmul.bf16.gmra.mxu0 %v74
    %v1968 = vpop.f32.mrf.mxu0
    %v1969 = vadd.f32 %v372, %v1968
    %v1970 = vpop.f32.mrf.mxu0
    %v1971 = vadd.f32 %v372, %v1970
    %1972 = vdwg.mxu0
    %1973 = vmatpush.bf16.msra.mxu0 %v1440
    %1974 = vmatpush.bf16.msra.mxu0 %v1428
    %1975 = vmatpush.bf16.msra.mxu0 %v1416
    %1976 = vmatpush.bf16.msra.mxu0 %v1404
    %1977 = vmatpush.bf16.msra.mxu0 %v1392
    %1978 = vmatpush.bf16.msra.mxu0 %v1380
    %1979 = vmatpush.bf16.msra.mxu0 %v1368
    %1980 = vmatpush.bf16.msra.mxu0 %v1356
    %1981 = vmatmul.bf16.gmra.mxu0 %v75
    %v1982 = vpop.f32.mrf.mxu0
    %v1983 = vadd.f32 %v1969, %v1982
    %v1984 = vpop.f32.mrf.mxu0
    %v1985 = vadd.f32 %v1971, %v1984
    %1986 = vdwg.mxu0
    %1987 = vmatpush.bf16.msra.mxu0 %v1536
    %1988 = vmatpush.bf16.msra.mxu0 %v1524
    %1989 = vmatpush.bf16.msra.mxu0 %v1512
    %1990 = vmatpush.bf16.msra.mxu0 %v1500
    %1991 = vmatpush.bf16.msra.mxu0 %v1488
    %1992 = vmatpush.bf16.msra.mxu0 %v1476
    %1993 = vmatpush.bf16.msra.mxu0 %v1464
    %1994 = vmatpush.bf16.msra.mxu0 %v1452
    %1995 = vmatmul.bf16.gmra.mxu0 %v76
    %v1996 = vpop.f32.mrf.mxu0
    %v1997 = vadd.f32 %v1983, %v1996
    %v1998 = vpop.f32.mrf.mxu0
    %v1999 = vadd.f32 %v1985, %v1998
    %2000 = vdwg.mxu0
    %2001 = vmatpush.bf16.msra.mxu0 %v1345
    %2002 = vmatpush.bf16.msra.mxu0 %v1333
    %2003 = vmatpush.bf16.msra.mxu0 %v1321
    %2004 = vmatpush.bf16.msra.mxu0 %v1309
    %2005 = vmatpush.bf16.msra.mxu0 %v1297
    %2006 = vmatpush.bf16.msra.mxu0 %v1285
    %2007 = vmatpush.bf16.msra.mxu0 %v1273
    %2008 = vmatpush.bf16.msra.mxu0 %v1261
    %2009 = vmatmul.bf16.gmra.mxu0 %v74
    %v2010 = vpop.f32.mrf.mxu0
    %v2011 = vadd.f32 %v373, %v2010
    %v2012 = vpop.f32.mrf.mxu0
    %v2013 = vadd.f32 %v373, %v2012
    %2014 = vdwg.mxu0
    %2015 = vmatpush.bf16.msra.mxu0 %v1441
    %2016 = vmatpush.bf16.msra.mxu0 %v1429
    %2017 = vmatpush.bf16.msra.mxu0 %v1417
    %2018 = vmatpush.bf16.msra.mxu0 %v1405
    %2019 = vmatpush.bf16.msra.mxu0 %v1393
    %2020 = vmatpush.bf16.msra.mxu0 %v1381
    %2021 = vmatpush.bf16.msra.mxu0 %v1369
    %2022 = vmatpush.bf16.msra.mxu0 %v1357
    %2023 = vmatmul.bf16.gmra.mxu0 %v75
    %v2024 = vpop.f32.mrf.mxu0
    %v2025 = vadd.f32 %v2011, %v2024
    %v2026 = vpop.f32.mrf.mxu0
    %v2027 = vadd.f32 %v2013, %v2026
    %2028 = vdwg.mxu0
    %2029 = vmatpush.bf16.msra.mxu0 %v1537
    %2030 = vmatpush.bf16.msra.mxu0 %v1525
    %2031 = vmatpush.bf16.msra.mxu0 %v1513
    %2032 = vmatpush.bf16.msra.mxu0 %v1501
    %2033 = vmatpush.bf16.msra.mxu0 %v1489
    %2034 = vmatpush.bf16.msra.mxu0 %v1477
    %2035 = vmatpush.bf16.msra.mxu0 %v1465
    %2036 = vmatpush.bf16.msra.mxu0 %v1453
    %2037 = vmatmul.bf16.gmra.mxu0 %v76
    %v2038 = vpop.f32.mrf.mxu0
    %v2039 = vadd.f32 %v2025, %v2038
    %v2040 = vpop.f32.mrf.mxu0
    %v2041 = vadd.f32 %v2027, %v2040
    %2042 = vdwg.mxu0
    %2043 = vmatpush.bf16.msra.mxu0 %v1346
    %2044 = vmatpush.bf16.msra.mxu0 %v1334
    %2045 = vmatpush.bf16.msra.mxu0 %v1322
    %2046 = vmatpush.bf16.msra.mxu0 %v1310
    %2047 = vmatpush.bf16.msra.mxu0 %v1298
    %2048 = vmatpush.bf16.msra.mxu0 %v1286
    %2049 = vmatpush.bf16.msra.mxu0 %v1274
    %2050 = vmatpush.bf16.msra.mxu0 %v1262
    %2051 = vmatmul.bf16.gmra.mxu0 %v74
    %v2052 = vpop.f32.mrf.mxu0
    %v2053 = vadd.f32 %v374, %v2052
    %v2054 = vpop.f32.mrf.mxu0
    %v2055 = vadd.f32 %v374, %v2054
    %2056 = vdwg.mxu0
    %2057 = vmatpush.bf16.msra.mxu0 %v1442
    %2058 = vmatpush.bf16.msra.mxu0 %v1430
    %2059 = vmatpush.bf16.msra.mxu0 %v1418
    %2060 = vmatpush.bf16.msra.mxu0 %v1406
    %2061 = vmatpush.bf16.msra.mxu0 %v1394
    %2062 = vmatpush.bf16.msra.mxu0 %v1382
    %2063 = vmatpush.bf16.msra.mxu0 %v1370
    %2064 = vmatpush.bf16.msra.mxu0 %v1358
    %2065 = vmatmul.bf16.gmra.mxu0 %v75
    %v2066 = vpop.f32.mrf.mxu0
    %v2067 = vadd.f32 %v2053, %v2066
    %v2068 = vpop.f32.mrf.mxu0
    %v2069 = vadd.f32 %v2055, %v2068
    %2070 = vdwg.mxu0
    %2071 = vmatpush.bf16.msra.mxu0 %v1538
    %2072 = vmatpush.bf16.msra.mxu0 %v1526
    %2073 = vmatpush.bf16.msra.mxu0 %v1514
    %2074 = vmatpush.bf16.msra.mxu0 %v1502
    %2075 = vmatpush.bf16.msra.mxu0 %v1490
    %2076 = vmatpush.bf16.msra.mxu0 %v1478
    %2077 = vmatpush.bf16.msra.mxu0 %v1466
    %2078 = vmatpush.bf16.msra.mxu0 %v1454
    %2079 = vmatmul.bf16.gmra.mxu0 %v76
    %v2080 = vpop.f32.mrf.mxu0
    %v2081 = vadd.f32 %v2067, %v2080
    %v2082 = vpop.f32.mrf.mxu0
    %v2083 = vadd.f32 %v2069, %v2082
    %2084 = vdwg.mxu0
    %2085 = vmatpush.bf16.msra.mxu0 %v1347
    %2086 = vmatpush.bf16.msra.mxu0 %v1335
    %2087 = vmatpush.bf16.msra.mxu0 %v1323
    %2088 = vmatpush.bf16.msra.mxu0 %v1311
    %2089 = vmatpush.bf16.msra.mxu0 %v1299
    %2090 = vmatpush.bf16.msra.mxu0 %v1287
    %2091 = vmatpush.bf16.msra.mxu0 %v1275
    %2092 = vmatpush.bf16.msra.mxu0 %v1263
    %2093 = vmatmul.bf16.gmra.mxu0 %v74
    %v2094 = vpop.f32.mrf.mxu0
    %v2095 = vadd.f32 %v375, %v2094
    %v2096 = vpop.f32.mrf.mxu0
    %v2097 = vadd.f32 %v375, %v2096
    %2098 = vdwg.mxu0
    %2099 = vmatpush.bf16.msra.mxu0 %v1443
    %2100 = vmatpush.bf16.msra.mxu0 %v1431
    %2101 = vmatpush.bf16.msra.mxu0 %v1419
    %2102 = vmatpush.bf16.msra.mxu0 %v1407
    %2103 = vmatpush.bf16.msra.mxu0 %v1395
    %2104 = vmatpush.bf16.msra.mxu0 %v1383
    %2105 = vmatpush.bf16.msra.mxu0 %v1371
    %2106 = vmatpush.bf16.msra.mxu0 %v1359
    %2107 = vmatmul.bf16.gmra.mxu0 %v75
    %v2108 = vpop.f32.mrf.mxu0
    %v2109 = vadd.f32 %v2095, %v2108
    %v2110 = vpop.f32.mrf.mxu0
    %v2111 = vadd.f32 %v2097, %v2110
    %2112 = vdwg.mxu0
    %2113 = vmatpush.bf16.msra.mxu0 %v1539
    %2114 = vmatpush.bf16.msra.mxu0 %v1527
    %2115 = vmatpush.bf16.msra.mxu0 %v1515
    %2116 = vmatpush.bf16.msra.mxu0 %v1503
    %2117 = vmatpush.bf16.msra.mxu0 %v1491
    %2118 = vmatpush.bf16.msra.mxu0 %v1479
    %2119 = vmatpush.bf16.msra.mxu0 %v1467
    %2120 = vmatpush.bf16.msra.mxu0 %v1455
    %2121 = vmatmul.bf16.gmra.mxu0 %v76
    %v2122 = vpop.f32.mrf.mxu0
    %v2123 = vadd.f32 %v2109, %v2122
    %v2124 = vpop.f32.mrf.mxu0
    %v2125 = vadd.f32 %v2111, %v2124
    %2126 = vdwg.mxu0
    %2127 = vmatpush.bf16.msra.mxu0 %v1348
    %2128 = vmatpush.bf16.msra.mxu0 %v1336
    %2129 = vmatpush.bf16.msra.mxu0 %v1324
    %2130 = vmatpush.bf16.msra.mxu0 %v1312
    %2131 = vmatpush.bf16.msra.mxu0 %v1300
    %2132 = vmatpush.bf16.msra.mxu0 %v1288
    %2133 = vmatpush.bf16.msra.mxu0 %v1276
    %2134 = vmatpush.bf16.msra.mxu0 %v1264
    %2135 = vmatmul.bf16.gmra.mxu0 %v74
    %v2136 = vpop.f32.mrf.mxu0
    %v2137 = vadd.f32 %v376, %v2136
    %v2138 = vpop.f32.mrf.mxu0
    %v2139 = vadd.f32 %v376, %v2138
    %2140 = vdwg.mxu0
    %2141 = vmatpush.bf16.msra.mxu0 %v1444
    %2142 = vmatpush.bf16.msra.mxu0 %v1432
    %2143 = vmatpush.bf16.msra.mxu0 %v1420
    %2144 = vmatpush.bf16.msra.mxu0 %v1408
    %2145 = vmatpush.bf16.msra.mxu0 %v1396
    %2146 = vmatpush.bf16.msra.mxu0 %v1384
    %2147 = vmatpush.bf16.msra.mxu0 %v1372
    %2148 = vmatpush.bf16.msra.mxu0 %v1360
    %2149 = vmatmul.bf16.gmra.mxu0 %v75
    %v2150 = vpop.f32.mrf.mxu0
    %v2151 = vadd.f32 %v2137, %v2150
    %v2152 = vpop.f32.mrf.mxu0
    %v2153 = vadd.f32 %v2139, %v2152
    %2154 = vdwg.mxu0
    %2155 = vmatpush.bf16.msra.mxu0 %v1540
    %2156 = vmatpush.bf16.msra.mxu0 %v1528
    %2157 = vmatpush.bf16.msra.mxu0 %v1516
    %2158 = vmatpush.bf16.msra.mxu0 %v1504
    %2159 = vmatpush.bf16.msra.mxu0 %v1492
    %2160 = vmatpush.bf16.msra.mxu0 %v1480
    %2161 = vmatpush.bf16.msra.mxu0 %v1468
    %2162 = vmatpush.bf16.msra.mxu0 %v1456
    %2163 = vmatmul.bf16.gmra.mxu0 %v76
    %v2164 = vpop.f32.mrf.mxu0
    %v2165 = vadd.f32 %v2151, %v2164
    %v2166 = vpop.f32.mrf.mxu0
    %v2167 = vadd.f32 %v2153, %v2166
    %2168 = vdwg.mxu0
    %2169 = vmatpush.bf16.msra.mxu0 %v1349
    %2170 = vmatpush.bf16.msra.mxu0 %v1337
    %2171 = vmatpush.bf16.msra.mxu0 %v1325
    %2172 = vmatpush.bf16.msra.mxu0 %v1313
    %2173 = vmatpush.bf16.msra.mxu0 %v1301
    %2174 = vmatpush.bf16.msra.mxu0 %v1289
    %2175 = vmatpush.bf16.msra.mxu0 %v1277
    %2176 = vmatpush.bf16.msra.mxu0 %v1265
    %2177 = vmatmul.bf16.gmra.mxu0 %v74
    %v2178 = vpop.f32.mrf.mxu0
    %v2179 = vadd.f32 %v377, %v2178
    %v2180 = vpop.f32.mrf.mxu0
    %v2181 = vadd.f32 %v377, %v2180
    %2182 = vdwg.mxu0
    %2183 = vmatpush.bf16.msra.mxu0 %v1445
    %2184 = vmatpush.bf16.msra.mxu0 %v1433
    %2185 = vmatpush.bf16.msra.mxu0 %v1421
    %2186 = vmatpush.bf16.msra.mxu0 %v1409
    %2187 = vmatpush.bf16.msra.mxu0 %v1397
    %2188 = vmatpush.bf16.msra.mxu0 %v1385
    %2189 = vmatpush.bf16.msra.mxu0 %v1373
    %2190 = vmatpush.bf16.msra.mxu0 %v1361
    %2191 = vmatmul.bf16.gmra.mxu0 %v75
    %v2192 = vpop.f32.mrf.mxu0
    %v2193 = vadd.f32 %v2179, %v2192
    %v2194 = vpop.f32.mrf.mxu0
    %v2195 = vadd.f32 %v2181, %v2194
    %2196 = vdwg.mxu0
    %2197 = vmatpush.bf16.msra.mxu0 %v1541
    %2198 = vmatpush.bf16.msra.mxu0 %v1529
    %2199 = vmatpush.bf16.msra.mxu0 %v1517
    %2200 = vmatpush.bf16.msra.mxu0 %v1505
    %2201 = vmatpush.bf16.msra.mxu0 %v1493
    %2202 = vmatpush.bf16.msra.mxu0 %v1481
    %2203 = vmatpush.bf16.msra.mxu0 %v1469
    %2204 = vmatpush.bf16.msra.mxu0 %v1457
    %2205 = vmatmul.bf16.gmra.mxu0 %v76
    %v2206 = vpop.f32.mrf.mxu0
    %v2207 = vadd.f32 %v2193, %v2206
    %v2208 = vpop.f32.mrf.mxu0
    %v2209 = vadd.f32 %v2195, %v2208
    %2210 = vdwg.mxu0
    %2211 = vmatpush.bf16.msra.mxu0 %v1350
    %2212 = vmatpush.bf16.msra.mxu0 %v1338
    %2213 = vmatpush.bf16.msra.mxu0 %v1326
    %2214 = vmatpush.bf16.msra.mxu0 %v1314
    %2215 = vmatpush.bf16.msra.mxu0 %v1302
    %2216 = vmatpush.bf16.msra.mxu0 %v1290
    %2217 = vmatpush.bf16.msra.mxu0 %v1278
    %2218 = vmatpush.bf16.msra.mxu0 %v1266
    %2219 = vmatmul.bf16.gmra.mxu0 %v74
    %v2220 = vpop.f32.mrf.mxu0
    %v2221 = vadd.f32 %v378, %v2220
    %v2222 = vpop.f32.mrf.mxu0
    %v2223 = vadd.f32 %v378, %v2222
    %2224 = vdwg.mxu0
    %2225 = vmatpush.bf16.msra.mxu0 %v1446
    %2226 = vmatpush.bf16.msra.mxu0 %v1434
    %2227 = vmatpush.bf16.msra.mxu0 %v1422
    %2228 = vmatpush.bf16.msra.mxu0 %v1410
    %2229 = vmatpush.bf16.msra.mxu0 %v1398
    %2230 = vmatpush.bf16.msra.mxu0 %v1386
    %2231 = vmatpush.bf16.msra.mxu0 %v1374
    %2232 = vmatpush.bf16.msra.mxu0 %v1362
    %2233 = vmatmul.bf16.gmra.mxu0 %v75
    %v2234 = vpop.f32.mrf.mxu0
    %v2235 = vadd.f32 %v2221, %v2234
    %v2236 = vpop.f32.mrf.mxu0
    %v2237 = vadd.f32 %v2223, %v2236
    %2238 = vdwg.mxu0
    %2239 = vmatpush.bf16.msra.mxu0 %v1542
    %2240 = vmatpush.bf16.msra.mxu0 %v1530
    %2241 = vmatpush.bf16.msra.mxu0 %v1518
    %2242 = vmatpush.bf16.msra.mxu0 %v1506
    %2243 = vmatpush.bf16.msra.mxu0 %v1494
    %2244 = vmatpush.bf16.msra.mxu0 %v1482
    %2245 = vmatpush.bf16.msra.mxu0 %v1470
    %2246 = vmatpush.bf16.msra.mxu0 %v1458
    %2247 = vmatmul.bf16.gmra.mxu0 %v76
    %v2248 = vpop.f32.mrf.mxu0
    %v2249 = vadd.f32 %v2235, %v2248
    %v2250 = vpop.f32.mrf.mxu0
    %v2251 = vadd.f32 %v2237, %v2250
    %2252 = vdwg.mxu0
    %2253 = vmatpush.bf16.msra.mxu0 %v1351
    %2254 = vmatpush.bf16.msra.mxu0 %v1339
    %2255 = vmatpush.bf16.msra.mxu0 %v1327
    %2256 = vmatpush.bf16.msra.mxu0 %v1315
    %2257 = vmatpush.bf16.msra.mxu0 %v1303
    %2258 = vmatpush.bf16.msra.mxu0 %v1291
    %2259 = vmatpush.bf16.msra.mxu0 %v1279
    %2260 = vmatpush.bf16.msra.mxu0 %v1267
    %2261 = vmatmul.bf16.gmra.mxu0 %v74
    %v2262 = vpop.f32.mrf.mxu0
    %v2263 = vadd.f32 %v379, %v2262
    %v2264 = vpop.f32.mrf.mxu0
    %v2265 = vadd.f32 %v379, %v2264
    %2266 = vdwg.mxu0
    %2267 = vmatpush.bf16.msra.mxu0 %v1447
    %2268 = vmatpush.bf16.msra.mxu0 %v1435
    %2269 = vmatpush.bf16.msra.mxu0 %v1423
    %2270 = vmatpush.bf16.msra.mxu0 %v1411
    %2271 = vmatpush.bf16.msra.mxu0 %v1399
    %2272 = vmatpush.bf16.msra.mxu0 %v1387
    %2273 = vmatpush.bf16.msra.mxu0 %v1375
    %2274 = vmatpush.bf16.msra.mxu0 %v1363
    %2275 = vmatmul.bf16.gmra.mxu0 %v75
    %v2276 = vpop.f32.mrf.mxu0
    %v2277 = vadd.f32 %v2263, %v2276
    %v2278 = vpop.f32.mrf.mxu0
    %v2279 = vadd.f32 %v2265, %v2278
    %2280 = vdwg.mxu0
    %2281 = vmatpush.bf16.msra.mxu0 %v1543
    %2282 = vmatpush.bf16.msra.mxu0 %v1531
    %2283 = vmatpush.bf16.msra.mxu0 %v1519
    %2284 = vmatpush.bf16.msra.mxu0 %v1507
    %2285 = vmatpush.bf16.msra.mxu0 %v1495
    %2286 = vmatpush.bf16.msra.mxu0 %v1483
    %2287 = vmatpush.bf16.msra.mxu0 %v1471
    %2288 = vmatpush.bf16.msra.mxu0 %v1459
    %2289 = vmatmul.bf16.gmra.mxu0 %v76
    %v2290 = vpop.f32.mrf.mxu0
    %v2291 = vadd.f32 %v2277, %v2290
    %v2292 = vpop.f32.mrf.mxu0
    %v2293 = vadd.f32 %v2279, %v2292
    %2294 = vdwg.mxu0
    %2295 = vmatpush.bf16.msra.mxu0 %v1352
    %2296 = vmatpush.bf16.msra.mxu0 %v1340
    %2297 = vmatpush.bf16.msra.mxu0 %v1328
    %2298 = vmatpush.bf16.msra.mxu0 %v1316
    %2299 = vmatpush.bf16.msra.mxu0 %v1304
    %2300 = vmatpush.bf16.msra.mxu0 %v1292
    %2301 = vmatpush.bf16.msra.mxu0 %v1280
    %2302 = vmatpush.bf16.msra.mxu0 %v1268
    %2303 = vmatmul.bf16.gmra.mxu0 %v74
    %v2304 = vpop.f32.mrf.mxu0
    %v2305 = vadd.f32 %v380, %v2304
    %v2306 = vpop.f32.mrf.mxu0
    %v2307 = vadd.f32 %v380, %v2306
    %2308 = vdwg.mxu0
    %2309 = vmatpush.bf16.msra.mxu0 %v1448
    %2310 = vmatpush.bf16.msra.mxu0 %v1436
    %2311 = vmatpush.bf16.msra.mxu0 %v1424
    %2312 = vmatpush.bf16.msra.mxu0 %v1412
    %2313 = vmatpush.bf16.msra.mxu0 %v1400
    %2314 = vmatpush.bf16.msra.mxu0 %v1388
    %2315 = vmatpush.bf16.msra.mxu0 %v1376
    %2316 = vmatpush.bf16.msra.mxu0 %v1364
    %2317 = vmatmul.bf16.gmra.mxu0 %v75
    %v2318 = vpop.f32.mrf.mxu0
    %v2319 = vadd.f32 %v2305, %v2318
    %v2320 = vpop.f32.mrf.mxu0
    %v2321 = vadd.f32 %v2307, %v2320
    %2322 = vdwg.mxu0
    %2323 = vmatpush.bf16.msra.mxu0 %v1544
    %2324 = vmatpush.bf16.msra.mxu0 %v1532
    %2325 = vmatpush.bf16.msra.mxu0 %v1520
    %2326 = vmatpush.bf16.msra.mxu0 %v1508
    %2327 = vmatpush.bf16.msra.mxu0 %v1496
    %2328 = vmatpush.bf16.msra.mxu0 %v1484
    %2329 = vmatpush.bf16.msra.mxu0 %v1472
    %2330 = vmatpush.bf16.msra.mxu0 %v1460
    %2331 = vmatmul.bf16.gmra.mxu0 %v76
    %v2332 = vpop.f32.mrf.mxu0
    %v2333 = vadd.f32 %v2319, %v2332
    %v2334 = vpop.f32.mrf.mxu0
    %v2335 = vadd.f32 %v2321, %v2334
    %2336 = vdwg.mxu0
    %v2337 = vmax.f32 %v1871, 0.0
    %v2338 = vmax.f32 %v1913, 0.0
    %v2339 = vmax.f32 %v1955, 0.0
    %v2340 = vmax.f32 %v1997, 0.0
    %v2341 = vmax.f32 %v2039, 0.0
    %v2342 = vmax.f32 %v2081, 0.0
    %v2343 = vmax.f32 %v2123, 0.0
    %v2344 = vmax.f32 %v2165, 0.0
    %v2345 = vmax.f32 %v2207, 0.0
    %v2346 = vmax.f32 %v2249, 0.0
    %v2347 = vmax.f32 %v2291, 0.0
    %v2348 = vmax.f32 %v2333, 0.0
    %v2349 = vmax.f32 %v1873, 0.0
    %v2350 = vmax.f32 %v1915, 0.0
    %v2351 = vmax.f32 %v1957, 0.0
    %v2352 = vmax.f32 %v1999, 0.0
    %v2353 = vmax.f32 %v2041, 0.0
    %v2354 = vmax.f32 %v2083, 0.0
    %v2355 = vmax.f32 %v2125, 0.0
    %v2356 = vmax.f32 %v2167, 0.0
    %v2357 = vmax.f32 %v2209, 0.0
    %v2358 = vmax.f32 %v2251, 0.0
    %v2359 = vmax.f32 %v2293, 0.0
    %v2360 = vmax.f32 %v2335, 0.0
    %v2361 = vpack.c.bf16 %v2349, %v2337
    %v2362 = vpack.c.bf16 %v2350, %v2338
    %v2363 = vpack.c.bf16 %v2351, %v2339
    %v2364 = vpack.c.bf16 %v2352, %v2340
    %v2365 = vpack.c.bf16 %v2353, %v2341
    %v2366 = vpack.c.bf16 %v2354, %v2342
    %v2367 = vpack.c.bf16 %v2355, %v2343
    %v2368 = vpack.c.bf16 %v2356, %v2344
    %v2369 = vpack.c.bf16 %v2357, %v2345
    %v2370 = vpack.c.bf16 %v2358, %v2346
    %v2371 = vpack.c.bf16 %v2359, %v2347
    %v2372 = vpack.c.bf16 %v2360, %v2348
    %v2373 = vld [vmem:[#allocation7] sm:$0xff]
    %v2374 = vld [vmem:[#allocation7 + $0x8] sm:$0xf]
    %v2375 = vld [vmem:[#allocation7 + $0xc] sm:$0xff]
    %v2376 = vld [vmem:[#allocation7 + $0x14] sm:$0xf]
    %v2377 = vld [vmem:[#allocation7 + $0x18] sm:$0xff]
    %v2378 = vld [vmem:[#allocation7 + $0x20] sm:$0xf]
    %v2379 = vld [vmem:[#allocation7 + $0x24] sm:$0xff]
    %v2380 = vld [vmem:[#allocation7 + $0x2c] sm:$0xf]
    %v2381 = vld [vmem:[#allocation7 + $0x30] sm:$0xff]
    %v2382 = vld [vmem:[#allocation7 + $0x38] sm:$0xf]
    %v2383 = vld [vmem:[#allocation7 + $0x3c] sm:$0xff]
    %v2384 = vld [vmem:[#allocation7 + $0x44] sm:$0xf]
    %v2385 = vld [vmem:[#allocation7 + $0x48] sm:$0xff]
    %v2386 = vld [vmem:[#allocation7 + $0x50] sm:$0xf]
    %v2387 = vld [vmem:[#allocation7 + $0x54] sm:$0xff]
    %v2388 = vld [vmem:[#allocation7 + $0x5c] sm:$0xf]
    %v2389 = vld [vmem:[#allocation7 + $0x60] sm:$0xff]
    %v2390 = vld [vmem:[#allocation7 + $0x68] sm:$0xf]
    %v2391 = vld [vmem:[#allocation7 + $0x6c] sm:$0xff]
    %v2392 = vld [vmem:[#allocation7 + $0x74] sm:$0xf]
    %v2393 = vld [vmem:[#allocation7 + $0x78] sm:$0xff]
    %v2394 = vld [vmem:[#allocation7 + $0x80] sm:$0xf]
    %v2395 = vld [vmem:[#allocation7 + $0x84] sm:$0xff]
    %v2396 = vld [vmem:[#allocation7 + $0x8c] sm:$0xf]
    %v2397 = vld [vmem:[#allocation7 + $0x90] sm:$0xff]
    %v2398 = vld [vmem:[#allocation7 + $0x98] sm:$0xf]
    %v2399 = vld [vmem:[#allocation7 + $0x9c] sm:$0xff]
    %v2400 = vld [vmem:[#allocation7 + $0xa4] sm:$0xf]
    %v2401 = vld [vmem:[#allocation7 + $0xa8] sm:$0xff]
    %v2402 = vld [vmem:[#allocation7 + $0xb0] sm:$0xf]
    %v2403 = vld [vmem:[#allocation7 + $0xb4] sm:$0xff]
    %v2404 = vld [vmem:[#allocation7 + $0xbc] sm:$0xf]
    %v2405 = vld [vmem:[#allocation7 + $0xc0] sm:$0xff]
    %v2406 = vld [vmem:[#allocation7 + $0xc8] sm:$0xf]
    %v2407 = vld [vmem:[#allocation7 + $0xcc] sm:$0xff]
    %v2408 = vld [vmem:[#allocation7 + $0xd4] sm:$0xf]
    %v2409 = vld [vmem:[#allocation7 + $0xd8] sm:$0xff]
    %v2410 = vld [vmem:[#allocation7 + $0xe0] sm:$0xf]
    %v2411 = vld [vmem:[#allocation7 + $0xe4] sm:$0xff]
    %v2412 = vld [vmem:[#allocation7 + $0xec] sm:$0xf]
    %v2413 = vld [vmem:[#allocation7 + $0xf0] sm:$0xff]
    %v2414 = vld [vmem:[#allocation7 + $0xf8] sm:$0xf]
    %v2415 = vld [vmem:[#allocation7 + $0xfc] sm:$0xff]
    %v2416 = vld [vmem:[#allocation7 + $0x104] sm:$0xf]
    %v2417 = vld [vmem:[#allocation7 + $0x108] sm:$0xff]
    %v2418 = vld [vmem:[#allocation7 + $0x110] sm:$0xf]
    %v2419 = vld [vmem:[#allocation7 + $0x114] sm:$0xff]
    %v2420 = vld [vmem:[#allocation7 + $0x11c] sm:$0xf]
    %v2421 = vld [vmem:[#allocation7 + $0x120] sm:$0xff]
    %v2422 = vld [vmem:[#allocation7 + $0x128] sm:$0xf]
    %v2423 = vld [vmem:[#allocation7 + $0x12c] sm:$0xff]
    %v2424 = vld [vmem:[#allocation7 + $0x134] sm:$0xf]
    %v2425 = vld [vmem:[#allocation7 + $0x138] sm:$0xff]
    %v2426 = vld [vmem:[#allocation7 + $0x140] sm:$0xf]
    %v2427 = vld [vmem:[#allocation7 + $0x144] sm:$0xff]
    %v2428 = vld [vmem:[#allocation7 + $0x14c] sm:$0xf]
    %v2429 = vld [vmem:[#allocation7 + $0x150] sm:$0xff]
    %v2430 = vld [vmem:[#allocation7 + $0x158] sm:$0xf]
    %v2431 = vld [vmem:[#allocation7 + $0x15c] sm:$0xff]
    %v2432 = vld [vmem:[#allocation7 + $0x164] sm:$0xf]
    %v2433 = vld [vmem:[#allocation7 + $0x168] sm:$0xff]
    %v2434 = vld [vmem:[#allocation7 + $0x170] sm:$0xf]
    %v2435 = vld [vmem:[#allocation7 + $0x174] sm:$0xff]
    %v2436 = vld [vmem:[#allocation7 + $0x17c] sm:$0xf]
    %v2437 = vld [vmem:[#allocation7 + $0x180] sm:$0xff]
    %v2438 = vld [vmem:[#allocation7 + $0x188] sm:$0xf]
    %v2439 = vld [vmem:[#allocation7 + $0x18c] sm:$0xff]
    %v2440 = vld [vmem:[#allocation7 + $0x194] sm:$0xf]
    %v2441 = vld [vmem:[#allocation7 + $0x198] sm:$0xff]
    %v2442 = vld [vmem:[#allocation7 + $0x1a0] sm:$0xf]
    %v2443 = vld [vmem:[#allocation7 + $0x1a4] sm:$0xff]
    %v2444 = vld [vmem:[#allocation7 + $0x1ac] sm:$0xf]
    %v2445 = vld [vmem:[#allocation7 + $0x1b0] sm:$0xff]
    %v2446 = vld [vmem:[#allocation7 + $0x1b8] sm:$0xf]
    %v2447 = vld [vmem:[#allocation7 + $0x1bc] sm:$0xff]
    %v2448 = vld [vmem:[#allocation7 + $0x1c4] sm:$0xf]
    %v2449 = vld [vmem:[#allocation7 + $0x1c8] sm:$0xff]
    %v2450 = vld [vmem:[#allocation7 + $0x1d0] sm:$0xf]
    %v2451 = vld [vmem:[#allocation7 + $0x1d4] sm:$0xff]
    %v2452 = vld [vmem:[#allocation7 + $0x1dc] sm:$0xf]
    %v2453 = vld [vmem:[#allocation7 + $0x1e0] sm:$0xff]
    %v2454 = vld [vmem:[#allocation7 + $0x1e8] sm:$0xf]
    %v2455 = vld [vmem:[#allocation7 + $0x1ec] sm:$0xff]
    %v2456 = vld [vmem:[#allocation7 + $0x1f4] sm:$0xf]
    %v2457 = vld [vmem:[#allocation7 + $0x1f8] sm:$0xff]
    %v2458 = vld [vmem:[#allocation7 + $0x200] sm:$0xf]
    %v2459 = vld [vmem:[#allocation7 + $0x204] sm:$0xff]
    %v2460 = vld [vmem:[#allocation7 + $0x20c] sm:$0xf]
    %v2461 = vld [vmem:[#allocation7 + $0x210] sm:$0xff]
    %v2462 = vld [vmem:[#allocation7 + $0x218] sm:$0xf]
    %v2463 = vld [vmem:[#allocation7 + $0x21c] sm:$0xff]
    %v2464 = vld [vmem:[#allocation7 + $0x224] sm:$0xf]
    %v2465 = vld [vmem:[#allocation7 + $0x228] sm:$0xff]
    %v2466 = vld [vmem:[#allocation7 + $0x230] sm:$0xf]
    %v2467 = vld [vmem:[#allocation7 + $0x234] sm:$0xff]
    %v2468 = vld [vmem:[#allocation7 + $0x23c] sm:$0xf]
    %v2469 = vld [vmem:[#allocation7 + $0x240] sm:$0xff]
    %v2470 = vld [vmem:[#allocation7 + $0x248] sm:$0xf]
    %v2471 = vld [vmem:[#allocation7 + $0x24c] sm:$0xff]
    %v2472 = vld [vmem:[#allocation7 + $0x254] sm:$0xf]
    %v2473 = vld [vmem:[#allocation7 + $0x258] sm:$0xff]
    %v2474 = vld [vmem:[#allocation7 + $0x260] sm:$0xf]
    %v2475 = vld [vmem:[#allocation7 + $0x264] sm:$0xff]
    %v2476 = vld [vmem:[#allocation7 + $0x26c] sm:$0xf]
    %v2477 = vld [vmem:[#allocation7 + $0x270] sm:$0xff]
    %v2478 = vld [vmem:[#allocation7 + $0x278] sm:$0xf]
    %v2479 = vld [vmem:[#allocation7 + $0x27c] sm:$0xff]
    %v2480 = vld [vmem:[#allocation7 + $0x284] sm:$0xf]
    %v2481 = vld [vmem:[#allocation7 + $0x288] sm:$0xff]
    %v2482 = vld [vmem:[#allocation7 + $0x290] sm:$0xf]
    %v2483 = vld [vmem:[#allocation7 + $0x294] sm:$0xff]
    %v2484 = vld [vmem:[#allocation7 + $0x29c] sm:$0xf]
    %v2485 = vld [vmem:[#allocation7 + $0x2a0] sm:$0xff]
    %v2486 = vld [vmem:[#allocation7 + $0x2a8] sm:$0xf]
    %v2487 = vld [vmem:[#allocation7 + $0x2ac] sm:$0xff]
    %v2488 = vld [vmem:[#allocation7 + $0x2b4] sm:$0xf]
    %v2489 = vld [vmem:[#allocation7 + $0x2b8] sm:$0xff]
    %v2490 = vld [vmem:[#allocation7 + $0x2c0] sm:$0xf]
    %v2491 = vld [vmem:[#allocation7 + $0x2c4] sm:$0xff]
    %v2492 = vld [vmem:[#allocation7 + $0x2cc] sm:$0xf]
    %v2493 = vld [vmem:[#allocation7 + $0x2d0] sm:$0xff]
    %v2494 = vld [vmem:[#allocation7 + $0x2d8] sm:$0xf]
    %v2495 = vld [vmem:[#allocation7 + $0x2dc] sm:$0xff]
    %v2496 = vld [vmem:[#allocation7 + $0x2e4] sm:$0xf]
    %v2497 = vld [vmem:[#allocation7 + $0x2e8] sm:$0xff]
    %v2498 = vld [vmem:[#allocation7 + $0x2f0] sm:$0xf]
    %v2499 = vld [vmem:[#allocation7 + $0x2f4] sm:$0xff]
    %v2500 = vld [vmem:[#allocation7 + $0x2fc] sm:$0xf]
    %v2501 = vld [vmem:[#allocation7 + $0x300] sm:$0xff]
    %v2502 = vld [vmem:[#allocation7 + $0x308] sm:$0xf]
    %v2503 = vld [vmem:[#allocation7 + $0x30c] sm:$0xff]
    %v2504 = vld [vmem:[#allocation7 + $0x314] sm:$0xf]
    %v2505 = vld [vmem:[#allocation7 + $0x318] sm:$0xff]
    %v2506 = vld [vmem:[#allocation7 + $0x320] sm:$0xf]
    %v2507 = vld [vmem:[#allocation7 + $0x324] sm:$0xff]
    %v2508 = vld [vmem:[#allocation7 + $0x32c] sm:$0xf]
    %v2509 = vld [vmem:[#allocation7 + $0x330] sm:$0xff]
    %v2510 = vld [vmem:[#allocation7 + $0x338] sm:$0xf]
    %v2511 = vld [vmem:[#allocation7 + $0x33c] sm:$0xff]
    %v2512 = vld [vmem:[#allocation7 + $0x344] sm:$0xf]
    %v2513 = vld [vmem:[#allocation7 + $0x348] sm:$0xff]
    %v2514 = vld [vmem:[#allocation7 + $0x350] sm:$0xf]
    %v2515 = vld [vmem:[#allocation7 + $0x354] sm:$0xff]
    %v2516 = vld [vmem:[#allocation7 + $0x35c] sm:$0xf]
    %v2517 = vld [vmem:[#allocation7 + $0x360] sm:$0xff]
    %v2518 = vld [vmem:[#allocation7 + $0x368] sm:$0xf]
    %v2519 = vld [vmem:[#allocation7 + $0x36c] sm:$0xff]
    %v2520 = vld [vmem:[#allocation7 + $0x374] sm:$0xf]
    %v2521 = vld [vmem:[#allocation7 + $0x378] sm:$0xff]
    %v2522 = vld [vmem:[#allocation7 + $0x380] sm:$0xf]
    %v2523 = vld [vmem:[#allocation7 + $0x384] sm:$0xff]
    %v2524 = vld [vmem:[#allocation7 + $0x38c] sm:$0xf]
    %v2525 = vld [vmem:[#allocation7 + $0x390] sm:$0xff]
    %v2526 = vld [vmem:[#allocation7 + $0x398] sm:$0xf]
    %v2527 = vld [vmem:[#allocation7 + $0x39c] sm:$0xff]
    %v2528 = vld [vmem:[#allocation7 + $0x3a4] sm:$0xf]
    %v2529 = vld [vmem:[#allocation7 + $0x3a8] sm:$0xff]
    %v2530 = vld [vmem:[#allocation7 + $0x3b0] sm:$0xf]
    %v2531 = vld [vmem:[#allocation7 + $0x3b4] sm:$0xff]
    %v2532 = vld [vmem:[#allocation7 + $0x3bc] sm:$0xf]
    %v2533 = vld [vmem:[#allocation7 + $0x3c0] sm:$0xff]
    %v2534 = vld [vmem:[#allocation7 + $0x3c8] sm:$0xf]
    %v2535 = vld [vmem:[#allocation7 + $0x3cc] sm:$0xff]
    %v2536 = vld [vmem:[#allocation7 + $0x3d4] sm:$0xf]
    %v2537 = vld [vmem:[#allocation7 + $0x3d8] sm:$0xff]
    %v2538 = vld [vmem:[#allocation7 + $0x3e0] sm:$0xf]
    %v2539 = vld [vmem:[#allocation7 + $0x3e4] sm:$0xff]
    %v2540 = vld [vmem:[#allocation7 + $0x3ec] sm:$0xf]
    %v2541 = vld [vmem:[#allocation7 + $0x3f0] sm:$0xff]
    %v2542 = vld [vmem:[#allocation7 + $0x3f8] sm:$0xf]
    %v2543 = vld [vmem:[#allocation7 + $0x3fc] sm:$0xff]
    %v2544 = vld [vmem:[#allocation7 + $0x404] sm:$0xf]
    %v2545 = vld [vmem:[#allocation7 + $0x408] sm:$0xff]
    %v2546 = vld [vmem:[#allocation7 + $0x410] sm:$0xf]
    %v2547 = vld [vmem:[#allocation7 + $0x414] sm:$0xff]
    %v2548 = vld [vmem:[#allocation7 + $0x41c] sm:$0xf]
    %v2549 = vld [vmem:[#allocation7 + $0x420] sm:$0xff]
    %v2550 = vld [vmem:[#allocation7 + $0x428] sm:$0xf]
    %v2551 = vld [vmem:[#allocation7 + $0x42c] sm:$0xff]
    %v2552 = vld [vmem:[#allocation7 + $0x434] sm:$0xf]
    %v2553 = vld [vmem:[#allocation7 + $0x438] sm:$0xff]
    %v2554 = vld [vmem:[#allocation7 + $0x440] sm:$0xf]
    %v2555 = vld [vmem:[#allocation7 + $0x444] sm:$0xff]
    %v2556 = vld [vmem:[#allocation7 + $0x44c] sm:$0xf]
    %v2557 = vld [vmem:[#allocation7 + $0x450] sm:$0xff]
    %v2558 = vld [vmem:[#allocation7 + $0x458] sm:$0xf]
    %v2559 = vld [vmem:[#allocation7 + $0x45c] sm:$0xff]
    %v2560 = vld [vmem:[#allocation7 + $0x464] sm:$0xf]
    %v2561 = vld [vmem:[#allocation7 + $0x468] sm:$0xff]
    %v2562 = vld [vmem:[#allocation7 + $0x470] sm:$0xf]
    %v2563 = vld [vmem:[#allocation7 + $0x474] sm:$0xff]
    %v2564 = vld [vmem:[#allocation7 + $0x47c] sm:$0xf]
    %v2565 = vld [vmem:[#allocation7 + $0x480] sm:$0xff]
    %v2566 = vld [vmem:[#allocation7 + $0x488] sm:$0xf]
    %v2567 = vld [vmem:[#allocation7 + $0x48c] sm:$0xff]
    %v2568 = vld [vmem:[#allocation7 + $0x494] sm:$0xf]
    %v2569 = vld [vmem:[#allocation7 + $0x498] sm:$0xff]
    %v2570 = vld [vmem:[#allocation7 + $0x4a0] sm:$0xf]
    %v2571 = vld [vmem:[#allocation7 + $0x4a4] sm:$0xff]
    %v2572 = vld [vmem:[#allocation7 + $0x4ac] sm:$0xf]
    %v2573 = vld [vmem:[#allocation7 + $0x4b0] sm:$0xff]
    %v2574 = vld [vmem:[#allocation7 + $0x4b8] sm:$0xf]
    %v2575 = vld [vmem:[#allocation7 + $0x4bc] sm:$0xff]
    %v2576 = vld [vmem:[#allocation7 + $0x4c4] sm:$0xf]
    %v2577 = vld [vmem:[#allocation7 + $0x4c8] sm:$0xff]
    %v2578 = vld [vmem:[#allocation7 + $0x4d0] sm:$0xf]
    %v2579 = vld [vmem:[#allocation7 + $0x4d4] sm:$0xff]
    %v2580 = vld [vmem:[#allocation7 + $0x4dc] sm:$0xf]
    %v2581 = vld [vmem:[#allocation7 + $0x4e0] sm:$0xff]
    %v2582 = vld [vmem:[#allocation7 + $0x4e8] sm:$0xf]
    %v2583 = vld [vmem:[#allocation7 + $0x4ec] sm:$0xff]
    %v2584 = vld [vmem:[#allocation7 + $0x4f4] sm:$0xf]
    %v2585 = vld [vmem:[#allocation7 + $0x4f8] sm:$0xff]
    %v2586 = vld [vmem:[#allocation7 + $0x500] sm:$0xf]
    %v2587 = vld [vmem:[#allocation7 + $0x504] sm:$0xff]
    %v2588 = vld [vmem:[#allocation7 + $0x50c] sm:$0xf]
    %v2589 = vld [vmem:[#allocation7 + $0x510] sm:$0xff]
    %v2590 = vld [vmem:[#allocation7 + $0x518] sm:$0xf]
    %v2591 = vld [vmem:[#allocation7 + $0x51c] sm:$0xff]
    %v2592 = vld [vmem:[#allocation7 + $0x524] sm:$0xf]
    %v2593 = vld [vmem:[#allocation7 + $0x528] sm:$0xff]
    %v2594 = vld [vmem:[#allocation7 + $0x530] sm:$0xf]
    %v2595 = vld [vmem:[#allocation7 + $0x534] sm:$0xff]
    %v2596 = vld [vmem:[#allocation7 + $0x53c] sm:$0xf]
    %v2597 = vld [vmem:[#allocation7 + $0x540] sm:$0xff]
    %v2598 = vld [vmem:[#allocation7 + $0x548] sm:$0xf]
    %v2599 = vld [vmem:[#allocation7 + $0x54c] sm:$0xff]
    %v2600 = vld [vmem:[#allocation7 + $0x554] sm:$0xf]
    %v2601 = vld [vmem:[#allocation7 + $0x558] sm:$0xff]
    %v2602 = vld [vmem:[#allocation7 + $0x560] sm:$0xf]
    %v2603 = vld [vmem:[#allocation7 + $0x564] sm:$0xff]
    %v2604 = vld [vmem:[#allocation7 + $0x56c] sm:$0xf]
    %v2605 = vld [vmem:[#allocation7 + $0x570] sm:$0xff]
    %v2606 = vld [vmem:[#allocation7 + $0x578] sm:$0xf]
    %v2607 = vld [vmem:[#allocation7 + $0x57c] sm:$0xff]
    %v2608 = vld [vmem:[#allocation7 + $0x584] sm:$0xf]
    %v2609 = vld [vmem:[#allocation7 + $0x588] sm:$0xff]
    %v2610 = vld [vmem:[#allocation7 + $0x590] sm:$0xf]
    %v2611 = vld [vmem:[#allocation7 + $0x594] sm:$0xff]
    %v2612 = vld [vmem:[#allocation7 + $0x59c] sm:$0xf]
    %v2613 = vld [vmem:[#allocation7 + $0x5a0] sm:$0xff]
    %v2614 = vld [vmem:[#allocation7 + $0x5a8] sm:$0xf]
    %v2615 = vld [vmem:[#allocation7 + $0x5ac] sm:$0xff]
    %v2616 = vld [vmem:[#allocation7 + $0x5b4] sm:$0xf]
    %v2617 = vld [vmem:[#allocation7 + $0x5b8] sm:$0xff]
    %v2618 = vld [vmem:[#allocation7 + $0x5c0] sm:$0xf]
    %v2619 = vld [vmem:[#allocation7 + $0x5c4] sm:$0xff]
    %v2620 = vld [vmem:[#allocation7 + $0x5cc] sm:$0xf]
    %v2621 = vld [vmem:[#allocation7 + $0x5d0] sm:$0xff]
    %v2622 = vld [vmem:[#allocation7 + $0x5d8] sm:$0xf]
    %v2623 = vld [vmem:[#allocation7 + $0x5dc] sm:$0xff]
    %v2624 = vld [vmem:[#allocation7 + $0x5e4] sm:$0xf]
    %v2625 = vld [vmem:[#allocation7 + $0x5e8] sm:$0xff]
    %v2626 = vld [vmem:[#allocation7 + $0x5f0] sm:$0xf]
    %v2627 = vld [vmem:[#allocation7 + $0x5f4] sm:$0xff]
    %v2628 = vld [vmem:[#allocation7 + $0x5fc] sm:$0xf]
    %v2629 = vld [vmem:[#allocation7 + $0x600] sm:$0xff]
    %v2630 = vld [vmem:[#allocation7 + $0x608] sm:$0xf]
    %v2631 = vld [vmem:[#allocation7 + $0x60c] sm:$0xff]
    %v2632 = vld [vmem:[#allocation7 + $0x614] sm:$0xf]
    %v2633 = vld [vmem:[#allocation7 + $0x618] sm:$0xff]
    %v2634 = vld [vmem:[#allocation7 + $0x620] sm:$0xf]
    %v2635 = vld [vmem:[#allocation7 + $0x624] sm:$0xff]
    %v2636 = vld [vmem:[#allocation7 + $0x62c] sm:$0xf]
    %v2637 = vld [vmem:[#allocation7 + $0x630] sm:$0xff]
    %v2638 = vld [vmem:[#allocation7 + $0x638] sm:$0xf]
    %v2639 = vld [vmem:[#allocation7 + $0x63c] sm:$0xff]
    %v2640 = vld [vmem:[#allocation7 + $0x644] sm:$0xf]
    %v2641 = vld [vmem:[#allocation7 + $0x648] sm:$0xff]
    %v2642 = vld [vmem:[#allocation7 + $0x650] sm:$0xf]
    %v2643 = vld [vmem:[#allocation7 + $0x654] sm:$0xff]
    %v2644 = vld [vmem:[#allocation7 + $0x65c] sm:$0xf]
    %v2645 = vld [vmem:[#allocation7 + $0x660] sm:$0xff]
    %v2646 = vld [vmem:[#allocation7 + $0x668] sm:$0xf]
    %v2647 = vld [vmem:[#allocation7 + $0x66c] sm:$0xff]
    %v2648 = vld [vmem:[#allocation7 + $0x674] sm:$0xf]
    %v2649 = vld [vmem:[#allocation7 + $0x678] sm:$0xff]
    %v2650 = vld [vmem:[#allocation7 + $0x680] sm:$0xf]
    %v2651 = vld [vmem:[#allocation7 + $0x684] sm:$0xff]
    %v2652 = vld [vmem:[#allocation7 + $0x68c] sm:$0xf]
    %v2653 = vld [vmem:[#allocation7 + $0x690] sm:$0xff]
    %v2654 = vld [vmem:[#allocation7 + $0x698] sm:$0xf]
    %v2655 = vld [vmem:[#allocation7 + $0x69c] sm:$0xff]
    %v2656 = vld [vmem:[#allocation7 + $0x6a4] sm:$0xf]
    %v2657 = vld [vmem:[#allocation7 + $0x6a8] sm:$0xff]
    %v2658 = vld [vmem:[#allocation7 + $0x6b0] sm:$0xf]
    %v2659 = vld [vmem:[#allocation7 + $0x6b4] sm:$0xff]
    %v2660 = vld [vmem:[#allocation7 + $0x6bc] sm:$0xf]
    %v2661 = vld [vmem:[#allocation7 + $0x6c0] sm:$0xff]
    %v2662 = vld [vmem:[#allocation7 + $0x6c8] sm:$0xf]
    %v2663 = vld [vmem:[#allocation7 + $0x6cc] sm:$0xff]
    %v2664 = vld [vmem:[#allocation7 + $0x6d4] sm:$0xf]
    %v2665 = vld [vmem:[#allocation7 + $0x6d8] sm:$0xff]
    %v2666 = vld [vmem:[#allocation7 + $0x6e0] sm:$0xf]
    %v2667 = vld [vmem:[#allocation7 + $0x6e4] sm:$0xff]
    %v2668 = vld [vmem:[#allocation7 + $0x6ec] sm:$0xf]
    %v2669 = vld [vmem:[#allocation7 + $0x6f0] sm:$0xff]
    %v2670 = vld [vmem:[#allocation7 + $0x6f8] sm:$0xf]
    %v2671 = vld [vmem:[#allocation7 + $0x6fc] sm:$0xff]
    %v2672 = vld [vmem:[#allocation7 + $0x704] sm:$0xf]
    %v2673 = vld [vmem:[#allocation7 + $0x708] sm:$0xff]
    %v2674 = vld [vmem:[#allocation7 + $0x710] sm:$0xf]
    %v2675 = vld [vmem:[#allocation7 + $0x714] sm:$0xff]
    %v2676 = vld [vmem:[#allocation7 + $0x71c] sm:$0xf]
    %v2677 = vld [vmem:[#allocation7 + $0x720] sm:$0xff]
    %v2678 = vld [vmem:[#allocation7 + $0x728] sm:$0xf]
    %v2679 = vld [vmem:[#allocation7 + $0x72c] sm:$0xff]
    %v2680 = vld [vmem:[#allocation7 + $0x734] sm:$0xf]
    %v2681 = vld [vmem:[#allocation7 + $0x738] sm:$0xff]
    %v2682 = vld [vmem:[#allocation7 + $0x740] sm:$0xf]
    %v2683 = vld [vmem:[#allocation7 + $0x744] sm:$0xff]
    %v2684 = vld [vmem:[#allocation7 + $0x74c] sm:$0xf]
    %v2685 = vld [vmem:[#allocation7 + $0x750] sm:$0xff]
    %v2686 = vld [vmem:[#allocation7 + $0x758] sm:$0xf]
    %v2687 = vld [vmem:[#allocation7 + $0x75c] sm:$0xff]
    %v2688 = vld [vmem:[#allocation7 + $0x764] sm:$0xf]
    %v2689 = vld [vmem:[#allocation7 + $0x768] sm:$0xff]
    %v2690 = vld [vmem:[#allocation7 + $0x770] sm:$0xf]
    %v2691 = vld [vmem:[#allocation7 + $0x774] sm:$0xff]
    %v2692 = vld [vmem:[#allocation7 + $0x77c] sm:$0xf]
    %v2693 = vld [vmem:[#allocation7 + $0x780] sm:$0xff]
    %v2694 = vld [vmem:[#allocation7 + $0x788] sm:$0xf]
    %v2695 = vld [vmem:[#allocation7 + $0x78c] sm:$0xff]
    %v2696 = vld [vmem:[#allocation7 + $0x794] sm:$0xf]
    %v2697 = vld [vmem:[#allocation7 + $0x798] sm:$0xff]
    %v2698 = vld [vmem:[#allocation7 + $0x7a0] sm:$0xf]
    %v2699 = vld [vmem:[#allocation7 + $0x7a4] sm:$0xff]
    %v2700 = vld [vmem:[#allocation7 + $0x7ac] sm:$0xf]
    %v2701 = vld [vmem:[#allocation7 + $0x7b0] sm:$0xff]
    %v2702 = vld [vmem:[#allocation7 + $0x7b8] sm:$0xf]
    %v2703 = vld [vmem:[#allocation7 + $0x7bc] sm:$0xff]
    %v2704 = vld [vmem:[#allocation7 + $0x7c4] sm:$0xf]
    %v2705 = vld [vmem:[#allocation7 + $0x7c8] sm:$0xff]
    %v2706 = vld [vmem:[#allocation7 + $0x7d0] sm:$0xf]
    %v2707 = vld [vmem:[#allocation7 + $0x7d4] sm:$0xff]
    %v2708 = vld [vmem:[#allocation7 + $0x7dc] sm:$0xf]
    %v2709 = vld [vmem:[#allocation7 + $0x7e0] sm:$0xff]
    %v2710 = vld [vmem:[#allocation7 + $0x7e8] sm:$0xf]
    %v2711 = vld [vmem:[#allocation7 + $0x7ec] sm:$0xff]
    %v2712 = vld [vmem:[#allocation7 + $0x7f4] sm:$0xf]
    %v2713 = vld [vmem:[#allocation7 + $0x7f8] sm:$0xff]
    %v2714 = vld [vmem:[#allocation7 + $0x800] sm:$0xf]
    %v2715 = vld [vmem:[#allocation7 + $0x804] sm:$0xff]
    %v2716 = vld [vmem:[#allocation7 + $0x80c] sm:$0xf]
    %v2717 = vld [vmem:[#allocation7 + $0x810] sm:$0xff]
    %v2718 = vld [vmem:[#allocation7 + $0x818] sm:$0xf]
    %v2719 = vld [vmem:[#allocation7 + $0x81c] sm:$0xff]
    %v2720 = vld [vmem:[#allocation7 + $0x824] sm:$0xf]
    %v2721 = vld [vmem:[#allocation7 + $0x828] sm:$0xff]
    %v2722 = vld [vmem:[#allocation7 + $0x830] sm:$0xf]
    %v2723 = vld [vmem:[#allocation7 + $0x834] sm:$0xff]
    %v2724 = vld [vmem:[#allocation7 + $0x83c] sm:$0xf]
    %v2725 = vld [vmem:[#allocation7 + $0x840] sm:$0xff]
    %v2726 = vld [vmem:[#allocation7 + $0x848] sm:$0xf]
    %v2727 = vld [vmem:[#allocation7 + $0x84c] sm:$0xff]
    %v2728 = vld [vmem:[#allocation7 + $0x854] sm:$0xf]
    %v2729 = vld [vmem:[#allocation7 + $0x858] sm:$0xff]
    %v2730 = vld [vmem:[#allocation7 + $0x860] sm:$0xf]
    %v2731 = vld [vmem:[#allocation7 + $0x864] sm:$0xff]
    %v2732 = vld [vmem:[#allocation7 + $0x86c] sm:$0xf]
    %v2733 = vld [vmem:[#allocation7 + $0x870] sm:$0xff]
    %v2734 = vld [vmem:[#allocation7 + $0x878] sm:$0xf]
    %v2735 = vld [vmem:[#allocation7 + $0x87c] sm:$0xff]
    %v2736 = vld [vmem:[#allocation7 + $0x884] sm:$0xf]
    %v2737 = vld [vmem:[#allocation7 + $0x888] sm:$0xff]
    %v2738 = vld [vmem:[#allocation7 + $0x890] sm:$0xf]
    %v2739 = vld [vmem:[#allocation7 + $0x894] sm:$0xff]
    %v2740 = vld [vmem:[#allocation7 + $0x89c] sm:$0xf]
    %v2741 = vld [vmem:[#allocation7 + $0x8a0] sm:$0xff]
    %v2742 = vld [vmem:[#allocation7 + $0x8a8] sm:$0xf]
    %v2743 = vld [vmem:[#allocation7 + $0x8ac] sm:$0xff]
    %v2744 = vld [vmem:[#allocation7 + $0x8b4] sm:$0xf]
    %v2745 = vld [vmem:[#allocation7 + $0x8b8] sm:$0xff]
    %v2746 = vld [vmem:[#allocation7 + $0x8c0] sm:$0xf]
    %v2747 = vld [vmem:[#allocation7 + $0x8c4] sm:$0xff]
    %v2748 = vld [vmem:[#allocation7 + $0x8cc] sm:$0xf]
    %v2749 = vld [vmem:[#allocation7 + $0x8d0] sm:$0xff]
    %v2750 = vld [vmem:[#allocation7 + $0x8d8] sm:$0xf]
    %v2751 = vld [vmem:[#allocation7 + $0x8dc] sm:$0xff]
    %v2752 = vld [vmem:[#allocation7 + $0x8e4] sm:$0xf]
    %v2753 = vld [vmem:[#allocation7 + $0x8e8] sm:$0xff]
    %v2754 = vld [vmem:[#allocation7 + $0x8f0] sm:$0xf]
    %v2755 = vld [vmem:[#allocation7 + $0x8f4] sm:$0xff]
    %v2756 = vld [vmem:[#allocation7 + $0x8fc] sm:$0xf]
    %v2757 = vld [vmem:[%s4] sm:$0x7]
    %v2759 = vperm.slane %v2757, 0
    %v2760 = vperm.slane %v2757, 1
    %v2761 = vperm.slane %v2757, 2
    %v3149 = vunpack.c.l.b16 %v2373
    %v3150 = vunpack.c.h.b16 %v2373
    %v3151 = vunpack.c.l.b16 %v2374
    %v3152 = vunpack.c.l.b16 %v2375
    %v3153 = vunpack.c.h.b16 %v2375
    %v3154 = vunpack.c.l.b16 %v2376
    %v3155 = vunpack.c.l.b16 %v2377
    %v3156 = vunpack.c.h.b16 %v2377
    %v3157 = vunpack.c.l.b16 %v2378
    %v3158 = vunpack.c.l.b16 %v2379
    %v3159 = vunpack.c.h.b16 %v2379
    %v3160 = vunpack.c.l.b16 %v2380
    %v3161 = vunpack.c.l.b16 %v2381
    %v3162 = vunpack.c.h.b16 %v2381
    %v3163 = vunpack.c.l.b16 %v2382
    %v3164 = vunpack.c.l.b16 %v2383
    %v3165 = vunpack.c.h.b16 %v2383
    %v3166 = vunpack.c.l.b16 %v2384
    %v3167 = vunpack.c.l.b16 %v2385
    %v3168 = vunpack.c.h.b16 %v2385
    %v3169 = vunpack.c.l.b16 %v2386
    %v3170 = vunpack.c.l.b16 %v2387
    %v3171 = vunpack.c.h.b16 %v2387
    %v3172 = vunpack.c.l.b16 %v2388
    %v3173 = vunpack.c.l.b16 %v2389
    %v3174 = vunpack.c.h.b16 %v2389
    %v3175 = vunpack.c.l.b16 %v2390
    %v3176 = vunpack.c.l.b16 %v2391
    %v3177 = vunpack.c.h.b16 %v2391
    %v3178 = vunpack.c.l.b16 %v2392
    %v3179 = vunpack.c.l.b16 %v2393
    %v3180 = vunpack.c.h.b16 %v2393
    %v3181 = vunpack.c.l.b16 %v2394
    %v3182 = vunpack.c.l.b16 %v2395
    %v3183 = vunpack.c.h.b16 %v2395
    %v3184 = vunpack.c.l.b16 %v2396
    %v3185 = vunpack.c.l.b16 %v2397
    %v3186 = vunpack.c.h.b16 %v2397
    %v3187 = vunpack.c.l.b16 %v2398
    %v3188 = vunpack.c.l.b16 %v2399
    %v3189 = vunpack.c.h.b16 %v2399
    %v3190 = vunpack.c.l.b16 %v2400
    %v3191 = vunpack.c.l.b16 %v2401
    %v3192 = vunpack.c.h.b16 %v2401
    %v3193 = vunpack.c.l.b16 %v2402
    %v3194 = vunpack.c.l.b16 %v2403
    %v3195 = vunpack.c.h.b16 %v2403
    %v3196 = vunpack.c.l.b16 %v2404
    %v3197 = vunpack.c.l.b16 %v2405
    %v3198 = vunpack.c.h.b16 %v2405
    %v3199 = vunpack.c.l.b16 %v2406
    %v3200 = vunpack.c.l.b16 %v2407
    %v3201 = vunpack.c.h.b16 %v2407
    %v3202 = vunpack.c.l.b16 %v2408
    %v3203 = vunpack.c.l.b16 %v2409
    %v3204 = vunpack.c.h.b16 %v2409
    %v3205 = vunpack.c.l.b16 %v2410
    %v3206 = vunpack.c.l.b16 %v2411
    %v3207 = vunpack.c.h.b16 %v2411
    %v3208 = vunpack.c.l.b16 %v2412
    %v3209 = vunpack.c.l.b16 %v2413
    %v3210 = vunpack.c.h.b16 %v2413
    %v3211 = vunpack.c.l.b16 %v2414
    %v3212 = vunpack.c.l.b16 %v2415
    %v3213 = vunpack.c.h.b16 %v2415
    %v3214 = vunpack.c.l.b16 %v2416
    %v3215 = vunpack.c.l.b16 %v2417
    %v3216 = vunpack.c.h.b16 %v2417
    %v3217 = vunpack.c.l.b16 %v2418
    %v3218 = vunpack.c.l.b16 %v2419
    %v3219 = vunpack.c.h.b16 %v2419
    %v3220 = vunpack.c.l.b16 %v2420
    %v3221 = vunpack.c.l.b16 %v2421
    %v3222 = vunpack.c.h.b16 %v2421
    %v3223 = vunpack.c.l.b16 %v2422
    %v3224 = vunpack.c.l.b16 %v2423
    %v3225 = vunpack.c.h.b16 %v2423
    %v3226 = vunpack.c.l.b16 %v2424
    %v3227 = vunpack.c.l.b16 %v2425
    %v3228 = vunpack.c.h.b16 %v2425
    %v3229 = vunpack.c.l.b16 %v2426
    %v3230 = vunpack.c.l.b16 %v2427
    %v3231 = vunpack.c.h.b16 %v2427
    %v3232 = vunpack.c.l.b16 %v2428
    %v3233 = vunpack.c.l.b16 %v2429
    %v3234 = vunpack.c.h.b16 %v2429
    %v3235 = vunpack.c.l.b16 %v2430
    %v3236 = vunpack.c.l.b16 %v2431
    %v3237 = vunpack.c.h.b16 %v2431
    %v3238 = vunpack.c.l.b16 %v2432
    %v3239 = vunpack.c.l.b16 %v2433
    %v3240 = vunpack.c.h.b16 %v2433
    %v3241 = vunpack.c.l.b16 %v2434
    %v3242 = vunpack.c.l.b16 %v2435
    %v3243 = vunpack.c.h.b16 %v2435
    %v3244 = vunpack.c.l.b16 %v2436
    %v3245 = vunpack.c.l.b16 %v2437
    %v3246 = vunpack.c.h.b16 %v2437
    %v3247 = vunpack.c.l.b16 %v2438
    %v3248 = vunpack.c.l.b16 %v2439
    %v3249 = vunpack.c.h.b16 %v2439
    %v3250 = vunpack.c.l.b16 %v2440
    %v3251 = vunpack.c.l.b16 %v2441
    %v3252 = vunpack.c.h.b16 %v2441
    %v3253 = vunpack.c.l.b16 %v2442
    %v3254 = vunpack.c.l.b16 %v2443
    %v3255 = vunpack.c.h.b16 %v2443
    %v3256 = vunpack.c.l.b16 %v2444
    %v3257 = vunpack.c.l.b16 %v2445
    %v3258 = vunpack.c.h.b16 %v2445
    %v3259 = vunpack.c.l.b16 %v2446
    %v3260 = vunpack.c.l.b16 %v2447
    %v3261 = vunpack.c.h.b16 %v2447
    %v3262 = vunpack.c.l.b16 %v2448
    %v3263 = vunpack.c.l.b16 %v2449
    %v3264 = vunpack.c.h.b16 %v2449
    %v3265 = vunpack.c.l.b16 %v2450
    %v3266 = vunpack.c.l.b16 %v2451
    %v3267 = vunpack.c.h.b16 %v2451
    %v3268 = vunpack.c.l.b16 %v2452
    %v3269 = vunpack.c.l.b16 %v2453
    %v3270 = vunpack.c.h.b16 %v2453
    %v3271 = vunpack.c.l.b16 %v2454
    %v3272 = vunpack.c.l.b16 %v2455
    %v3273 = vunpack.c.h.b16 %v2455
    %v3274 = vunpack.c.l.b16 %v2456
    %v3275 = vunpack.c.l.b16 %v2457
    %v3276 = vunpack.c.h.b16 %v2457
    %v3277 = vunpack.c.l.b16 %v2458
    %v3278 = vunpack.c.l.b16 %v2459
    %v3279 = vunpack.c.h.b16 %v2459
    %v3280 = vunpack.c.l.b16 %v2460
    %v3281 = vunpack.c.l.b16 %v2461
    %v3282 = vunpack.c.h.b16 %v2461
    %v3283 = vunpack.c.l.b16 %v2462
    %v3284 = vunpack.c.l.b16 %v2463
    %v3285 = vunpack.c.h.b16 %v2463
    %v3286 = vunpack.c.l.b16 %v2464
    %v3287 = vunpack.c.l.b16 %v2465
    %v3288 = vunpack.c.h.b16 %v2465
    %v3289 = vunpack.c.l.b16 %v2466
    %v3290 = vunpack.c.l.b16 %v2467
    %v3291 = vunpack.c.h.b16 %v2467
    %v3292 = vunpack.c.l.b16 %v2468
    %v3293 = vunpack.c.l.b16 %v2469
    %v3294 = vunpack.c.h.b16 %v2469
    %v3295 = vunpack.c.l.b16 %v2470
    %v3296 = vunpack.c.l.b16 %v2471
    %v3297 = vunpack.c.h.b16 %v2471
    %v3298 = vunpack.c.l.b16 %v2472
    %v3299 = vunpack.c.l.b16 %v2473
    %v3300 = vunpack.c.h.b16 %v2473
    %v3301 = vunpack.c.l.b16 %v2474
    %v3302 = vunpack.c.l.b16 %v2475
    %v3303 = vunpack.c.h.b16 %v2475
    %v3304 = vunpack.c.l.b16 %v2476
    %v3305 = vunpack.c.l.b16 %v2477
    %v3306 = vunpack.c.h.b16 %v2477
    %v3307 = vunpack.c.l.b16 %v2478
    %v3308 = vunpack.c.l.b16 %v2479
    %v3309 = vunpack.c.h.b16 %v2479
    %v3310 = vunpack.c.l.b16 %v2480
    %v3311 = vunpack.c.l.b16 %v2481
    %v3312 = vunpack.c.h.b16 %v2481
    %v3313 = vunpack.c.l.b16 %v2482
    %v3314 = vunpack.c.l.b16 %v2483
    %v3315 = vunpack.c.h.b16 %v2483
    %v3316 = vunpack.c.l.b16 %v2484
    %v3317 = vunpack.c.l.b16 %v2485
    %v3318 = vunpack.c.h.b16 %v2485
    %v3319 = vunpack.c.l.b16 %v2486
    %v3320 = vunpack.c.l.b16 %v2487
    %v3321 = vunpack.c.h.b16 %v2487
    %v3322 = vunpack.c.l.b16 %v2488
    %v3323 = vunpack.c.l.b16 %v2489
    %v3324 = vunpack.c.h.b16 %v2489
    %v3325 = vunpack.c.l.b16 %v2490
    %v3326 = vunpack.c.l.b16 %v2491
    %v3327 = vunpack.c.h.b16 %v2491
    %v3328 = vunpack.c.l.b16 %v2492
    %v3329 = vunpack.c.l.b16 %v2493
    %v3330 = vunpack.c.h.b16 %v2493
    %v3331 = vunpack.c.l.b16 %v2494
    %v3332 = vunpack.c.l.b16 %v2495
    %v3333 = vunpack.c.h.b16 %v2495
    %v3334 = vunpack.c.l.b16 %v2496
    %v3335 = vunpack.c.l.b16 %v2497
    %v3336 = vunpack.c.h.b16 %v2497
    %v3337 = vunpack.c.l.b16 %v2498
    %v3338 = vunpack.c.l.b16 %v2499
    %v3339 = vunpack.c.h.b16 %v2499
    %v3340 = vunpack.c.l.b16 %v2500
    %v3341 = vunpack.c.l.b16 %v2501
    %v3342 = vunpack.c.h.b16 %v2501
    %v3343 = vunpack.c.l.b16 %v2502
    %v3344 = vunpack.c.l.b16 %v2503
    %v3345 = vunpack.c.h.b16 %v2503
    %v3346 = vunpack.c.l.b16 %v2504
    %v3347 = vunpack.c.l.b16 %v2505
    %v3348 = vunpack.c.h.b16 %v2505
    %v3349 = vunpack.c.l.b16 %v2506
    %v3350 = vunpack.c.l.b16 %v2507
    %v3351 = vunpack.c.h.b16 %v2507
    %v3352 = vunpack.c.l.b16 %v2508
    %v3353 = vunpack.c.l.b16 %v2509
    %v3354 = vunpack.c.h.b16 %v2509
    %v3355 = vunpack.c.l.b16 %v2510
    %v3356 = vunpack.c.l.b16 %v2511
    %v3357 = vunpack.c.h.b16 %v2511
    %v3358 = vunpack.c.l.b16 %v2512
    %v3359 = vunpack.c.l.b16 %v2513
    %v3360 = vunpack.c.h.b16 %v2513
    %v3361 = vunpack.c.l.b16 %v2514
    %v3362 = vunpack.c.l.b16 %v2515
    %v3363 = vunpack.c.h.b16 %v2515
    %v3364 = vunpack.c.l.b16 %v2516
    %v3365 = vunpack.c.l.b16 %v2517
    %v3366 = vunpack.c.h.b16 %v2517
    %v3367 = vunpack.c.l.b16 %v2518
    %v3368 = vunpack.c.l.b16 %v2519
    %v3369 = vunpack.c.h.b16 %v2519
    %v3370 = vunpack.c.l.b16 %v2520
    %v3371 = vunpack.c.l.b16 %v2521
    %v3372 = vunpack.c.h.b16 %v2521
    %v3373 = vunpack.c.l.b16 %v2522
    %v3374 = vunpack.c.l.b16 %v2523
    %v3375 = vunpack.c.h.b16 %v2523
    %v3376 = vunpack.c.l.b16 %v2524
    %v3377 = vunpack.c.l.b16 %v2525
    %v3378 = vunpack.c.h.b16 %v2525
    %v3379 = vunpack.c.l.b16 %v2526
    %v3380 = vunpack.c.l.b16 %v2527
    %v3381 = vunpack.c.h.b16 %v2527
    %v3382 = vunpack.c.l.b16 %v2528
    %v3383 = vunpack.c.l.b16 %v2529
    %v3384 = vunpack.c.h.b16 %v2529
    %v3385 = vunpack.c.l.b16 %v2530
    %v3386 = vunpack.c.l.b16 %v2531
    %v3387 = vunpack.c.h.b16 %v2531
    %v3388 = vunpack.c.l.b16 %v2532
    %v3389 = vunpack.c.l.b16 %v2533
    %v3390 = vunpack.c.h.b16 %v2533
    %v3391 = vunpack.c.l.b16 %v2534
    %v3392 = vunpack.c.l.b16 %v2535
    %v3393 = vunpack.c.h.b16 %v2535
    %v3394 = vunpack.c.l.b16 %v2536
    %v3395 = vunpack.c.l.b16 %v2537
    %v3396 = vunpack.c.h.b16 %v2537
    %v3397 = vunpack.c.l.b16 %v2538
    %v3398 = vunpack.c.l.b16 %v2539
    %v3399 = vunpack.c.h.b16 %v2539
    %v3400 = vunpack.c.l.b16 %v2540
    %v3401 = vunpack.c.l.b16 %v2541
    %v3402 = vunpack.c.h.b16 %v2541
    %v3403 = vunpack.c.l.b16 %v2542
    %v3404 = vunpack.c.l.b16 %v2543
    %v3405 = vunpack.c.h.b16 %v2543
    %v3406 = vunpack.c.l.b16 %v2544
    %v3407 = vunpack.c.l.b16 %v2545
    %v3408 = vunpack.c.h.b16 %v2545
    %v3409 = vunpack.c.l.b16 %v2546
    %v3410 = vunpack.c.l.b16 %v2547
    %v3411 = vunpack.c.h.b16 %v2547
    %v3412 = vunpack.c.l.b16 %v2548
    %v3413 = vunpack.c.l.b16 %v2549
    %v3414 = vunpack.c.h.b16 %v2549
    %v3415 = vunpack.c.l.b16 %v2550
    %v3416 = vunpack.c.l.b16 %v2551
    %v3417 = vunpack.c.h.b16 %v2551
    %v3418 = vunpack.c.l.b16 %v2552
    %v3419 = vunpack.c.l.b16 %v2553
    %v3420 = vunpack.c.h.b16 %v2553
    %v3421 = vunpack.c.l.b16 %v2554
    %v3422 = vunpack.c.l.b16 %v2555
    %v3423 = vunpack.c.h.b16 %v2555
    %v3424 = vunpack.c.l.b16 %v2556
    %v3425 = vunpack.c.l.b16 %v2557
    %v3426 = vunpack.c.h.b16 %v2557
    %v3427 = vunpack.c.l.b16 %v2558
    %v3428 = vunpack.c.l.b16 %v2559
    %v3429 = vunpack.c.h.b16 %v2559
    %v3430 = vunpack.c.l.b16 %v2560
    %v3431 = vunpack.c.l.b16 %v2561
    %v3432 = vunpack.c.h.b16 %v2561
    %v3433 = vunpack.c.l.b16 %v2562
    %v3434 = vunpack.c.l.b16 %v2563
    %v3435 = vunpack.c.h.b16 %v2563
    %v3436 = vunpack.c.l.b16 %v2564
    %v3437 = vunpack.c.l.b16 %v2565
    %v3438 = vunpack.c.h.b16 %v2565
    %v3439 = vunpack.c.l.b16 %v2566
    %v3440 = vunpack.c.l.b16 %v2567
    %v3441 = vunpack.c.h.b16 %v2567
    %v3442 = vunpack.c.l.b16 %v2568
    %v3443 = vunpack.c.l.b16 %v2569
    %v3444 = vunpack.c.h.b16 %v2569
    %v3445 = vunpack.c.l.b16 %v2570
    %v3446 = vunpack.c.l.b16 %v2571
    %v3447 = vunpack.c.h.b16 %v2571
    %v3448 = vunpack.c.l.b16 %v2572
    %v3449 = vunpack.c.l.b16 %v2573
    %v3450 = vunpack.c.h.b16 %v2573
    %v3451 = vunpack.c.l.b16 %v2574
    %v3452 = vunpack.c.l.b16 %v2575
    %v3453 = vunpack.c.h.b16 %v2575
    %v3454 = vunpack.c.l.b16 %v2576
    %v3455 = vunpack.c.l.b16 %v2577
    %v3456 = vunpack.c.h.b16 %v2577
    %v3457 = vunpack.c.l.b16 %v2578
    %v3458 = vunpack.c.l.b16 %v2579
    %v3459 = vunpack.c.h.b16 %v2579
    %v3460 = vunpack.c.l.b16 %v2580
    %v3461 = vunpack.c.l.b16 %v2581
    %v3462 = vunpack.c.h.b16 %v2581
    %v3463 = vunpack.c.l.b16 %v2582
    %v3464 = vunpack.c.l.b16 %v2583
    %v3465 = vunpack.c.h.b16 %v2583
    %v3466 = vunpack.c.l.b16 %v2584
    %v3467 = vunpack.c.l.b16 %v2585
    %v3468 = vunpack.c.h.b16 %v2585
    %v3469 = vunpack.c.l.b16 %v2586
    %v3470 = vunpack.c.l.b16 %v2587
    %v3471 = vunpack.c.h.b16 %v2587
    %v3472 = vunpack.c.l.b16 %v2588
    %v3473 = vunpack.c.l.b16 %v2589
    %v3474 = vunpack.c.h.b16 %v2589
    %v3475 = vunpack.c.l.b16 %v2590
    %v3476 = vunpack.c.l.b16 %v2591
    %v3477 = vunpack.c.h.b16 %v2591
    %v3478 = vunpack.c.l.b16 %v2592
    %v3479 = vunpack.c.l.b16 %v2593
    %v3480 = vunpack.c.h.b16 %v2593
    %v3481 = vunpack.c.l.b16 %v2594
    %v3482 = vunpack.c.l.b16 %v2595
    %v3483 = vunpack.c.h.b16 %v2595
    %v3484 = vunpack.c.l.b16 %v2596
    %v3485 = vunpack.c.l.b16 %v2597
    %v3486 = vunpack.c.h.b16 %v2597
    %v3487 = vunpack.c.l.b16 %v2598
    %v3488 = vunpack.c.l.b16 %v2599
    %v3489 = vunpack.c.h.b16 %v2599
    %v3490 = vunpack.c.l.b16 %v2600
    %v3491 = vunpack.c.l.b16 %v2601
    %v3492 = vunpack.c.h.b16 %v2601
    %v3493 = vunpack.c.l.b16 %v2602
    %v3494 = vunpack.c.l.b16 %v2603
    %v3495 = vunpack.c.h.b16 %v2603
    %v3496 = vunpack.c.l.b16 %v2604
    %v3497 = vunpack.c.l.b16 %v2605
    %v3498 = vunpack.c.h.b16 %v2605
    %v3499 = vunpack.c.l.b16 %v2606
    %v3500 = vunpack.c.l.b16 %v2607
    %v3501 = vunpack.c.h.b16 %v2607
    %v3502 = vunpack.c.l.b16 %v2608
    %v3503 = vunpack.c.l.b16 %v2609
    %v3504 = vunpack.c.h.b16 %v2609
    %v3505 = vunpack.c.l.b16 %v2610
    %v3506 = vunpack.c.l.b16 %v2611
    %v3507 = vunpack.c.h.b16 %v2611
    %v3508 = vunpack.c.l.b16 %v2612
    %v3509 = vunpack.c.l.b16 %v2613
    %v3510 = vunpack.c.h.b16 %v2613
    %v3511 = vunpack.c.l.b16 %v2614
    %v3512 = vunpack.c.l.b16 %v2615
    %v3513 = vunpack.c.h.b16 %v2615
    %v3514 = vunpack.c.l.b16 %v2616
    %v3515 = vunpack.c.l.b16 %v2617
    %v3516 = vunpack.c.h.b16 %v2617
    %v3517 = vunpack.c.l.b16 %v2618
    %v3518 = vunpack.c.l.b16 %v2619
    %v3519 = vunpack.c.h.b16 %v2619
    %v3520 = vunpack.c.l.b16 %v2620
    %v3521 = vunpack.c.l.b16 %v2621
    %v3522 = vunpack.c.h.b16 %v2621
    %v3523 = vunpack.c.l.b16 %v2622
    %v3524 = vunpack.c.l.b16 %v2623
    %v3525 = vunpack.c.h.b16 %v2623
    %v3526 = vunpack.c.l.b16 %v2624
    %v3527 = vunpack.c.l.b16 %v2625
    %v3528 = vunpack.c.h.b16 %v2625
    %v3529 = vunpack.c.l.b16 %v2626
    %v3530 = vunpack.c.l.b16 %v2627
    %v3531 = vunpack.c.h.b16 %v2627
    %v3532 = vunpack.c.l.b16 %v2628
    %v3533 = vunpack.c.l.b16 %v2629
    %v3534 = vunpack.c.h.b16 %v2629
    %v3535 = vunpack.c.l.b16 %v2630
    %v3536 = vunpack.c.l.b16 %v2631
    %v3537 = vunpack.c.h.b16 %v2631
    %v3538 = vunpack.c.l.b16 %v2632
    %v3539 = vunpack.c.l.b16 %v2633
    %v3540 = vunpack.c.h.b16 %v2633
    %v3541 = vunpack.c.l.b16 %v2634
    %v3542 = vunpack.c.l.b16 %v2635
    %v3543 = vunpack.c.h.b16 %v2635
    %v3544 = vunpack.c.l.b16 %v2636
    %v3545 = vunpack.c.l.b16 %v2637
    %v3546 = vunpack.c.h.b16 %v2637
    %v3547 = vunpack.c.l.b16 %v2638
    %v3548 = vunpack.c.l.b16 %v2639
    %v3549 = vunpack.c.h.b16 %v2639
    %v3550 = vunpack.c.l.b16 %v2640
    %v3551 = vunpack.c.l.b16 %v2641
    %v3552 = vunpack.c.h.b16 %v2641
    %v3553 = vunpack.c.l.b16 %v2642
    %v3554 = vunpack.c.l.b16 %v2643
    %v3555 = vunpack.c.h.b16 %v2643
    %v3556 = vunpack.c.l.b16 %v2644
    %v3557 = vunpack.c.l.b16 %v2645
    %v3558 = vunpack.c.h.b16 %v2645
    %v3559 = vunpack.c.l.b16 %v2646
    %v3560 = vunpack.c.l.b16 %v2647
    %v3561 = vunpack.c.h.b16 %v2647
    %v3562 = vunpack.c.l.b16 %v2648
    %v3563 = vunpack.c.l.b16 %v2649
    %v3564 = vunpack.c.h.b16 %v2649
    %v3565 = vunpack.c.l.b16 %v2650
    %v3566 = vunpack.c.l.b16 %v2651
    %v3567 = vunpack.c.h.b16 %v2651
    %v3568 = vunpack.c.l.b16 %v2652
    %v3569 = vunpack.c.l.b16 %v2653
    %v3570 = vunpack.c.h.b16 %v2653
    %v3571 = vunpack.c.l.b16 %v2654
    %v3572 = vunpack.c.l.b16 %v2655
    %v3573 = vunpack.c.h.b16 %v2655
    %v3574 = vunpack.c.l.b16 %v2656
    %v3575 = vunpack.c.l.b16 %v2657
    %v3576 = vunpack.c.h.b16 %v2657
    %v3577 = vunpack.c.l.b16 %v2658
    %v3578 = vunpack.c.l.b16 %v2659
    %v3579 = vunpack.c.h.b16 %v2659
    %v3580 = vunpack.c.l.b16 %v2660
    %v3581 = vunpack.c.l.b16 %v2661
    %v3582 = vunpack.c.h.b16 %v2661
    %v3583 = vunpack.c.l.b16 %v2662
    %v3584 = vunpack.c.l.b16 %v2663
    %v3585 = vunpack.c.h.b16 %v2663
    %v3586 = vunpack.c.l.b16 %v2664
    %v3587 = vunpack.c.l.b16 %v2665
    %v3588 = vunpack.c.h.b16 %v2665
    %v3589 = vunpack.c.l.b16 %v2666
    %v3590 = vunpack.c.l.b16 %v2667
    %v3591 = vunpack.c.h.b16 %v2667
    %v3592 = vunpack.c.l.b16 %v2668
    %v3593 = vunpack.c.l.b16 %v2669
    %v3594 = vunpack.c.h.b16 %v2669
    %v3595 = vunpack.c.l.b16 %v2670
    %v3596 = vunpack.c.l.b16 %v2671
    %v3597 = vunpack.c.h.b16 %v2671
    %v3598 = vunpack.c.l.b16 %v2672
    %v3599 = vunpack.c.l.b16 %v2673
    %v3600 = vunpack.c.h.b16 %v2673
    %v3601 = vunpack.c.l.b16 %v2674
    %v3602 = vunpack.c.l.b16 %v2675
    %v3603 = vunpack.c.h.b16 %v2675
    %v3604 = vunpack.c.l.b16 %v2676
    %v3605 = vunpack.c.l.b16 %v2677
    %v3606 = vunpack.c.h.b16 %v2677
    %v3607 = vunpack.c.l.b16 %v2678
    %v3608 = vunpack.c.l.b16 %v2679
    %v3609 = vunpack.c.h.b16 %v2679
    %v3610 = vunpack.c.l.b16 %v2680
    %v3611 = vunpack.c.l.b16 %v2681
    %v3612 = vunpack.c.h.b16 %v2681
    %v3613 = vunpack.c.l.b16 %v2682
    %v3614 = vunpack.c.l.b16 %v2683
    %v3615 = vunpack.c.h.b16 %v2683
    %v3616 = vunpack.c.l.b16 %v2684
    %v3617 = vunpack.c.l.b16 %v2685
    %v3618 = vunpack.c.h.b16 %v2685
    %v3619 = vunpack.c.l.b16 %v2686
    %v3620 = vunpack.c.l.b16 %v2687
    %v3621 = vunpack.c.h.b16 %v2687
    %v3622 = vunpack.c.l.b16 %v2688
    %v3623 = vunpack.c.l.b16 %v2689
    %v3624 = vunpack.c.h.b16 %v2689
    %v3625 = vunpack.c.l.b16 %v2690
    %v3626 = vunpack.c.l.b16 %v2691
    %v3627 = vunpack.c.h.b16 %v2691
    %v3628 = vunpack.c.l.b16 %v2692
    %v3629 = vunpack.c.l.b16 %v2693
    %v3630 = vunpack.c.h.b16 %v2693
    %v3631 = vunpack.c.l.b16 %v2694
    %v3632 = vunpack.c.l.b16 %v2695
    %v3633 = vunpack.c.h.b16 %v2695
    %v3634 = vunpack.c.l.b16 %v2696
    %v3635 = vunpack.c.l.b16 %v2697
    %v3636 = vunpack.c.h.b16 %v2697
    %v3637 = vunpack.c.l.b16 %v2698
    %v3638 = vunpack.c.l.b16 %v2699
    %v3639 = vunpack.c.h.b16 %v2699
    %v3640 = vunpack.c.l.b16 %v2700
    %v3641 = vunpack.c.l.b16 %v2701
    %v3642 = vunpack.c.h.b16 %v2701
    %v3643 = vunpack.c.l.b16 %v2702
    %v3644 = vunpack.c.l.b16 %v2703
    %v3645 = vunpack.c.h.b16 %v2703
    %v3646 = vunpack.c.l.b16 %v2704
    %v3647 = vunpack.c.l.b16 %v2705
    %v3648 = vunpack.c.h.b16 %v2705
    %v3649 = vunpack.c.l.b16 %v2706
    %v3650 = vunpack.c.l.b16 %v2707
    %v3651 = vunpack.c.h.b16 %v2707
    %v3652 = vunpack.c.l.b16 %v2708
    %v3653 = vunpack.c.l.b16 %v2709
    %v3654 = vunpack.c.h.b16 %v2709
    %v3655 = vunpack.c.l.b16 %v2710
    %v3656 = vunpack.c.l.b16 %v2711
    %v3657 = vunpack.c.h.b16 %v2711
    %v3658 = vunpack.c.l.b16 %v2712
    %v3659 = vunpack.c.l.b16 %v2713
    %v3660 = vunpack.c.h.b16 %v2713
    %v3661 = vunpack.c.l.b16 %v2714
    %v3662 = vunpack.c.l.b16 %v2715
    %v3663 = vunpack.c.h.b16 %v2715
    %v3664 = vunpack.c.l.b16 %v2716
    %v3665 = vunpack.c.l.b16 %v2717
    %v3666 = vunpack.c.h.b16 %v2717
    %v3667 = vunpack.c.l.b16 %v2718
    %v3668 = vunpack.c.l.b16 %v2719
    %v3669 = vunpack.c.h.b16 %v2719
    %v3670 = vunpack.c.l.b16 %v2720
    %v3671 = vunpack.c.l.b16 %v2721
    %v3672 = vunpack.c.h.b16 %v2721
    %v3673 = vunpack.c.l.b16 %v2722
    %v3674 = vunpack.c.l.b16 %v2723
    %v3675 = vunpack.c.h.b16 %v2723
    %v3676 = vunpack.c.l.b16 %v2724
    %v3677 = vunpack.c.l.b16 %v2725
    %v3678 = vunpack.c.h.b16 %v2725
    %v3679 = vunpack.c.l.b16 %v2726
    %v3680 = vunpack.c.l.b16 %v2727
    %v3681 = vunpack.c.h.b16 %v2727
    %v3682 = vunpack.c.l.b16 %v2728
    %v3683 = vunpack.c.l.b16 %v2729
    %v3684 = vunpack.c.h.b16 %v2729
    %v3685 = vunpack.c.l.b16 %v2730
    %v3686 = vunpack.c.l.b16 %v2731
    %v3687 = vunpack.c.h.b16 %v2731
    %v3688 = vunpack.c.l.b16 %v2732
    %v3689 = vunpack.c.l.b16 %v2733
    %v3690 = vunpack.c.h.b16 %v2733
    %v3691 = vunpack.c.l.b16 %v2734
    %v3692 = vunpack.c.l.b16 %v2735
    %v3693 = vunpack.c.h.b16 %v2735
    %v3694 = vunpack.c.l.b16 %v2736
    %v3695 = vunpack.c.l.b16 %v2737
    %v3696 = vunpack.c.h.b16 %v2737
    %v3697 = vunpack.c.l.b16 %v2738
    %v3698 = vunpack.c.l.b16 %v2739
    %v3699 = vunpack.c.h.b16 %v2739
    %v3700 = vunpack.c.l.b16 %v2740
    %v3701 = vunpack.c.l.b16 %v2741
    %v3702 = vunpack.c.h.b16 %v2741
    %v3703 = vunpack.c.l.b16 %v2742
    %v3704 = vunpack.c.l.b16 %v2743
    %v3705 = vunpack.c.h.b16 %v2743
    %v3706 = vunpack.c.l.b16 %v2744
    %v3707 = vunpack.c.l.b16 %v2745
    %v3708 = vunpack.c.h.b16 %v2745
    %v3709 = vunpack.c.l.b16 %v2746
    %v3710 = vunpack.c.l.b16 %v2747
    %v3711 = vunpack.c.h.b16 %v2747
    %v3712 = vunpack.c.l.b16 %v2748
    %v3713 = vunpack.c.l.b16 %v2749
    %v3714 = vunpack.c.h.b16 %v2749
    %v3715 = vunpack.c.l.b16 %v2750
    %v3716 = vunpack.c.l.b16 %v2751
    %v3717 = vunpack.c.h.b16 %v2751
    %v3718 = vunpack.c.l.b16 %v2752
    %v3719 = vunpack.c.l.b16 %v2753
    %v3720 = vunpack.c.h.b16 %v2753
    %v3721 = vunpack.c.l.b16 %v2754
    %v3722 = vunpack.c.l.b16 %v2755
    %v3723 = vunpack.c.h.b16 %v2755
    %v3724 = vunpack.c.l.b16 %v2756
    %v3725 = vpack.c.b16 %v3152, %v3149
    %v3726 = vpack.c.b16 %v3153, %v3150
    %v3727 = vpack.c.b16 %v3154, %v3151
    %v3728 = vpack.c.b16 %v3158, %v3155
    %v3729 = vpack.c.b16 %v3159, %v3156
    %v3730 = vpack.c.b16 %v3160, %v3157
    %v3731 = vpack.c.b16 %v3164, %v3161
    %v3732 = vpack.c.b16 %v3165, %v3162
    %v3733 = vpack.c.b16 %v3166, %v3163
    %v3734 = vpack.c.b16 %v3170, %v3167
    %v3735 = vpack.c.b16 %v3171, %v3168
    %v3736 = vpack.c.b16 %v3172, %v3169
    %v3737 = vpack.c.b16 %v3176, %v3173
    %v3738 = vpack.c.b16 %v3177, %v3174
    %v3739 = vpack.c.b16 %v3178, %v3175
    %v3740 = vpack.c.b16 %v3182, %v3179
    %v3741 = vpack.c.b16 %v3183, %v3180
    %v3742 = vpack.c.b16 %v3184, %v3181
    %v3743 = vpack.c.b16 %v3188, %v3185
    %v3744 = vpack.c.b16 %v3189, %v3186
    %v3745 = vpack.c.b16 %v3190, %v3187
    %v3746 = vpack.c.b16 %v3194, %v3191
    %v3747 = vpack.c.b16 %v3195, %v3192
    %v3748 = vpack.c.b16 %v3196, %v3193
    %v3749 = vpack.c.b16 %v3200, %v3197
    %v3750 = vpack.c.b16 %v3201, %v3198
    %v3751 = vpack.c.b16 %v3202, %v3199
    %v3752 = vpack.c.b16 %v3206, %v3203
    %v3753 = vpack.c.b16 %v3207, %v3204
    %v3754 = vpack.c.b16 %v3208, %v3205
    %v3755 = vpack.c.b16 %v3212, %v3209
    %v3756 = vpack.c.b16 %v3213, %v3210
    %v3757 = vpack.c.b16 %v3214, %v3211
    %v3758 = vpack.c.b16 %v3218, %v3215
    %v3759 = vpack.c.b16 %v3219, %v3216
    %v3760 = vpack.c.b16 %v3220, %v3217
    %v3761 = vpack.c.b16 %v3224, %v3221
    %v3762 = vpack.c.b16 %v3225, %v3222
    %v3763 = vpack.c.b16 %v3226, %v3223
    %v3764 = vpack.c.b16 %v3230, %v3227
    %v3765 = vpack.c.b16 %v3231, %v3228
    %v3766 = vpack.c.b16 %v3232, %v3229
    %v3767 = vpack.c.b16 %v3236, %v3233
    %v3768 = vpack.c.b16 %v3237, %v3234
    %v3769 = vpack.c.b16 %v3238, %v3235
    %v3770 = vpack.c.b16 %v3242, %v3239
    %v3771 = vpack.c.b16 %v3243, %v3240
    %v3772 = vpack.c.b16 %v3244, %v3241
    %v3773 = vpack.c.b16 %v3248, %v3245
    %v3774 = vpack.c.b16 %v3249, %v3246
    %v3775 = vpack.c.b16 %v3250, %v3247
    %v3776 = vpack.c.b16 %v3254, %v3251
    %v3777 = vpack.c.b16 %v3255, %v3252
    %v3778 = vpack.c.b16 %v3256, %v3253
    %v3779 = vpack.c.b16 %v3260, %v3257
    %v3780 = vpack.c.b16 %v3261, %v3258
    %v3781 = vpack.c.b16 %v3262, %v3259
    %v3782 = vpack.c.b16 %v3266, %v3263
    %v3783 = vpack.c.b16 %v3267, %v3264
    %v3784 = vpack.c.b16 %v3268, %v3265
    %v3785 = vpack.c.b16 %v3272, %v3269
    %v3786 = vpack.c.b16 %v3273, %v3270
    %v3787 = vpack.c.b16 %v3274, %v3271
    %v3788 = vpack.c.b16 %v3278, %v3275
    %v3789 = vpack.c.b16 %v3279, %v3276
    %v3790 = vpack.c.b16 %v3280, %v3277
    %v3791 = vpack.c.b16 %v3284, %v3281
    %v3792 = vpack.c.b16 %v3285, %v3282
    %v3793 = vpack.c.b16 %v3286, %v3283
    %v3794 = vpack.c.b16 %v3290, %v3287
    %v3795 = vpack.c.b16 %v3291, %v3288
    %v3796 = vpack.c.b16 %v3292, %v3289
    %v3797 = vpack.c.b16 %v3296, %v3293
    %v3798 = vpack.c.b16 %v3297, %v3294
    %v3799 = vpack.c.b16 %v3298, %v3295
    %v3800 = vpack.c.b16 %v3302, %v3299
    %v3801 = vpack.c.b16 %v3303, %v3300
    %v3802 = vpack.c.b16 %v3304, %v3301
    %v3803 = vpack.c.b16 %v3308, %v3305
    %v3804 = vpack.c.b16 %v3309, %v3306
    %v3805 = vpack.c.b16 %v3310, %v3307
    %v3806 = vpack.c.b16 %v3314, %v3311
    %v3807 = vpack.c.b16 %v3315, %v3312
    %v3808 = vpack.c.b16 %v3316, %v3313
    %v3809 = vpack.c.b16 %v3320, %v3317
    %v3810 = vpack.c.b16 %v3321, %v3318
    %v3811 = vpack.c.b16 %v3322, %v3319
    %v3812 = vpack.c.b16 %v3326, %v3323
    %v3813 = vpack.c.b16 %v3327, %v3324
    %v3814 = vpack.c.b16 %v3328, %v3325
    %v3815 = vpack.c.b16 %v3332, %v3329
    %v3816 = vpack.c.b16 %v3333, %v3330
    %v3817 = vpack.c.b16 %v3334, %v3331
    %v3818 = vpack.c.b16 %v3338, %v3335
    %v3819 = vpack.c.b16 %v3339, %v3336
    %v3820 = vpack.c.b16 %v3340, %v3337
    %v3821 = vpack.c.b16 %v3344, %v3341
    %v3822 = vpack.c.b16 %v3345, %v3342
    %v3823 = vpack.c.b16 %v3346, %v3343
    %v3824 = vpack.c.b16 %v3350, %v3347
    %v3825 = vpack.c.b16 %v3351, %v3348
    %v3826 = vpack.c.b16 %v3352, %v3349
    %v3827 = vpack.c.b16 %v3356, %v3353
    %v3828 = vpack.c.b16 %v3357, %v3354
    %v3829 = vpack.c.b16 %v3358, %v3355
    %v3830 = vpack.c.b16 %v3362, %v3359
    %v3831 = vpack.c.b16 %v3363, %v3360
    %v3832 = vpack.c.b16 %v3364, %v3361
    %v3833 = vpack.c.b16 %v3368, %v3365
    %v3834 = vpack.c.b16 %v3369, %v3366
    %v3835 = vpack.c.b16 %v3370, %v3367
    %v3836 = vpack.c.b16 %v3374, %v3371
    %v3837 = vpack.c.b16 %v3375, %v3372
    %v3838 = vpack.c.b16 %v3376, %v3373
    %v3839 = vpack.c.b16 %v3380, %v3377
    %v3840 = vpack.c.b16 %v3381, %v3378
    %v3841 = vpack.c.b16 %v3382, %v3379
    %v3842 = vpack.c.b16 %v3386, %v3383
    %v3843 = vpack.c.b16 %v3387, %v3384
    %v3844 = vpack.c.b16 %v3388, %v3385
    %v3845 = vpack.c.b16 %v3392, %v3389
    %v3846 = vpack.c.b16 %v3393, %v3390
    %v3847 = vpack.c.b16 %v3394, %v3391
    %v3848 = vpack.c.b16 %v3398, %v3395
    %v3849 = vpack.c.b16 %v3399, %v3396
    %v3850 = vpack.c.b16 %v3400, %v3397
    %v3851 = vpack.c.b16 %v3404, %v3401
    %v3852 = vpack.c.b16 %v3405, %v3402
    %v3853 = vpack.c.b16 %v3406, %v3403
    %v3854 = vpack.c.b16 %v3410, %v3407
    %v3855 = vpack.c.b16 %v3411, %v3408
    %v3856 = vpack.c.b16 %v3412, %v3409
    %v3857 = vpack.c.b16 %v3416, %v3413
    %v3858 = vpack.c.b16 %v3417, %v3414
    %v3859 = vpack.c.b16 %v3418, %v3415
    %v3860 = vpack.c.b16 %v3422, %v3419
    %v3861 = vpack.c.b16 %v3423, %v3420
    %v3862 = vpack.c.b16 %v3424, %v3421
    %v3863 = vpack.c.b16 %v3428, %v3425
    %v3864 = vpack.c.b16 %v3429, %v3426
    %v3865 = vpack.c.b16 %v3430, %v3427
    %v3866 = vpack.c.b16 %v3434, %v3431
    %v3867 = vpack.c.b16 %v3435, %v3432
    %v3868 = vpack.c.b16 %v3436, %v3433
    %v3869 = vpack.c.b16 %v3440, %v3437
    %v3870 = vpack.c.b16 %v3441, %v3438
    %v3871 = vpack.c.b16 %v3442, %v3439
    %v3872 = vpack.c.b16 %v3446, %v3443
    %v3873 = vpack.c.b16 %v3447, %v3444
    %v3874 = vpack.c.b16 %v3448, %v3445
    %v3875 = vpack.c.b16 %v3452, %v3449
    %v3876 = vpack.c.b16 %v3453, %v3450
    %v3877 = vpack.c.b16 %v3454, %v3451
    %v3878 = vpack.c.b16 %v3458, %v3455
    %v3879 = vpack.c.b16 %v3459, %v3456
    %v3880 = vpack.c.b16 %v3460, %v3457
    %v3881 = vpack.c.b16 %v3464, %v3461
    %v3882 = vpack.c.b16 %v3465, %v3462
    %v3883 = vpack.c.b16 %v3466, %v3463
    %v3884 = vpack.c.b16 %v3470, %v3467
    %v3885 = vpack.c.b16 %v3471, %v3468
    %v3886 = vpack.c.b16 %v3472, %v3469
    %v3887 = vpack.c.b16 %v3476, %v3473
    %v3888 = vpack.c.b16 %v3477, %v3474
    %v3889 = vpack.c.b16 %v3478, %v3475
    %v3890 = vpack.c.b16 %v3482, %v3479
    %v3891 = vpack.c.b16 %v3483, %v3480
    %v3892 = vpack.c.b16 %v3484, %v3481
    %v3893 = vpack.c.b16 %v3488, %v3485
    %v3894 = vpack.c.b16 %v3489, %v3486
    %v3895 = vpack.c.b16 %v3490, %v3487
    %v3896 = vpack.c.b16 %v3494, %v3491
    %v3897 = vpack.c.b16 %v3495, %v3492
    %v3898 = vpack.c.b16 %v3496, %v3493
    %v3899 = vpack.c.b16 %v3500, %v3497
    %v3900 = vpack.c.b16 %v3501, %v3498
    %v3901 = vpack.c.b16 %v3502, %v3499
    %v3902 = vpack.c.b16 %v3506, %v3503
    %v3903 = vpack.c.b16 %v3507, %v3504
    %v3904 = vpack.c.b16 %v3508, %v3505
    %v3905 = vpack.c.b16 %v3512, %v3509
    %v3906 = vpack.c.b16 %v3513, %v3510
    %v3907 = vpack.c.b16 %v3514, %v3511
    %v3908 = vpack.c.b16 %v3518, %v3515
    %v3909 = vpack.c.b16 %v3519, %v3516
    %v3910 = vpack.c.b16 %v3520, %v3517
    %v3911 = vpack.c.b16 %v3524, %v3521
    %v3912 = vpack.c.b16 %v3525, %v3522
    %v3913 = vpack.c.b16 %v3526, %v3523
    %v3914 = vpack.c.b16 %v3530, %v3527
    %v3915 = vpack.c.b16 %v3531, %v3528
    %v3916 = vpack.c.b16 %v3532, %v3529
    %v3917 = vpack.c.b16 %v3536, %v3533
    %v3918 = vpack.c.b16 %v3537, %v3534
    %v3919 = vpack.c.b16 %v3538, %v3535
    %v3920 = vpack.c.b16 %v3542, %v3539
    %v3921 = vpack.c.b16 %v3543, %v3540
    %v3922 = vpack.c.b16 %v3544, %v3541
    %v3923 = vpack.c.b16 %v3548, %v3545
    %v3924 = vpack.c.b16 %v3549, %v3546
    %v3925 = vpack.c.b16 %v3550, %v3547
    %v3926 = vpack.c.b16 %v3554, %v3551
    %v3927 = vpack.c.b16 %v3555, %v3552
    %v3928 = vpack.c.b16 %v3556, %v3553
    %v3929 = vpack.c.b16 %v3560, %v3557
    %v3930 = vpack.c.b16 %v3561, %v3558
    %v3931 = vpack.c.b16 %v3562, %v3559
    %v3932 = vpack.c.b16 %v3566, %v3563
    %v3933 = vpack.c.b16 %v3567, %v3564
    %v3934 = vpack.c.b16 %v3568, %v3565
    %v3935 = vpack.c.b16 %v3572, %v3569
    %v3936 = vpack.c.b16 %v3573, %v3570
    %v3937 = vpack.c.b16 %v3574, %v3571
    %v3938 = vpack.c.b16 %v3578, %v3575
    %v3939 = vpack.c.b16 %v3579, %v3576
    %v3940 = vpack.c.b16 %v3580, %v3577
    %v3941 = vpack.c.b16 %v3584, %v3581
    %v3942 = vpack.c.b16 %v3585, %v3582
    %v3943 = vpack.c.b16 %v3586, %v3583
    %v3944 = vpack.c.b16 %v3590, %v3587
    %v3945 = vpack.c.b16 %v3591, %v3588
    %v3946 = vpack.c.b16 %v3592, %v3589
    %v3947 = vpack.c.b16 %v3596, %v3593
    %v3948 = vpack.c.b16 %v3597, %v3594
    %v3949 = vpack.c.b16 %v3598, %v3595
    %v3950 = vpack.c.b16 %v3602, %v3599
    %v3951 = vpack.c.b16 %v3603, %v3600
    %v3952 = vpack.c.b16 %v3604, %v3601
    %v3953 = vpack.c.b16 %v3608, %v3605
    %v3954 = vpack.c.b16 %v3609, %v3606
    %v3955 = vpack.c.b16 %v3610, %v3607
    %v3956 = vpack.c.b16 %v3614, %v3611
    %v3957 = vpack.c.b16 %v3615, %v3612
    %v3958 = vpack.c.b16 %v3616, %v3613
    %v3959 = vpack.c.b16 %v3620, %v3617
    %v3960 = vpack.c.b16 %v3621, %v3618
    %v3961 = vpack.c.b16 %v3622, %v3619
    %v3962 = vpack.c.b16 %v3626, %v3623
    %v3963 = vpack.c.b16 %v3627, %v3624
    %v3964 = vpack.c.b16 %v3628, %v3625
    %v3965 = vpack.c.b16 %v3632, %v3629
    %v3966 = vpack.c.b16 %v3633, %v3630
    %v3967 = vpack.c.b16 %v3634, %v3631
    %v3968 = vpack.c.b16 %v3638, %v3635
    %v3969 = vpack.c.b16 %v3639, %v3636
    %v3970 = vpack.c.b16 %v3640, %v3637
    %v3971 = vpack.c.b16 %v3644, %v3641
    %v3972 = vpack.c.b16 %v3645, %v3642
    %v3973 = vpack.c.b16 %v3646, %v3643
    %v3974 = vpack.c.b16 %v3650, %v3647
    %v3975 = vpack.c.b16 %v3651, %v3648
    %v3976 = vpack.c.b16 %v3652, %v3649
    %v3977 = vpack.c.b16 %v3656, %v3653
    %v3978 = vpack.c.b16 %v3657, %v3654
    %v3979 = vpack.c.b16 %v3658, %v3655
    %v3980 = vpack.c.b16 %v3662, %v3659
    %v3981 = vpack.c.b16 %v3663, %v3660
    %v3982 = vpack.c.b16 %v3664, %v3661
    %v3983 = vpack.c.b16 %v3668, %v3665
    %v3984 = vpack.c.b16 %v3669, %v3666
    %v3985 = vpack.c.b16 %v3670, %v3667
    %v3986 = vpack.c.b16 %v3674, %v3671
    %v3987 = vpack.c.b16 %v3675, %v3672
    %v3988 = vpack.c.b16 %v3676, %v3673
    %v3989 = vpack.c.b16 %v3680, %v3677
    %v3990 = vpack.c.b16 %v3681, %v3678
    %v3991 = vpack.c.b16 %v3682, %v3679
    %v3992 = vpack.c.b16 %v3686, %v3683
    %v3993 = vpack.c.b16 %v3687, %v3684
    %v3994 = vpack.c.b16 %v3688, %v3685
    %v3995 = vpack.c.b16 %v3692, %v3689
    %v3996 = vpack.c.b16 %v3693, %v3690
    %v3997 = vpack.c.b16 %v3694, %v3691
    %v3998 = vpack.c.b16 %v3698, %v3695
    %v3999 = vpack.c.b16 %v3699, %v3696
    %v4000 = vpack.c.b16 %v3700, %v3697
    %v4001 = vpack.c.b16 %v3704, %v3701
    %v4002 = vpack.c.b16 %v3705, %v3702
    %v4003 = vpack.c.b16 %v3706, %v3703
    %v4004 = vpack.c.b16 %v3710, %v3707
    %v4005 = vpack.c.b16 %v3711, %v3708
    %v4006 = vpack.c.b16 %v3712, %v3709
    %v4007 = vpack.c.b16 %v3716, %v3713
    %v4008 = vpack.c.b16 %v3717, %v3714
    %v4009 = vpack.c.b16 %v3718, %v3715
    %v4010 = vpack.c.b16 %v3722, %v3719
    %v4011 = vpack.c.b16 %v3723, %v3720
    %v4012 = vpack.c.b16 %v3724, %v3721
    %4301 = vmatpush.bf16.msra.mxu0 %v3746
    %4302 = vmatpush.bf16.msra.mxu0 %v3743
    %4303 = vmatpush.bf16.msra.mxu0 %v3740
    %4304 = vmatpush.bf16.msra.mxu0 %v3737
    %4305 = vmatpush.bf16.msra.mxu0 %v3734
    %4306 = vmatpush.bf16.msra.mxu0 %v3731
    %4307 = vmatpush.bf16.msra.mxu0 %v3728
    %4308 = vmatpush.bf16.msra.mxu0 %v3725
    %4309 = vmatmul.bf16.gmra.mxu0 %v2361
    %v4310 = vpop.f32.mrf.mxu0
    %v4311 = vadd.f32 %v2759, %v4310
    %v4312 = vpop.f32.mrf.mxu0
    %v4313 = vadd.f32 %v2759, %v4312
    %4314 = vdwg.mxu0
    %4315 = vmatpush.bf16.msra.mxu0 %v3770
    %4316 = vmatpush.bf16.msra.mxu0 %v3767
    %4317 = vmatpush.bf16.msra.mxu0 %v3764
    %4318 = vmatpush.bf16.msra.mxu0 %v3761
    %4319 = vmatpush.bf16.msra.mxu0 %v3758
    %4320 = vmatpush.bf16.msra.mxu0 %v3755
    %4321 = vmatpush.bf16.msra.mxu0 %v3752
    %4322 = vmatpush.bf16.msra.mxu0 %v3749
    %4323 = vmatmul.bf16.gmra.mxu0 %v2362
    %v4324 = vpop.f32.mrf.mxu0
    %v4325 = vadd.f32 %v4311, %v4324
    %v4326 = vpop.f32.mrf.mxu0
    %v4327 = vadd.f32 %v4313, %v4326
    %4328 = vdwg.mxu0
    %4329 = vmatpush.bf16.msra.mxu0 %v3794
    %4330 = vmatpush.bf16.msra.mxu0 %v3791
    %4331 = vmatpush.bf16.msra.mxu0 %v3788
    %4332 = vmatpush.bf16.msra.mxu0 %v3785
    %4333 = vmatpush.bf16.msra.mxu0 %v3782
    %4334 = vmatpush.bf16.msra.mxu0 %v3779
    %4335 = vmatpush.bf16.msra.mxu0 %v3776
    %4336 = vmatpush.bf16.msra.mxu0 %v3773
    %4337 = vmatmul.bf16.gmra.mxu0 %v2363
    %v4338 = vpop.f32.mrf.mxu0
    %v4339 = vadd.f32 %v4325, %v4338
    %v4340 = vpop.f32.mrf.mxu0
    %v4341 = vadd.f32 %v4327, %v4340
    %4342 = vdwg.mxu0
    %4343 = vmatpush.bf16.msra.mxu0 %v3818
    %4344 = vmatpush.bf16.msra.mxu0 %v3815
    %4345 = vmatpush.bf16.msra.mxu0 %v3812
    %4346 = vmatpush.bf16.msra.mxu0 %v3809
    %4347 = vmatpush.bf16.msra.mxu0 %v3806
    %4348 = vmatpush.bf16.msra.mxu0 %v3803
    %4349 = vmatpush.bf16.msra.mxu0 %v3800
    %4350 = vmatpush.bf16.msra.mxu0 %v3797
    %4351 = vmatmul.bf16.gmra.mxu0 %v2364
    %v4352 = vpop.f32.mrf.mxu0
    %v4353 = vadd.f32 %v4339, %v4352
    %v4354 = vpop.f32.mrf.mxu0
    %v4355 = vadd.f32 %v4341, %v4354
    %4356 = vdwg.mxu0
    %4357 = vmatpush.bf16.msra.mxu0 %v3842
    %4358 = vmatpush.bf16.msra.mxu0 %v3839
    %4359 = vmatpush.bf16.msra.mxu0 %v3836
    %4360 = vmatpush.bf16.msra.mxu0 %v3833
    %4361 = vmatpush.bf16.msra.mxu0 %v3830
    %4362 = vmatpush.bf16.msra.mxu0 %v3827
    %4363 = vmatpush.bf16.msra.mxu0 %v3824
    %4364 = vmatpush.bf16.msra.mxu0 %v3821
    %4365 = vmatmul.bf16.gmra.mxu0 %v2365
    %v4366 = vpop.f32.mrf.mxu0
    %v4367 = vadd.f32 %v4353, %v4366
    %v4368 = vpop.f32.mrf.mxu0
    %v4369 = vadd.f32 %v4355, %v4368
    %4370 = vdwg.mxu0
    %4371 = vmatpush.bf16.msra.mxu0 %v3866
    %4372 = vmatpush.bf16.msra.mxu0 %v3863
    %4373 = vmatpush.bf16.msra.mxu0 %v3860
    %4374 = vmatpush.bf16.msra.mxu0 %v3857
    %4375 = vmatpush.bf16.msra.mxu0 %v3854
    %4376 = vmatpush.bf16.msra.mxu0 %v3851
    %4377 = vmatpush.bf16.msra.mxu0 %v3848
    %4378 = vmatpush.bf16.msra.mxu0 %v3845
    %4379 = vmatmul.bf16.gmra.mxu0 %v2366
    %v4380 = vpop.f32.mrf.mxu0
    %v4381 = vadd.f32 %v4367, %v4380
    %v4382 = vpop.f32.mrf.mxu0
    %v4383 = vadd.f32 %v4369, %v4382
    %4384 = vdwg.mxu0
    %4385 = vmatpush.bf16.msra.mxu0 %v3890
    %4386 = vmatpush.bf16.msra.mxu0 %v3887
    %4387 = vmatpush.bf16.msra.mxu0 %v3884
    %4388 = vmatpush.bf16.msra.mxu0 %v3881
    %4389 = vmatpush.bf16.msra.mxu0 %v3878
    %4390 = vmatpush.bf16.msra.mxu0 %v3875
    %4391 = vmatpush.bf16.msra.mxu0 %v3872
    %4392 = vmatpush.bf16.msra.mxu0 %v3869
    %4393 = vmatmul.bf16.gmra.mxu0 %v2367
    %v4394 = vpop.f32.mrf.mxu0
    %v4395 = vadd.f32 %v4381, %v4394
    %v4396 = vpop.f32.mrf.mxu0
    %v4397 = vadd.f32 %v4383, %v4396
    %4398 = vdwg.mxu0
    %4399 = vmatpush.bf16.msra.mxu0 %v3914
    %4400 = vmatpush.bf16.msra.mxu0 %v3911
    %4401 = vmatpush.bf16.msra.mxu0 %v3908
    %4402 = vmatpush.bf16.msra.mxu0 %v3905
    %4403 = vmatpush.bf16.msra.mxu0 %v3902
    %4404 = vmatpush.bf16.msra.mxu0 %v3899
    %4405 = vmatpush.bf16.msra.mxu0 %v3896
    %4406 = vmatpush.bf16.msra.mxu0 %v3893
    %4407 = vmatmul.bf16.gmra.mxu0 %v2368
    %v4408 = vpop.f32.mrf.mxu0
    %v4409 = vadd.f32 %v4395, %v4408
    %v4410 = vpop.f32.mrf.mxu0
    %v4411 = vadd.f32 %v4397, %v4410
    %4412 = vdwg.mxu0
    %4413 = vmatpush.bf16.msra.mxu0 %v3938
    %4414 = vmatpush.bf16.msra.mxu0 %v3935
    %4415 = vmatpush.bf16.msra.mxu0 %v3932
    %4416 = vmatpush.bf16.msra.mxu0 %v3929
    %4417 = vmatpush.bf16.msra.mxu0 %v3926
    %4418 = vmatpush.bf16.msra.mxu0 %v3923
    %4419 = vmatpush.bf16.msra.mxu0 %v3920
    %4420 = vmatpush.bf16.msra.mxu0 %v3917
    %4421 = vmatmul.bf16.gmra.mxu0 %v2369
    %v4422 = vpop.f32.mrf.mxu0
    %v4423 = vadd.f32 %v4409, %v4422
    %v4424 = vpop.f32.mrf.mxu0
    %v4425 = vadd.f32 %v4411, %v4424
    %4426 = vdwg.mxu0
    %4427 = vmatpush.bf16.msra.mxu0 %v3962
    %4428 = vmatpush.bf16.msra.mxu0 %v3959
    %4429 = vmatpush.bf16.msra.mxu0 %v3956
    %4430 = vmatpush.bf16.msra.mxu0 %v3953
    %4431 = vmatpush.bf16.msra.mxu0 %v3950
    %4432 = vmatpush.bf16.msra.mxu0 %v3947
    %4433 = vmatpush.bf16.msra.mxu0 %v3944
    %4434 = vmatpush.bf16.msra.mxu0 %v3941
    %4435 = vmatmul.bf16.gmra.mxu0 %v2370
    %v4436 = vpop.f32.mrf.mxu0
    %v4437 = vadd.f32 %v4423, %v4436
    %v4438 = vpop.f32.mrf.mxu0
    %v4439 = vadd.f32 %v4425, %v4438
    %4440 = vdwg.mxu0
    %4441 = vmatpush.bf16.msra.mxu0 %v3986
    %4442 = vmatpush.bf16.msra.mxu0 %v3983
    %4443 = vmatpush.bf16.msra.mxu0 %v3980
    %4444 = vmatpush.bf16.msra.mxu0 %v3977
    %4445 = vmatpush.bf16.msra.mxu0 %v3974
    %4446 = vmatpush.bf16.msra.mxu0 %v3971
    %4447 = vmatpush.bf16.msra.mxu0 %v3968
    %4448 = vmatpush.bf16.msra.mxu0 %v3965
    %4449 = vmatmul.bf16.gmra.mxu0 %v2371
    %v4450 = vpop.f32.mrf.mxu0
    %v4451 = vadd.f32 %v4437, %v4450
    %v4452 = vpop.f32.mrf.mxu0
    %v4453 = vadd.f32 %v4439, %v4452
    %4454 = vdwg.mxu0
    %4455 = vmatpush.bf16.msra.mxu0 %v4010
    %4456 = vmatpush.bf16.msra.mxu0 %v4007
    %4457 = vmatpush.bf16.msra.mxu0 %v4004
    %4458 = vmatpush.bf16.msra.mxu0 %v4001
    %4459 = vmatpush.bf16.msra.mxu0 %v3998
    %4460 = vmatpush.bf16.msra.mxu0 %v3995
    %4461 = vmatpush.bf16.msra.mxu0 %v3992
    %4462 = vmatpush.bf16.msra.mxu0 %v3989
    %4463 = vmatmul.bf16.gmra.mxu0 %v2372
    %v4464 = vpop.f32.mrf.mxu0
    %v4465 = vadd.f32 %v4451, %v4464
    %v4466 = vpop.f32.mrf.mxu0
    %v4467 = vadd.f32 %v4453, %v4466
    %4468 = vdwg.mxu0
    %4469 = vmatpush.bf16.msra.mxu0 %v3747
    %4470 = vmatpush.bf16.msra.mxu0 %v3744
    %4471 = vmatpush.bf16.msra.mxu0 %v3741
    %4472 = vmatpush.bf16.msra.mxu0 %v3738
    %4473 = vmatpush.bf16.msra.mxu0 %v3735
    %4474 = vmatpush.bf16.msra.mxu0 %v3732
    %4475 = vmatpush.bf16.msra.mxu0 %v3729
    %4476 = vmatpush.bf16.msra.mxu0 %v3726
    %4477 = vmatmul.bf16.gmra.mxu0 %v2361
    %v4478 = vpop.f32.mrf.mxu0
    %v4479 = vadd.f32 %v2760, %v4478
    %v4480 = vpop.f32.mrf.mxu0
    %v4481 = vadd.f32 %v2760, %v4480
    %4482 = vdwg.mxu0
    %4483 = vmatpush.bf16.msra.mxu0 %v3771
    %4484 = vmatpush.bf16.msra.mxu0 %v3768
    %4485 = vmatpush.bf16.msra.mxu0 %v3765
    %4486 = vmatpush.bf16.msra.mxu0 %v3762
    %4487 = vmatpush.bf16.msra.mxu0 %v3759
    %4488 = vmatpush.bf16.msra.mxu0 %v3756
    %4489 = vmatpush.bf16.msra.mxu0 %v3753
    %4490 = vmatpush.bf16.msra.mxu0 %v3750
    %4491 = vmatmul.bf16.gmra.mxu0 %v2362
    %v4492 = vpop.f32.mrf.mxu0
    %v4493 = vadd.f32 %v4479, %v4492
    %v4494 = vpop.f32.mrf.mxu0
    %v4495 = vadd.f32 %v4481, %v4494
    %4496 = vdwg.mxu0
    %4497 = vmatpush.bf16.msra.mxu0 %v3795
    %4498 = vmatpush.bf16.msra.mxu0 %v3792
    %4499 = vmatpush.bf16.msra.mxu0 %v3789
    %4500 = vmatpush.bf16.msra.mxu0 %v3786
    %4501 = vmatpush.bf16.msra.mxu0 %v3783
    %4502 = vmatpush.bf16.msra.mxu0 %v3780
    %4503 = vmatpush.bf16.msra.mxu0 %v3777
    %4504 = vmatpush.bf16.msra.mxu0 %v3774
    %4505 = vmatmul.bf16.gmra.mxu0 %v2363
    %v4506 = vpop.f32.mrf.mxu0
    %v4507 = vadd.f32 %v4493, %v4506
    %v4508 = vpop.f32.mrf.mxu0
    %v4509 = vadd.f32 %v4495, %v4508
    %4510 = vdwg.mxu0
    %4511 = vmatpush.bf16.msra.mxu0 %v3819
    %4512 = vmatpush.bf16.msra.mxu0 %v3816
    %4513 = vmatpush.bf16.msra.mxu0 %v3813
    %4514 = vmatpush.bf16.msra.mxu0 %v3810
    %4515 = vmatpush.bf16.msra.mxu0 %v3807
    %4516 = vmatpush.bf16.msra.mxu0 %v3804
    %4517 = vmatpush.bf16.msra.mxu0 %v3801
    %4518 = vmatpush.bf16.msra.mxu0 %v3798
    %4519 = vmatmul.bf16.gmra.mxu0 %v2364
    %v4520 = vpop.f32.mrf.mxu0
    %v4521 = vadd.f32 %v4507, %v4520
    %v4522 = vpop.f32.mrf.mxu0
    %v4523 = vadd.f32 %v4509, %v4522
    %4524 = vdwg.mxu0
    %4525 = vmatpush.bf16.msra.mxu0 %v3843
    %4526 = vmatpush.bf16.msra.mxu0 %v3840
    %4527 = vmatpush.bf16.msra.mxu0 %v3837
    %4528 = vmatpush.bf16.msra.mxu0 %v3834
    %4529 = vmatpush.bf16.msra.mxu0 %v3831
    %4530 = vmatpush.bf16.msra.mxu0 %v3828
    %4531 = vmatpush.bf16.msra.mxu0 %v3825
    %4532 = vmatpush.bf16.msra.mxu0 %v3822
    %4533 = vmatmul.bf16.gmra.mxu0 %v2365
    %v4534 = vpop.f32.mrf.mxu0
    %v4535 = vadd.f32 %v4521, %v4534
    %v4536 = vpop.f32.mrf.mxu0
    %v4537 = vadd.f32 %v4523, %v4536
    %4538 = vdwg.mxu0
    %4539 = vmatpush.bf16.msra.mxu0 %v3867
    %4540 = vmatpush.bf16.msra.mxu0 %v3864
    %4541 = vmatpush.bf16.msra.mxu0 %v3861
    %4542 = vmatpush.bf16.msra.mxu0 %v3858
    %4543 = vmatpush.bf16.msra.mxu0 %v3855
    %4544 = vmatpush.bf16.msra.mxu0 %v3852
    %4545 = vmatpush.bf16.msra.mxu0 %v3849
    %4546 = vmatpush.bf16.msra.mxu0 %v3846
    %4547 = vmatmul.bf16.gmra.mxu0 %v2366
    %v4548 = vpop.f32.mrf.mxu0
    %v4549 = vadd.f32 %v4535, %v4548
    %v4550 = vpop.f32.mrf.mxu0
    %v4551 = vadd.f32 %v4537, %v4550
    %4552 = vdwg.mxu0
    %4553 = vmatpush.bf16.msra.mxu0 %v3891
    %4554 = vmatpush.bf16.msra.mxu0 %v3888
    %4555 = vmatpush.bf16.msra.mxu0 %v3885
    %4556 = vmatpush.bf16.msra.mxu0 %v3882
    %4557 = vmatpush.bf16.msra.mxu0 %v3879
    %4558 = vmatpush.bf16.msra.mxu0 %v3876
    %4559 = vmatpush.bf16.msra.mxu0 %v3873
    %4560 = vmatpush.bf16.msra.mxu0 %v3870
    %4561 = vmatmul.bf16.gmra.mxu0 %v2367
    %v4562 = vpop.f32.mrf.mxu0
    %v4563 = vadd.f32 %v4549, %v4562
    %v4564 = vpop.f32.mrf.mxu0
    %v4565 = vadd.f32 %v4551, %v4564
    %4566 = vdwg.mxu0
    %4567 = vmatpush.bf16.msra.mxu0 %v3915
    %4568 = vmatpush.bf16.msra.mxu0 %v3912
    %4569 = vmatpush.bf16.msra.mxu0 %v3909
    %4570 = vmatpush.bf16.msra.mxu0 %v3906
    %4571 = vmatpush.bf16.msra.mxu0 %v3903
    %4572 = vmatpush.bf16.msra.mxu0 %v3900
    %4573 = vmatpush.bf16.msra.mxu0 %v3897
    %4574 = vmatpush.bf16.msra.mxu0 %v3894
    %4575 = vmatmul.bf16.gmra.mxu0 %v2368
    %v4576 = vpop.f32.mrf.mxu0
    %v4577 = vadd.f32 %v4563, %v4576
    %v4578 = vpop.f32.mrf.mxu0
    %v4579 = vadd.f32 %v4565, %v4578
    %4580 = vdwg.mxu0
    %4581 = vmatpush.bf16.msra.mxu0 %v3939
    %4582 = vmatpush.bf16.msra.mxu0 %v3936
    %4583 = vmatpush.bf16.msra.mxu0 %v3933
    %4584 = vmatpush.bf16.msra.mxu0 %v3930
    %4585 = vmatpush.bf16.msra.mxu0 %v3927
    %4586 = vmatpush.bf16.msra.mxu0 %v3924
    %4587 = vmatpush.bf16.msra.mxu0 %v3921
    %4588 = vmatpush.bf16.msra.mxu0 %v3918
    %4589 = vmatmul.bf16.gmra.mxu0 %v2369
    %v4590 = vpop.f32.mrf.mxu0
    %v4591 = vadd.f32 %v4577, %v4590
    %v4592 = vpop.f32.mrf.mxu0
    %v4593 = vadd.f32 %v4579, %v4592
    %4594 = vdwg.mxu0
    %4595 = vmatpush.bf16.msra.mxu0 %v3963
    %4596 = vmatpush.bf16.msra.mxu0 %v3960
    %4597 = vmatpush.bf16.msra.mxu0 %v3957
    %4598 = vmatpush.bf16.msra.mxu0 %v3954
    %4599 = vmatpush.bf16.msra.mxu0 %v3951
    %4600 = vmatpush.bf16.msra.mxu0 %v3948
    %4601 = vmatpush.bf16.msra.mxu0 %v3945
    %4602 = vmatpush.bf16.msra.mxu0 %v3942
    %4603 = vmatmul.bf16.gmra.mxu0 %v2370
    %v4604 = vpop.f32.mrf.mxu0
    %v4605 = vadd.f32 %v4591, %v4604
    %v4606 = vpop.f32.mrf.mxu0
    %v4607 = vadd.f32 %v4593, %v4606
    %4608 = vdwg.mxu0
    %4609 = vmatpush.bf16.msra.mxu0 %v3987
    %4610 = vmatpush.bf16.msra.mxu0 %v3984
    %4611 = vmatpush.bf16.msra.mxu0 %v3981
    %4612 = vmatpush.bf16.msra.mxu0 %v3978
    %4613 = vmatpush.bf16.msra.mxu0 %v3975
    %4614 = vmatpush.bf16.msra.mxu0 %v3972
    %4615 = vmatpush.bf16.msra.mxu0 %v3969
    %4616 = vmatpush.bf16.msra.mxu0 %v3966
    %4617 = vmatmul.bf16.gmra.mxu0 %v2371
    %v4618 = vpop.f32.mrf.mxu0
    %v4619 = vadd.f32 %v4605, %v4618
    %v4620 = vpop.f32.mrf.mxu0
    %v4621 = vadd.f32 %v4607, %v4620
    %4622 = vdwg.mxu0
    %4623 = vmatpush.bf16.msra.mxu0 %v4011
    %4624 = vmatpush.bf16.msra.mxu0 %v4008
    %4625 = vmatpush.bf16.msra.mxu0 %v4005
    %4626 = vmatpush.bf16.msra.mxu0 %v4002
    %4627 = vmatpush.bf16.msra.mxu0 %v3999
    %4628 = vmatpush.bf16.msra.mxu0 %v3996
    %4629 = vmatpush.bf16.msra.mxu0 %v3993
    %4630 = vmatpush.bf16.msra.mxu0 %v3990
    %4631 = vmatmul.bf16.gmra.mxu0 %v2372
    %v4632 = vpop.f32.mrf.mxu0
    %v4633 = vadd.f32 %v4619, %v4632
    %v4634 = vpop.f32.mrf.mxu0
    %v4635 = vadd.f32 %v4621, %v4634
    %4636 = vdwg.mxu0
    %4637 = vmatpush.bf16.msra.mxu0 %v3748
    %4638 = vmatpush.bf16.msra.mxu0 %v3745
    %4639 = vmatpush.bf16.msra.mxu0 %v3742
    %4640 = vmatpush.bf16.msra.mxu0 %v3739
    %4641 = vmatpush.bf16.msra.mxu0 %v3736
    %4642 = vmatpush.bf16.msra.mxu0 %v3733
    %4643 = vmatpush.bf16.msra.mxu0 %v3730
    %4644 = vmatpush.bf16.msra.mxu0 %v3727
    %4645 = vmatmul.bf16.gmra.mxu0 %v2361
    %v4646 = vpop.f32.mrf.mxu0
    %v4647 = vadd.f32 %v2761, %v4646
    %v4648 = vpop.f32.mrf.mxu0
    %v4649 = vadd.f32 %v2761, %v4648
    %4650 = vdwg.mxu0
    %4651 = vmatpush.bf16.msra.mxu0 %v3772
    %4652 = vmatpush.bf16.msra.mxu0 %v3769
    %4653 = vmatpush.bf16.msra.mxu0 %v3766
    %4654 = vmatpush.bf16.msra.mxu0 %v3763
    %4655 = vmatpush.bf16.msra.mxu0 %v3760
    %4656 = vmatpush.bf16.msra.mxu0 %v3757
    %4657 = vmatpush.bf16.msra.mxu0 %v3754
    %4658 = vmatpush.bf16.msra.mxu0 %v3751
    %4659 = vmatmul.bf16.gmra.mxu0 %v2362
    %v4660 = vpop.f32.mrf.mxu0
    %v4661 = vadd.f32 %v4647, %v4660
    %v4662 = vpop.f32.mrf.mxu0
    %v4663 = vadd.f32 %v4649, %v4662
    %4664 = vdwg.mxu0
    %4665 = vmatpush.bf16.msra.mxu0 %v3796
    %4666 = vmatpush.bf16.msra.mxu0 %v3793
    %4667 = vmatpush.bf16.msra.mxu0 %v3790
    %4668 = vmatpush.bf16.msra.mxu0 %v3787
    %4669 = vmatpush.bf16.msra.mxu0 %v3784
    %4670 = vmatpush.bf16.msra.mxu0 %v3781
    %4671 = vmatpush.bf16.msra.mxu0 %v3778
    %4672 = vmatpush.bf16.msra.mxu0 %v3775
    %4673 = vmatmul.bf16.gmra.mxu0 %v2363
    %v4674 = vpop.f32.mrf.mxu0
    %v4675 = vadd.f32 %v4661, %v4674
    %v4676 = vpop.f32.mrf.mxu0
    %v4677 = vadd.f32 %v4663, %v4676
    %4678 = vdwg.mxu0
    %4679 = vmatpush.bf16.msra.mxu0 %v3820
    %4680 = vmatpush.bf16.msra.mxu0 %v3817
    %4681 = vmatpush.bf16.msra.mxu0 %v3814
    %4682 = vmatpush.bf16.msra.mxu0 %v3811
    %4683 = vmatpush.bf16.msra.mxu0 %v3808
    %4684 = vmatpush.bf16.msra.mxu0 %v3805
    %4685 = vmatpush.bf16.msra.mxu0 %v3802
    %4686 = vmatpush.bf16.msra.mxu0 %v3799
    %4687 = vmatmul.bf16.gmra.mxu0 %v2364
    %v4688 = vpop.f32.mrf.mxu0
    %v4689 = vadd.f32 %v4675, %v4688
    %v4690 = vpop.f32.mrf.mxu0
    %v4691 = vadd.f32 %v4677, %v4690
    %4692 = vdwg.mxu0
    %4693 = vmatpush.bf16.msra.mxu0 %v3844
    %4694 = vmatpush.bf16.msra.mxu0 %v3841
    %4695 = vmatpush.bf16.msra.mxu0 %v3838
    %4696 = vmatpush.bf16.msra.mxu0 %v3835
    %4697 = vmatpush.bf16.msra.mxu0 %v3832
    %4698 = vmatpush.bf16.msra.mxu0 %v3829
    %4699 = vmatpush.bf16.msra.mxu0 %v3826
    %4700 = vmatpush.bf16.msra.mxu0 %v3823
    %4701 = vmatmul.bf16.gmra.mxu0 %v2365
    %v4702 = vpop.f32.mrf.mxu0
    %v4703 = vadd.f32 %v4689, %v4702
    %v4704 = vpop.f32.mrf.mxu0
    %v4705 = vadd.f32 %v4691, %v4704
    %4706 = vdwg.mxu0
    %4707 = vmatpush.bf16.msra.mxu0 %v3868
    %4708 = vmatpush.bf16.msra.mxu0 %v3865
    %4709 = vmatpush.bf16.msra.mxu0 %v3862
    %4710 = vmatpush.bf16.msra.mxu0 %v3859
    %4711 = vmatpush.bf16.msra.mxu0 %v3856
    %4712 = vmatpush.bf16.msra.mxu0 %v3853
    %4713 = vmatpush.bf16.msra.mxu0 %v3850
    %4714 = vmatpush.bf16.msra.mxu0 %v3847
    %4715 = vmatmul.bf16.gmra.mxu0 %v2366
    %v4716 = vpop.f32.mrf.mxu0
    %v4717 = vadd.f32 %v4703, %v4716
    %v4718 = vpop.f32.mrf.mxu0
    %v4719 = vadd.f32 %v4705, %v4718
    %4720 = vdwg.mxu0
    %4721 = vmatpush.bf16.msra.mxu0 %v3892
    %4722 = vmatpush.bf16.msra.mxu0 %v3889
    %4723 = vmatpush.bf16.msra.mxu0 %v3886
    %4724 = vmatpush.bf16.msra.mxu0 %v3883
    %4725 = vmatpush.bf16.msra.mxu0 %v3880
    %4726 = vmatpush.bf16.msra.mxu0 %v3877
    %4727 = vmatpush.bf16.msra.mxu0 %v3874
    %4728 = vmatpush.bf16.msra.mxu0 %v3871
    %4729 = vmatmul.bf16.gmra.mxu0 %v2367
    %v4730 = vpop.f32.mrf.mxu0
    %v4731 = vadd.f32 %v4717, %v4730
    %v4732 = vpop.f32.mrf.mxu0
    %v4733 = vadd.f32 %v4719, %v4732
    %4734 = vdwg.mxu0
    %4735 = vmatpush.bf16.msra.mxu0 %v3916
    %4736 = vmatpush.bf16.msra.mxu0 %v3913
    %4737 = vmatpush.bf16.msra.mxu0 %v3910
    %4738 = vmatpush.bf16.msra.mxu0 %v3907
    %4739 = vmatpush.bf16.msra.mxu0 %v3904
    %4740 = vmatpush.bf16.msra.mxu0 %v3901
    %4741 = vmatpush.bf16.msra.mxu0 %v3898
    %4742 = vmatpush.bf16.msra.mxu0 %v3895
    %4743 = vmatmul.bf16.gmra.mxu0 %v2368
    %v4744 = vpop.f32.mrf.mxu0
    %v4745 = vadd.f32 %v4731, %v4744
    %v4746 = vpop.f32.mrf.mxu0
    %v4747 = vadd.f32 %v4733, %v4746
    %4748 = vdwg.mxu0
    %4749 = vmatpush.bf16.msra.mxu0 %v3940
    %4750 = vmatpush.bf16.msra.mxu0 %v3937
    %4751 = vmatpush.bf16.msra.mxu0 %v3934
    %4752 = vmatpush.bf16.msra.mxu0 %v3931
    %4753 = vmatpush.bf16.msra.mxu0 %v3928
    %4754 = vmatpush.bf16.msra.mxu0 %v3925
    %4755 = vmatpush.bf16.msra.mxu0 %v3922
    %4756 = vmatpush.bf16.msra.mxu0 %v3919
    %4757 = vmatmul.bf16.gmra.mxu0 %v2369
    %v4758 = vpop.f32.mrf.mxu0
    %v4759 = vadd.f32 %v4745, %v4758
    %v4760 = vpop.f32.mrf.mxu0
    %v4761 = vadd.f32 %v4747, %v4760
    %4762 = vdwg.mxu0
    %4763 = vmatpush.bf16.msra.mxu0 %v3964
    %4764 = vmatpush.bf16.msra.mxu0 %v3961
    %4765 = vmatpush.bf16.msra.mxu0 %v3958
    %4766 = vmatpush.bf16.msra.mxu0 %v3955
    %4767 = vmatpush.bf16.msra.mxu0 %v3952
    %4768 = vmatpush.bf16.msra.mxu0 %v3949
    %4769 = vmatpush.bf16.msra.mxu0 %v3946
    %4770 = vmatpush.bf16.msra.mxu0 %v3943
    %4771 = vmatmul.bf16.gmra.mxu0 %v2370
    %v4772 = vpop.f32.mrf.mxu0
    %v4773 = vadd.f32 %v4759, %v4772
    %v4774 = vpop.f32.mrf.mxu0
    %v4775 = vadd.f32 %v4761, %v4774
    %4776 = vdwg.mxu0
    %4777 = vmatpush.bf16.msra.mxu0 %v3988
    %4778 = vmatpush.bf16.msra.mxu0 %v3985
    %4779 = vmatpush.bf16.msra.mxu0 %v3982
    %4780 = vmatpush.bf16.msra.mxu0 %v3979
    %4781 = vmatpush.bf16.msra.mxu0 %v3976
    %4782 = vmatpush.bf16.msra.mxu0 %v3973
    %4783 = vmatpush.bf16.msra.mxu0 %v3970
    %4784 = vmatpush.bf16.msra.mxu0 %v3967
    %4785 = vmatmul.bf16.gmra.mxu0 %v2371
    %v4786 = vpop.f32.mrf.mxu0
    %v4787 = vadd.f32 %v4773, %v4786
    %v4788 = vpop.f32.mrf.mxu0
    %v4789 = vadd.f32 %v4775, %v4788
    %4790 = vdwg.mxu0
    %4791 = vmatpush.bf16.msra.mxu0 %v4012
    %4792 = vmatpush.bf16.msra.mxu0 %v4009
    %4793 = vmatpush.bf16.msra.mxu0 %v4006
    %4794 = vmatpush.bf16.msra.mxu0 %v4003
    %4795 = vmatpush.bf16.msra.mxu0 %v4000
    %4796 = vmatpush.bf16.msra.mxu0 %v3997
    %4797 = vmatpush.bf16.msra.mxu0 %v3994
    %4798 = vmatpush.bf16.msra.mxu0 %v3991
    %4799 = vmatmul.bf16.gmra.mxu0 %v2372
    %v4800 = vpop.f32.mrf.mxu0
    %v4801 = vadd.f32 %v4787, %v4800
    %v4802 = vpop.f32.mrf.mxu0
    %v4803 = vadd.f32 %v4789, %v4802
    %4804 = vdwg.mxu0
    %4805 = vst [vmem:[#allocation8] sm:$0xff] %v4465
    %4806 = vst [vmem:[#allocation8 + $0x8] sm:$0xff] %v4633
    %4807 = vst [vmem:[#allocation8 + $0x10] sm:$0xff] %v4801
    %4808 = vst [vmem:[#allocation8 + $0x18] sm:$0xff] %v4467
    %4809 = vst [vmem:[#allocation8 + $0x20] sm:$0xff] %v4635
    %4810 = vst [vmem:[#allocation8 + $0x28] sm:$0xff] %v4803
    // Predicated region
    $region34: #{feed_forward.1} parent=1 // pred_check
      _
    $region35: #{feed_forward.1} parent=1 // pred_check_branch
      %4812 = sbr.rel (0) target = $region37
    $region36: #{feed_forward.1} parent=1 // pred_region
      %4814 = vsyncadd [#allocation4], 0
      %s4815 = sshll.u32 [#allocation8], 4
      %s4816 = int_to_ptr.vmem [resolvable:$true] %s4815
      %s4817 = sshll.u32 %s5, 4
      %s4818 = int_to_ptr.hbm [resolvable:$true] %s4817
      %4823 = dma.vmem_to_hbm [thread:$0]  %s4816, 768, %s4818, [#allocation4], 384, 384, 24
    $region37: #{feed_forward.1} parent=1 // pred_fallthru
      _
    // Predicated region
    $region38: #{feed_forward.1} parent=1 // pred_check
      _
    $region39: #{feed_forward.1} parent=1 // pred_check_branch
      %4825 = sbr.rel (0) target = $region41
    $region40: #{feed_forward.1} parent=1 // pred_region
      %4827 = dma.done [#allocation4], 768
    $region41: #{feed_forward.1} parent=1 // pred_fallthru
      _
    %4828 = vsyncpa [#allocation3], 1
    %4829 = vsyncpa [#allocation6], 1
    %4830 = vsyncpa [#allocation4], 1

</llo_original>
